<compile_context>
chip_gen: v7x
topology: tpu7x:2x2x1
jax: 0.10.0
libtpu: 0.0.40
codegen_flags: <defaults>
</compile_context>

<pallas_src>
import jax
import jax.numpy as jnp
from jax.experimental import pallas as pl
from jax.experimental.pallas import tpu as pltpu

LEAK = 0.2
BN_EPS = 1e-5
LATENT = 100
LATENT_PAD = 128  # zero-padded contraction dim for the first matmul


def _leaky_relu(x):
    # max(x, 0.2*x) == LeakyReLU(0.2) for slope < 1; 2 VALU ops.
    return jnp.maximum(x, LEAK * x)


def _build_kernel(out_pad):
    # Static lane offsets into the coalesced vector-param slab.
    # Order: b1 b5 g2 g3 g4 be2 be3 be4  (all sizes multiples of 128).
    # b2/b3/b4 are dropped: train-mode BN's batch-mean subtraction cancels them.
    sizes = [128, out_pad, 256, 512, 1024, 256, 512, 1024]
    offs, o = [], 0
    for s in sizes:
        offs.append(o)
        o += s
    ob1, ob5, og2, og3, og4, obe2, obe3, obe4 = offs

    def kernel(x_ref, w1_ref, w2_ref, w3_ref, w4_ref, w5_ref, vec_ref, out_ref):
        # Static Ref slices: each (1, C) vector is loaded from VMEM only at its
        # use site — the full slab is never live in vregs.
        def vec(off, size):
            return vec_ref[:, off:off + size]

        def bn_lrelu(h, g_off, be_off, size):
            # Train-mode BatchNorm1d (batch mean, biased batch var, eps=1e-5)
            # folded into one per-element scale/shift FMA, then LeakyReLU.
            mean = jnp.mean(h, axis=0, keepdims=True)
            var = jnp.mean((h - mean) ** 2, axis=0, keepdims=True)
            scale = vec(g_off, size) * jax.lax.rsqrt(var + BN_EPS)
            shift = vec(be_off, size) - mean * scale
            return _leaky_relu(h * scale + shift)

        # Linear(128pad, 128) + LeakyReLU(0.2)  (zero-padded K contributes 0)
        x = x_ref[...].astype(jnp.bfloat16)
        h = jnp.dot(x, w1_ref[...], preferred_element_type=jnp.float32)
        h = _leaky_relu(h + vec(ob1, 128))

        # Linear(128, 256) + BN(256) + LeakyReLU   (bias absorbed by BN)
        h = jnp.dot(h.astype(jnp.bfloat16), w2_ref[...],
                    preferred_element_type=jnp.float32)
        h = bn_lrelu(h, og2, obe2, 256)

        # Linear(256, 512) + BN(512) + LeakyReLU
        h = jnp.dot(h.astype(jnp.bfloat16), w3_ref[...],
                    preferred_element_type=jnp.float32)
        h = bn_lrelu(h, og3, obe3, 512)

        # Linear(512, 1024) + BN(1024) + LeakyReLU
        h = jnp.dot(h.astype(jnp.bfloat16), w4_ref[...],
                    preferred_element_type=jnp.float32)
        h = bn_lrelu(h, og4, obe4, 1024)

        # Linear(1024, out_pad) + Tanh  (pad columns of w5/b5 are zero)
        h = jnp.dot(h.astype(jnp.bfloat16), w5_ref[...],
                    preferred_element_type=jnp.float32) + vec(ob5, out_pad)
        out_ref[...] = jnp.tanh(h)

    return kernel


def _linear_init(key, fan_in, fan_out):
    # Matches torch.nn.Linear default: U(-1/sqrt(fan_in), 1/sqrt(fan_in)).
    kw, kb = jax.random.split(key)
    bound = 1.0 / jnp.sqrt(jnp.float32(fan_in))
    # stored transposed: (in, out) so the kernel does x @ W
    w = jax.random.uniform(kw, (fan_in, fan_out), jnp.float32, -bound, bound)
    b = jax.random.uniform(kb, (1, fan_out), jnp.float32, -bound, bound)
    return w, b


def init_generator_params(key, image_size=28, channels=1):
    out_dim = channels * image_size * image_size
    out_pad = ((out_dim + 127) // 128) * 128
    dims_in = [LATENT, 128, 256, 512, 1024]
    dims_out = [128, 256, 512, 1024, out_dim]
    keys = jax.random.split(key, 5)
    ws, bs = [], []
    for k, fi, fo in zip(keys, dims_in, dims_out):
        w, b = _linear_init(k, fi, fo)
        ws.append(w)
        bs.append(b)

    # zero-pad w1's contraction dim 100 -> 128 (matches zero-padded latent)
    ws[0] = jnp.pad(ws[0], ((0, LATENT_PAD - LATENT), (0, 0)))
    # zero-pad last layer output columns out_dim -> out_pad (lane-dense store)
    ws[4] = jnp.pad(ws[4], ((0, 0), (0, out_pad - out_dim)))
    bs[4] = jnp.pad(bs[4], ((0, 0), (0, out_pad - out_dim)))

    params = {f"w{i + 1}": w.astype(jnp.bfloat16) for i, w in enumerate(ws)}

    # BatchNorm1d affine params (PyTorch default init: gamma=1, beta=0)
    gammas = [jnp.ones((1, d), jnp.float32) for d in (256, 512, 1024)]
    betas = [jnp.zeros((1, d), jnp.float32) for d in (256, 512, 1024)]

    # Coalesce the 1-D params needed by the forward into one f32 slab
    # (single DMA): b1 b5 g2 g3 g4 be2 be3 be4.
    # b2/b3/b4 are intentionally omitted: train-mode BN cancels them exactly.
    params["vec"] = jnp.concatenate([bs[0], bs[4]] + gammas + betas, axis=1)
    return params


def generator_forward(z, params, image_size=28, channels=1):
    n = z.shape[0]
    out_dim = channels * image_size * image_size
    out_pad = ((out_dim + 127) // 128) * 128

    # zero-pad latent K dim 100 -> 128 (wrapper-side, semantics unchanged)
    z_pad = jnp.pad(z.astype(jnp.float32), ((0, 0), (0, LATENT_PAD - z.shape[1])))

    args = (
        z_pad,
        params["w1"], params["w2"], params["w3"], params["w4"], params["w5"],
        params["vec"],
    )
    vmem_spec = pl.BlockSpec(memory_space=pltpu.MemorySpace.VMEM)

    matmul_elems = (LATENT_PAD * 128 + 128 * 256 + 256 * 512
                    + 512 * 1024 + 1024 * out_pad)
    cost = pl.CostEstimate(
        flops=2 * n * matmul_elems,
        transcendentals=n * out_pad + 1792,  # tanh + BN rsqrt
        bytes_accessed=(2 * matmul_elems                 # bf16 weights
                        + params["vec"].size * 4         # coalesced vector params
                        + n * LATENT_PAD * 4             # input
                        + n * out_pad * 4),              # output
    )

    out = pl.pallas_call(
        _build_kernel(out_pad),
        out_shape=jax.ShapeDtypeStruct((n, out_pad), jnp.float32),
        in_specs=[vmem_spec] * len(args),
        out_specs=vmem_spec,
        compiler_params=pltpu.CompilerParams(vmem_limit_bytes=32 << 20),
        cost_estimate=cost,
    )(*args)

    # drop the zero pad columns, then reshape to NCHW like the PyTorch forward
    return out[:, :out_dim].reshape(n, channels, image_size, image_size)


if __name__ == "__main__":
    key = jax.random.PRNGKey(0)
    k_params, k_z = jax.random.split(key)

    image_size = 28
    channels = 1
    batch = 8  # train-mode BatchNorm needs batch > 1

    params = init_generator_params(k_params, image_size=image_size, channels=channels)
    z = jax.random.normal(k_z, (batch, LATENT), dtype=jnp.float32)

    out = generator_forward(z, params, image_size=image_size, channels=channels)
    out = jax.block_until_ready(out)

    assert out.shape == (batch, channels, image_size, image_size)
    assert bool(jnp.all(jnp.isfinite(out)))
    assert bool(jnp.all(jnp.abs(out) <= 1.0))  # tanh output range
    print("KERNEL_OK")
</pallas_src>

<mosaic_0001>
module attributes {stable_mosaic.version = 11 : i64} {
  func.func @kernel(%arg0: memref<8x128xf32, #tpu.memory_space<vmem>>, %arg1: memref<128x128xbf16, #tpu.memory_space<vmem>>, %arg2: memref<128x256xbf16, #tpu.memory_space<vmem>>, %arg3: memref<256x512xbf16, #tpu.memory_space<vmem>>, %arg4: memref<512x1024xbf16, #tpu.memory_space<vmem>>, %arg5: memref<1024x896xbf16, #tpu.memory_space<vmem>>, %arg6: memref<1x4608xf32, #tpu.memory_space<vmem>>, %arg7: memref<8x896xf32, #tpu.memory_space<vmem>>) attributes {dimension_semantics = [], scalar_prefetch = 0 : i64, scratch_operands = 0 : i64, tpu.core_type = #tpu.core_type<tc>} {
    %c0 = arith.constant 0 : index
    %c0_0 = arith.constant 0 : index
    %0 = vector.load %arg0[%c0, %c0_0] : memref<8x128xf32, #tpu.memory_space<vmem>>, vector<8x128xf32>
    %1 = arith.truncf %0 : vector<8x128xf32> to vector<8x128xbf16>
    %c0_1 = arith.constant 0 : index
    %c0_2 = arith.constant 0 : index
    %2 = vector.load %arg1[%c0_1, %c0_2] : memref<128x128xbf16, #tpu.memory_space<vmem>>, vector<128x128xbf16>
    %cst = arith.constant dense<0.000000e+00> : vector<8x128xf32>
    %3 = tpu.matmul %1, %2, %cst {dimension_numbers = #tpu.dot_dimension_numbers<[1], [0], [0], [1], [0, 0, 1, 1], [], []>} : vector<8x128xbf16>, vector<128x128xbf16>, vector<8x128xf32> -> vector<8x128xf32>
    %c0_3 = arith.constant 0 : index
    %c0_4 = arith.constant 0 : index
    %4 = vector.load %arg6[%c0_3, %c0_4] : memref<1x4608xf32, #tpu.memory_space<vmem>>, vector<1x128xf32>
    %5 = vector.broadcast %4 : vector<1x128xf32> to vector<8x128xf32>
    %6 = arith.addf %3, %5 : vector<8x128xf32>
    %cst_5 = arith.constant 2.000000e-01 : f32
    %7 = vector.broadcast %cst_5 : f32 to vector<8x128xf32>
    %8 = arith.mulf %7, %6 : vector<8x128xf32>
    %9 = arith.maximumf %6, %8 : vector<8x128xf32>
    %10 = arith.truncf %9 : vector<8x128xf32> to vector<8x128xbf16>
    %c0_6 = arith.constant 0 : index
    %c0_7 = arith.constant 0 : index
    %11 = vector.load %arg2[%c0_6, %c0_7] : memref<128x256xbf16, #tpu.memory_space<vmem>>, vector<128x256xbf16>
    %cst_8 = arith.constant dense<0.000000e+00> : vector<8x256xf32>
    %12 = tpu.matmul %10, %11, %cst_8 {dimension_numbers = #tpu.dot_dimension_numbers<[1], [0], [0], [1], [0, 0, 1, 1], [], []>} : vector<8x128xbf16>, vector<128x256xbf16>, vector<8x256xf32> -> vector<8x256xf32>
    %cst_9 = arith.constant dense<0.000000e+00> : vector<256xf32>
    %13 = vector.multi_reduction <add>, %12, %cst_9 [0] : vector<8x256xf32> to vector<256xf32>
    %14 = vector.shape_cast %13 : vector<256xf32> to vector<1x256xf32>
    %cst_10 = arith.constant 8.000000e+00 : f32
    %15 = vector.broadcast %cst_10 : f32 to vector<1x256xf32>
    %16 = arith.divf %14, %15 : vector<1x256xf32>
    %17 = vector.broadcast %16 : vector<1x256xf32> to vector<8x256xf32>
    %18 = arith.subf %12, %17 : vector<8x256xf32>
    %19 = arith.mulf %18, %18 : vector<8x256xf32>
    %cst_11 = arith.constant dense<0.000000e+00> : vector<256xf32>
    %20 = vector.multi_reduction <add>, %19, %cst_11 [0] : vector<8x256xf32> to vector<256xf32>
    %21 = vector.shape_cast %20 : vector<256xf32> to vector<1x256xf32>
    %cst_12 = arith.constant 8.000000e+00 : f32
    %22 = vector.broadcast %cst_12 : f32 to vector<1x256xf32>
    %23 = arith.divf %21, %22 : vector<1x256xf32>
    %c0_13 = arith.constant 0 : index
    %c1024 = arith.constant 1024 : index
    %24 = vector.load %arg6[%c0_13, %c1024] : memref<1x4608xf32, #tpu.memory_space<vmem>>, vector<1x256xf32>
    %cst_14 = arith.constant 9.99999974E-6 : f32
    %25 = vector.broadcast %cst_14 : f32 to vector<1x256xf32>
    %26 = arith.addf %23, %25 : vector<1x256xf32>
    %27 = math.rsqrt %26 : vector<1x256xf32>
    %28 = arith.mulf %24, %27 : vector<1x256xf32>
    %c0_15 = arith.constant 0 : index
    %c2816 = arith.constant 2816 : index
    %29 = vector.load %arg6[%c0_15, %c2816] : memref<1x4608xf32, #tpu.memory_space<vmem>>, vector<1x256xf32>
    %30 = arith.mulf %16, %28 : vector<1x256xf32>
    %31 = arith.subf %29, %30 : vector<1x256xf32>
    %32 = vector.broadcast %28 : vector<1x256xf32> to vector<8x256xf32>
    %33 = arith.mulf %12, %32 : vector<8x256xf32>
    %34 = vector.broadcast %31 : vector<1x256xf32> to vector<8x256xf32>
    %35 = arith.addf %33, %34 : vector<8x256xf32>
    %cst_16 = arith.constant 2.000000e-01 : f32
    %36 = vector.broadcast %cst_16 : f32 to vector<8x256xf32>
    %37 = arith.mulf %36, %35 : vector<8x256xf32>
    %38 = arith.maximumf %35, %37 : vector<8x256xf32>
    %39 = arith.truncf %38 : vector<8x256xf32> to vector<8x256xbf16>
    %c0_17 = arith.constant 0 : index
    %c0_18 = arith.constant 0 : index
    %40 = vector.load %arg3[%c0_17, %c0_18] : memref<256x512xbf16, #tpu.memory_space<vmem>>, vector<256x512xbf16>
    %cst_19 = arith.constant dense<0.000000e+00> : vector<8x512xf32>
    %41 = tpu.matmul %39, %40, %cst_19 {dimension_numbers = #tpu.dot_dimension_numbers<[1], [0], [0], [1], [0, 0, 1, 1], [], []>} : vector<8x256xbf16>, vector<256x512xbf16>, vector<8x512xf32> -> vector<8x512xf32>
    %cst_20 = arith.constant dense<0.000000e+00> : vector<512xf32>
    %42 = vector.multi_reduction <add>, %41, %cst_20 [0] : vector<8x512xf32> to vector<512xf32>
    %43 = vector.shape_cast %42 : vector<512xf32> to vector<1x512xf32>
    %cst_21 = arith.constant 8.000000e+00 : f32
    %44 = vector.broadcast %cst_21 : f32 to vector<1x512xf32>
    %45 = arith.divf %43, %44 : vector<1x512xf32>
    %46 = vector.broadcast %45 : vector<1x512xf32> to vector<8x512xf32>
    %47 = arith.subf %41, %46 : vector<8x512xf32>
    %48 = arith.mulf %47, %47 : vector<8x512xf32>
    %cst_22 = arith.constant dense<0.000000e+00> : vector<512xf32>
    %49 = vector.multi_reduction <add>, %48, %cst_22 [0] : vector<8x512xf32> to vector<512xf32>
    %50 = vector.shape_cast %49 : vector<512xf32> to vector<1x512xf32>
    %cst_23 = arith.constant 8.000000e+00 : f32
    %51 = vector.broadcast %cst_23 : f32 to vector<1x512xf32>
    %52 = arith.divf %50, %51 : vector<1x512xf32>
    %c0_24 = arith.constant 0 : index
    %c1280 = arith.constant 1280 : index
    %53 = vector.load %arg6[%c0_24, %c1280] : memref<1x4608xf32, #tpu.memory_space<vmem>>, vector<1x512xf32>
    %cst_25 = arith.constant 9.99999974E-6 : f32
    %54 = vector.broadcast %cst_25 : f32 to vector<1x512xf32>
    %55 = arith.addf %52, %54 : vector<1x512xf32>
    %56 = math.rsqrt %55 : vector<1x512xf32>
    %57 = arith.mulf %53, %56 : vector<1x512xf32>
    %c0_26 = arith.constant 0 : index
    %c3072 = arith.constant 3072 : index
    %58 = vector.load %arg6[%c0_26, %c3072] : memref<1x4608xf32, #tpu.memory_space<vmem>>, vector<1x512xf32>
    %59 = arith.mulf %45, %57 : vector<1x512xf32>
    %60 = arith.subf %58, %59 : vector<1x512xf32>
    %61 = vector.broadcast %57 : vector<1x512xf32> to vector<8x512xf32>
    %62 = arith.mulf %41, %61 : vector<8x512xf32>
    %63 = vector.broadcast %60 : vector<1x512xf32> to vector<8x512xf32>
    %64 = arith.addf %62, %63 : vector<8x512xf32>
    %cst_27 = arith.constant 2.000000e-01 : f32
    %65 = vector.broadcast %cst_27 : f32 to vector<8x512xf32>
    %66 = arith.mulf %65, %64 : vector<8x512xf32>
    %67 = arith.maximumf %64, %66 : vector<8x512xf32>
    %68 = arith.truncf %67 : vector<8x512xf32> to vector<8x512xbf16>
    %c0_28 = arith.constant 0 : index
    %c0_29 = arith.constant 0 : index
    %69 = vector.load %arg4[%c0_28, %c0_29] : memref<512x1024xbf16, #tpu.memory_space<vmem>>, vector<512x1024xbf16>
    %cst_30 = arith.constant dense<0.000000e+00> : vector<8x1024xf32>
    %70 = tpu.matmul %68, %69, %cst_30 {dimension_numbers = #tpu.dot_dimension_numbers<[1], [0], [0], [1], [0, 0, 1, 1], [], []>} : vector<8x512xbf16>, vector<512x1024xbf16>, vector<8x1024xf32> -> vector<8x1024xf32>
    %cst_31 = arith.constant dense<0.000000e+00> : vector<1024xf32>
    %71 = vector.multi_reduction <add>, %70, %cst_31 [0] : vector<8x1024xf32> to vector<1024xf32>
    %72 = vector.shape_cast %71 : vector<1024xf32> to vector<1x1024xf32>
    %cst_32 = arith.constant 8.000000e+00 : f32
    %73 = vector.broadcast %cst_32 : f32 to vector<1x1024xf32>
    %74 = arith.divf %72, %73 : vector<1x1024xf32>
    %75 = vector.broadcast %74 : vector<1x1024xf32> to vector<8x1024xf32>
    %76 = arith.subf %70, %75 : vector<8x1024xf32>
    %77 = arith.mulf %76, %76 : vector<8x1024xf32>
    %cst_33 = arith.constant dense<0.000000e+00> : vector<1024xf32>
    %78 = vector.multi_reduction <add>, %77, %cst_33 [0] : vector<8x1024xf32> to vector<1024xf32>
    %79 = vector.shape_cast %78 : vector<1024xf32> to vector<1x1024xf32>
    %cst_34 = arith.constant 8.000000e+00 : f32
    %80 = vector.broadcast %cst_34 : f32 to vector<1x1024xf32>
    %81 = arith.divf %79, %80 : vector<1x1024xf32>
    %c0_35 = arith.constant 0 : index
    %c1792 = arith.constant 1792 : index
    %82 = vector.load %arg6[%c0_35, %c1792] : memref<1x4608xf32, #tpu.memory_space<vmem>>, vector<1x1024xf32>
    %cst_36 = arith.constant 9.99999974E-6 : f32
    %83 = vector.broadcast %cst_36 : f32 to vector<1x1024xf32>
    %84 = arith.addf %81, %83 : vector<1x1024xf32>
    %85 = math.rsqrt %84 : vector<1x1024xf32>
    %86 = arith.mulf %82, %85 : vector<1x1024xf32>
    %c0_37 = arith.constant 0 : index
    %c3584 = arith.constant 3584 : index
    %87 = vector.load %arg6[%c0_37, %c3584] : memref<1x4608xf32, #tpu.memory_space<vmem>>, vector<1x1024xf32>
    %88 = arith.mulf %74, %86 : vector<1x1024xf32>
    %89 = arith.subf %87, %88 : vector<1x1024xf32>
    %90 = vector.broadcast %86 : vector<1x1024xf32> to vector<8x1024xf32>
    %91 = arith.mulf %70, %90 : vector<8x1024xf32>
    %92 = vector.broadcast %89 : vector<1x1024xf32> to vector<8x1024xf32>
    %93 = arith.addf %91, %92 : vector<8x1024xf32>
    %cst_38 = arith.constant 2.000000e-01 : f32
    %94 = vector.broadcast %cst_38 : f32 to vector<8x1024xf32>
    %95 = arith.mulf %94, %93 : vector<8x1024xf32>
    %96 = arith.maximumf %93, %95 : vector<8x1024xf32>
    %97 = arith.truncf %96 : vector<8x1024xf32> to vector<8x1024xbf16>
    %c0_39 = arith.constant 0 : index
    %c0_40 = arith.constant 0 : index
    %98 = vector.load %arg5[%c0_39, %c0_40] : memref<1024x896xbf16, #tpu.memory_space<vmem>>, vector<1024x896xbf16>
    %cst_41 = arith.constant dense<0.000000e+00> : vector<8x896xf32>
    %99 = tpu.matmul %97, %98, %cst_41 {dimension_numbers = #tpu.dot_dimension_numbers<[1], [0], [0], [1], [0, 0, 1, 1], [], []>} : vector<8x1024xbf16>, vector<1024x896xbf16>, vector<8x896xf32> -> vector<8x896xf32>
    %c0_42 = arith.constant 0 : index
    %c128 = arith.constant 128 : index
    %100 = vector.load %arg6[%c0_42, %c128] : memref<1x4608xf32, #tpu.memory_space<vmem>>, vector<1x896xf32>
    %101 = vector.broadcast %100 : vector<1x896xf32> to vector<8x896xf32>
    %102 = arith.addf %99, %101 : vector<8x896xf32>
    %103 = math.tanh %102 : vector<8x896xf32>
    %c0_43 = arith.constant 0 : index
    %c0_44 = arith.constant 0 : index
    %104 = vector.load %arg7[%c0_43, %c0_44] : memref<8x896xf32, #tpu.memory_space<vmem>>, vector<8x896xf32>
    tpu.vector_store %arg7[%c0_43, %c0_44], %103 {strides = array<i32>} : memref<8x896xf32, #tpu.memory_space<vmem>>, vector<8x896xf32>,
    return
  }
}

</mosaic_0001>

<llo_original>
// kernel: tpu_custom_call.1
$region0: #{tpu_custom_call.1}
  #allocation0 [shape = 'u32[]', space=smem, size = 0x4, offset = 0x4, fixed_abs, tag = 'smem constant byte address 0x4 - core index']
  #allocation1 [shape = 'u32[144,128]{1,0:T(1,128)}', space=vmem, size = 0x12000, scoped, tag = 'internal scratch']
  %s0 = inlined_call_operand.hbm [shape: f32[8,128], index: 0, kind: input, shape index: {}]
  %s1 = inlined_call_operand.hbm [shape: bf16[128,128], index: 1, kind: input, shape index: {}]
  %s2 = inlined_call_operand.hbm [shape: bf16[128,256], index: 2, kind: input, shape index: {}]
  %s3 = inlined_call_operand.hbm [shape: bf16[256,512], index: 3, kind: input, shape index: {}]
  %s4 = inlined_call_operand.hbm [shape: bf16[512,1024], index: 4, kind: input, shape index: {}]
  %s5 = inlined_call_operand.hbm [shape: bf16[1024,896], index: 5, kind: input, shape index: {}]
  %s6 = inlined_call_operand.hbm [shape: f32[1,4608], index: 6, kind: input, shape index: {}]
  %s7 = inlined_call_operand.hbm [shape: f32[8,896], index: 7, kind: output, shape index: {}]
  %s8 = sld [smem:[#allocation0]]
  $region66: #{tpu_custom_call.1} parent=0
    _
  %s10 = ssub.s32 1, %s8
  %s11 = scalar_select 0, %s10, %s8
  $region1: #{tpu_custom_call.1} parent=0
    #allocation2 [shape = 'u8[4096]{0}', space=vmem, size = 0x1000, scoped, tag = 'input window, operand 0, single buffered']
    #allocation3 [shape = 's32[1]{0}', space=sflag, size = 0x4, scoped, tag = 'scoped memory for tpu_custom_call.1']
    #allocation4 [shape = 's32[1]{0}', space=sflag, size = 0x4, scoped, tag = 'scoped memory for tpu_custom_call.1']
    #allocation5 [shape = 'u8[32768]{0}', space=vmem, size = 0x8000, scoped, tag = 'input window, operand 1, single buffered']
    #allocation6 [shape = 's32[1]{0}', space=sflag, size = 0x4, scoped, tag = 'scoped memory for tpu_custom_call.1']
    #allocation7 [shape = 'u8[65536]{0}', space=vmem, size = 0x10000, scoped, tag = 'input window, operand 2, single buffered']
    #allocation8 [shape = 'u8[262144]{0}', space=vmem, size = 0x40000, scoped, tag = 'input window, operand 3, single buffered']
    #allocation9 [shape = 's32[1]{0}', space=sflag, size = 0x4, scoped, tag = 'scoped memory for tpu_custom_call.1']
    #allocation10 [shape = 'u8[1048576]{0}', space=vmem, size = 0x100000, scoped, tag = 'input window, operand 4, single buffered']
    #allocation11 [shape = 'u8[1835008]{0}', space=vmem, size = 0x1c0000, scoped, tag = 'input window, operand 5, single buffered']
    #allocation12 [shape = 's32[1]{0}', space=sflag, size = 0x4, scoped, tag = 'scoped memory for tpu_custom_call.1']
    #allocation13 [shape = 'u8[18432]{0}', space=vmem, size = 0x4800, scoped, tag = 'input window, operand 6, single buffered']
    #allocation14 [shape = 'u8[28672]{0}', space=vmem, size = 0x7000, scoped, tag = 'output window, operand 0, single buffered']
    %12 = vsyncpa [#allocation3], 0
    %13 = vsyncpa [#allocation6], 0
    %14 = vsyncpa [#allocation9], 0
    %15 = vsyncpa [#allocation12], 0
    %16 = vsyncpa [#allocation4], 0
    // Predicated region
    $region2: #{tpu_custom_call.1} parent=1 // pred_check
      _
    $region3: #{tpu_custom_call.1} parent=1 // pred_check_branch
      %18 = sbr.rel (0) target = $region5
    $region4: #{tpu_custom_call.1} parent=1 // pred_region
      %s20 = ssub.s32 128, 128
      %21 = vsyncadd [#allocation3], %s20
      %s23 = sshll.u32 [#allocation2], 4
      %s24 = int_to_ptr.vmem [resolvable:$true] %s23
      %26 = dma.hbm_to_vmem [thread:$0]  %s0, 128, %s24, [#allocation3]
    $region5: #{tpu_custom_call.1} parent=1 // pred_fallthru
      _
    // Predicated region
    $region6: #{tpu_custom_call.1} parent=1 // pred_check
      _
    $region7: #{tpu_custom_call.1} parent=1 // pred_check_branch
      %28 = sbr.rel (0) target = $region9
    $region8: #{tpu_custom_call.1} parent=1 // pred_region
      %s30 = ssub.s32 1024, 1024
      %31 = vsyncadd [#allocation6], %s30
      %s32 = sshll.u32 [#allocation5], 4
      %s33 = int_to_ptr.vmem [resolvable:$true] %s32
      %38 = dma.hbm_to_vmem [thread:$0]  %s1, 1024, %s33, [#allocation6], 64, 64, 4
    $region9: #{tpu_custom_call.1} parent=1 // pred_fallthru
      _
    // Predicated region
    $region10: #{tpu_custom_call.1} parent=1 // pred_check
      _
    $region11: #{tpu_custom_call.1} parent=1 // pred_check_branch
      %40 = sbr.rel (0) target = $region13
    $region12: #{tpu_custom_call.1} parent=1 // pred_region
      %s42 = ssub.s32 2048, 2048
      %43 = vsyncadd [#allocation6], %s42
      %s44 = sshll.u32 [#allocation7], 4
      %s45 = int_to_ptr.vmem [resolvable:$true] %s44
      %50 = dma.hbm_to_vmem [thread:$0]  %s2, 2048, %s45, [#allocation6], 128, 128, 8
    $region13: #{tpu_custom_call.1} parent=1 // pred_fallthru
      _
    // Predicated region
    $region14: #{tpu_custom_call.1} parent=1 // pred_check
      _
    $region15: #{tpu_custom_call.1} parent=1 // pred_check_branch
      %52 = sbr.rel (0) target = $region17
    $region16: #{tpu_custom_call.1} parent=1 // pred_region
      %s54 = ssub.s32 8192, 8192
      %55 = vsyncadd [#allocation9], %s54
      %s56 = sshll.u32 [#allocation8], 4
      %s57 = int_to_ptr.vmem [resolvable:$true] %s56
      %62 = dma.hbm_to_vmem [thread:$0]  %s3, 8192, %s57, [#allocation9], 256, 256, 16
    $region17: #{tpu_custom_call.1} parent=1 // pred_fallthru
      _
    // Predicated region
    $region18: #{tpu_custom_call.1} parent=1 // pred_check
      _
    $region19: #{tpu_custom_call.1} parent=1 // pred_check_branch
      %64 = sbr.rel (0) target = $region21
    $region20: #{tpu_custom_call.1} parent=1 // pred_region
      %s66 = ssub.s32 32768, 32768
      %67 = vsyncadd [#allocation9], %s66
      %s68 = sshll.u32 [#allocation10], 4
      %s69 = int_to_ptr.vmem [resolvable:$true] %s68
      %74 = dma.hbm_to_vmem [thread:$0]  %s4, 32768, %s69, [#allocation9], 512, 512, 32
    $region21: #{tpu_custom_call.1} parent=1 // pred_fallthru
      _
    // Predicated region
    $region22: #{tpu_custom_call.1} parent=1 // pred_check
      _
    $region23: #{tpu_custom_call.1} parent=1 // pred_check_branch
      %76 = sbr.rel (0) target = $region25
    $region24: #{tpu_custom_call.1} parent=1 // pred_region
      %s78 = ssub.s32 57344, 57344
      %79 = vsyncadd [#allocation12], %s78
      %s80 = sshll.u32 [#allocation11], 4
      %s81 = int_to_ptr.vmem [resolvable:$true] %s80
      %86 = dma.hbm_to_vmem [thread:$0]  %s5, 57344, %s81, [#allocation12], 448, 448, 28
    $region25: #{tpu_custom_call.1} parent=1 // pred_fallthru
      _
    // Predicated region
    $region26: #{tpu_custom_call.1} parent=1 // pred_check
      _
    $region27: #{tpu_custom_call.1} parent=1 // pred_check_branch
      %88 = sbr.rel (0) target = $region29
    $region28: #{tpu_custom_call.1} parent=1 // pred_region
      %s90 = ssub.s32 576, 576
      %91 = vsyncadd [#allocation12], %s90
      %s93 = sshll.u32 [#allocation13], 4
      %s94 = int_to_ptr.vmem [resolvable:$true] %s93
      %96 = dma.hbm_to_vmem [thread:$0]  %s6, 576, %s94, [#allocation12]
    $region29: #{tpu_custom_call.1} parent=1 // pred_fallthru
      _
    // Predicated region
    $region30: #{tpu_custom_call.1} parent=1 // pred_check
      _
    $region31: #{tpu_custom_call.1} parent=1 // pred_check_branch
      %98 = sbr.rel (0) target = $region33
    $region32: #{tpu_custom_call.1} parent=1 // pred_region
      %99 = dma.done [#allocation3], 128
    $region33: #{tpu_custom_call.1} parent=1 // pred_fallthru
      _
    // Predicated region
    $region34: #{tpu_custom_call.1} parent=1 // pred_check
      _
    $region35: #{tpu_custom_call.1} parent=1 // pred_check_branch
      %101 = sbr.rel (0) target = $region37
    $region36: #{tpu_custom_call.1} parent=1 // pred_region
      %102 = dma.done [#allocation6], 1024
    $region37: #{tpu_custom_call.1} parent=1 // pred_fallthru
      _
    // Predicated region
    $region38: #{tpu_custom_call.1} parent=1 // pred_check
      _
    $region39: #{tpu_custom_call.1} parent=1 // pred_check_branch
      %104 = sbr.rel (0) target = $region41
    $region40: #{tpu_custom_call.1} parent=1 // pred_region
      %105 = dma.done [#allocation6], 2048
    $region41: #{tpu_custom_call.1} parent=1 // pred_fallthru
      _
    // Predicated region
    $region42: #{tpu_custom_call.1} parent=1 // pred_check
      _
    $region43: #{tpu_custom_call.1} parent=1 // pred_check_branch
      %107 = sbr.rel (0) target = $region45
    $region44: #{tpu_custom_call.1} parent=1 // pred_region
      %108 = dma.done [#allocation9], 8192
    $region45: #{tpu_custom_call.1} parent=1 // pred_fallthru
      _
    // Predicated region
    $region46: #{tpu_custom_call.1} parent=1 // pred_check
      _
    $region47: #{tpu_custom_call.1} parent=1 // pred_check_branch
      %110 = sbr.rel (0) target = $region49
    $region48: #{tpu_custom_call.1} parent=1 // pred_region
      %111 = dma.done [#allocation9], 32768
    $region49: #{tpu_custom_call.1} parent=1 // pred_fallthru
      _
    // Predicated region
    $region50: #{tpu_custom_call.1} parent=1 // pred_check
      _
    $region51: #{tpu_custom_call.1} parent=1 // pred_check_branch
      %113 = sbr.rel (0) target = $region53
    $region52: #{tpu_custom_call.1} parent=1 // pred_region
      %114 = dma.done [#allocation12], 57344
    $region53: #{tpu_custom_call.1} parent=1 // pred_fallthru
      _
    // Predicated region
    $region54: #{tpu_custom_call.1} parent=1 // pred_check
      _
    $region55: #{tpu_custom_call.1} parent=1 // pred_check_branch
      %116 = sbr.rel (0) target = $region57
    $region56: #{tpu_custom_call.1} parent=1 // pred_region
      %117 = dma.done [#allocation12], 576
    $region57: #{tpu_custom_call.1} parent=1 // pred_fallthru
      _
    %v119 = vld [vmem:[#allocation2] sm:$0xff]
    %v120 = vpack.c.bf16 %v119, %v119
    %v121 = vld [vmem:[#allocation5] sm:$0xf]
    %v122 = vld [vmem:[#allocation5 + $0x4] sm:$0xf]
    %v123 = vld [vmem:[#allocation5 + $0x8] sm:$0xf]
    %v124 = vld [vmem:[#allocation5 + $0xc] sm:$0xf]
    %v125 = vld [vmem:[#allocation5 + $0x10] sm:$0xf]
    %v126 = vld [vmem:[#allocation5 + $0x14] sm:$0xf]
    %v127 = vld [vmem:[#allocation5 + $0x18] sm:$0xf]
    %v128 = vld [vmem:[#allocation5 + $0x1c] sm:$0xf]
    %v129 = vld [vmem:[#allocation5 + $0x20] sm:$0xf]
    %v130 = vld [vmem:[#allocation5 + $0x24] sm:$0xf]
    %v131 = vld [vmem:[#allocation5 + $0x28] sm:$0xf]
    %v132 = vld [vmem:[#allocation5 + $0x2c] sm:$0xf]
    %v133 = vld [vmem:[#allocation5 + $0x30] sm:$0xf]
    %v134 = vld [vmem:[#allocation5 + $0x34] sm:$0xf]
    %v135 = vld [vmem:[#allocation5 + $0x38] sm:$0xf]
    %v136 = vld [vmem:[#allocation5 + $0x3c] sm:$0xf]
    %v137 = vld [vmem:[#allocation13] sm:$0x1]
    %v139 = vlaneseq
    %v140 = vshrl.u32 %v139, 7
    %v141 = vsub.s32 0, %v140
    %v142 = vrot.slane %v137, %v141
    %v160 = vunpack.c.l.b16 %v121
    %v161 = vunpack.c.l.b16 %v122
    %v162 = vunpack.c.l.b16 %v123
    %v163 = vunpack.c.l.b16 %v124
    %v164 = vunpack.c.l.b16 %v125
    %v165 = vunpack.c.l.b16 %v126
    %v166 = vunpack.c.l.b16 %v127
    %v167 = vunpack.c.l.b16 %v128
    %v168 = vunpack.c.l.b16 %v129
    %v169 = vunpack.c.l.b16 %v130
    %v170 = vunpack.c.l.b16 %v131
    %v171 = vunpack.c.l.b16 %v132
    %v172 = vunpack.c.l.b16 %v133
    %v173 = vunpack.c.l.b16 %v134
    %v174 = vunpack.c.l.b16 %v135
    %v175 = vunpack.c.l.b16 %v136
    %v176 = vpack.c.b16 %v161, %v160
    %v177 = vpack.c.b16 %v163, %v162
    %v178 = vpack.c.b16 %v165, %v164
    %v179 = vpack.c.b16 %v167, %v166
    %v180 = vpack.c.b16 %v169, %v168
    %v181 = vpack.c.b16 %v171, %v170
    %v182 = vpack.c.b16 %v173, %v172
    %v183 = vpack.c.b16 %v175, %v174
    %192 = vmatprep.subr.bf16.mxu0 0
    %193 = vmatpush1.bf16.msra.mxu0 %v176
    %194 = vmatprep.subr.bf16.mxu0 0
    %195 = vmatpush1.bf16.msra.mxu0 %v177
    %196 = vmatprep.subr.bf16.mxu0 0
    %197 = vmatpush1.bf16.msra.mxu0 %v178
    %198 = vmatprep.subr.bf16.mxu0 0
    %199 = vmatpush1.bf16.msra.mxu0 %v179
    %200 = vmatprep.subr.bf16.mxu0 0
    %201 = vmatpush1.bf16.msra.mxu0 %v180
    %202 = vmatprep.subr.bf16.mxu0 0
    %203 = vmatpush1.bf16.msra.mxu0 %v181
    %204 = vmatprep.subr.bf16.mxu0 0
    %205 = vmatpush1.bf16.msra.mxu0 %v182
    %206 = vmatprep.subr.bf16.mxu0 0
    %207 = vmatpush1.bf16.msra.mxu0 %v183
    %208 = vmatprep.subr.bf16.mxu0 0
    %209 = vmatpush1.bf16.msra.mxu0 0
    %210 = vmatprep.subr.bf16.mxu0 0
    %211 = vmatpush1.bf16.msra.mxu0 0
    %212 = vmatprep.subr.bf16.mxu0 0
    %213 = vmatpush1.bf16.msra.mxu0 0
    %214 = vmatprep.subr.bf16.mxu0 0
    %215 = vmatpush1.bf16.msra.mxu0 0
    %216 = vmatprep.subr.bf16.mxu0 0
    %217 = vmatpush1.bf16.msra.mxu0 0
    %218 = vmatprep.subr.bf16.mxu0 0
    %219 = vmatpush1.bf16.msra.mxu0 0
    %220 = vmatprep.subr.bf16.mxu0 0
    %221 = vmatpush1.bf16.msra.mxu0 0
    %222 = vmatprep.subr.bf16.mxu0 0
    %223 = vmatpush1.bf16.msra.mxu0 0
    %224 = vmatprep.mubr.bf16.mxu0 0
    %225 = vmatmul.mubr.bf16.gmra.mrb[0].mxu0 %v120
    %v226 = vpop.f32.mrb[0].mxu0
    %v227 = vadd.f32 %v142, %v226
    %v228 = vpop.f32.mrb[0].mxu0
    %v229 = vpop.f32.mrb[0].mxu0
    %v230 = vpop.f32.mrb[0].mxu0
    %231 = vdwg.mxu0
    %v232 = vmul.f32 %v227, 0.2
    %v233 = vmax.f32 %v227, %v232
    %v234 = vpack.c.bf16 %v233, %v233
    %v235 = vld [vmem:[#allocation7] sm:$0xff]
    %v236 = vld [vmem:[#allocation7 + $0x8] sm:$0xff]
    %v237 = vld [vmem:[#allocation7 + $0x10] sm:$0xff]
    %v238 = vld [vmem:[#allocation7 + $0x18] sm:$0xff]
    %v239 = vld [vmem:[#allocation7 + $0x20] sm:$0xff]
    %v240 = vld [vmem:[#allocation7 + $0x28] sm:$0xff]
    %v241 = vld [vmem:[#allocation7 + $0x30] sm:$0xff]
    %v242 = vld [vmem:[#allocation7 + $0x38] sm:$0xff]
    %v243 = vld [vmem:[#allocation7 + $0x40] sm:$0xff]
    %v244 = vld [vmem:[#allocation7 + $0x48] sm:$0xff]
    %v245 = vld [vmem:[#allocation7 + $0x50] sm:$0xff]
    %v246 = vld [vmem:[#allocation7 + $0x58] sm:$0xff]
    %v247 = vld [vmem:[#allocation7 + $0x60] sm:$0xff]
    %v248 = vld [vmem:[#allocation7 + $0x68] sm:$0xff]
    %v249 = vld [vmem:[#allocation7 + $0x70] sm:$0xff]
    %v250 = vld [vmem:[#allocation7 + $0x78] sm:$0xff]
    %v267 = vunpack.c.l.b16 %v235
    %v268 = vunpack.c.h.b16 %v235
    %v269 = vunpack.c.l.b16 %v236
    %v270 = vunpack.c.h.b16 %v236
    %v271 = vunpack.c.l.b16 %v237
    %v272 = vunpack.c.h.b16 %v237
    %v273 = vunpack.c.l.b16 %v238
    %v274 = vunpack.c.h.b16 %v238
    %v275 = vunpack.c.l.b16 %v239
    %v276 = vunpack.c.h.b16 %v239
    %v277 = vunpack.c.l.b16 %v240
    %v278 = vunpack.c.h.b16 %v240
    %v279 = vunpack.c.l.b16 %v241
    %v280 = vunpack.c.h.b16 %v241
    %v281 = vunpack.c.l.b16 %v242
    %v282 = vunpack.c.h.b16 %v242
    %v283 = vunpack.c.l.b16 %v243
    %v284 = vunpack.c.h.b16 %v243
    %v285 = vunpack.c.l.b16 %v244
    %v286 = vunpack.c.h.b16 %v244
    %v287 = vunpack.c.l.b16 %v245
    %v288 = vunpack.c.h.b16 %v245
    %v289 = vunpack.c.l.b16 %v246
    %v290 = vunpack.c.h.b16 %v246
    %v291 = vunpack.c.l.b16 %v247
    %v292 = vunpack.c.h.b16 %v247
    %v293 = vunpack.c.l.b16 %v248
    %v294 = vunpack.c.h.b16 %v248
    %v295 = vunpack.c.l.b16 %v249
    %v296 = vunpack.c.h.b16 %v249
    %v297 = vunpack.c.l.b16 %v250
    %v298 = vunpack.c.h.b16 %v250
    %v299 = vpack.c.b16 %v269, %v267
    %v300 = vpack.c.b16 %v270, %v268
    %v301 = vpack.c.b16 %v273, %v271
    %v302 = vpack.c.b16 %v274, %v272
    %v303 = vpack.c.b16 %v277, %v275
    %v304 = vpack.c.b16 %v278, %v276
    %v305 = vpack.c.b16 %v281, %v279
    %v306 = vpack.c.b16 %v282, %v280
    %v307 = vpack.c.b16 %v285, %v283
    %v308 = vpack.c.b16 %v286, %v284
    %v309 = vpack.c.b16 %v289, %v287
    %v310 = vpack.c.b16 %v290, %v288
    %v311 = vpack.c.b16 %v293, %v291
    %v312 = vpack.c.b16 %v294, %v292
    %v313 = vpack.c.b16 %v297, %v295
    %v314 = vpack.c.b16 %v298, %v296
    %331 = vmatprep.subr.bf16.mxu0 %v300
    %332 = vmatpush1.bf16.msra.mxu0 %v299
    %333 = vmatprep.subr.bf16.mxu0 %v302
    %334 = vmatpush1.bf16.msra.mxu0 %v301
    %335 = vmatprep.subr.bf16.mxu0 %v304
    %336 = vmatpush1.bf16.msra.mxu0 %v303
    %337 = vmatprep.subr.bf16.mxu0 %v306
    %338 = vmatpush1.bf16.msra.mxu0 %v305
    %339 = vmatprep.subr.bf16.mxu0 %v308
    %340 = vmatpush1.bf16.msra.mxu0 %v307
    %341 = vmatprep.subr.bf16.mxu0 %v310
    %342 = vmatpush1.bf16.msra.mxu0 %v309
    %343 = vmatprep.subr.bf16.mxu0 %v312
    %344 = vmatpush1.bf16.msra.mxu0 %v311
    %345 = vmatprep.subr.bf16.mxu0 %v314
    %346 = vmatpush1.bf16.msra.mxu0 %v313
    %347 = vmatprep.subr.bf16.mxu0 0
    %348 = vmatpush1.bf16.msra.mxu0 0
    %349 = vmatprep.subr.bf16.mxu0 0
    %350 = vmatpush1.bf16.msra.mxu0 0
    %351 = vmatprep.subr.bf16.mxu0 0
    %352 = vmatpush1.bf16.msra.mxu0 0
    %353 = vmatprep.subr.bf16.mxu0 0
    %354 = vmatpush1.bf16.msra.mxu0 0
    %355 = vmatprep.subr.bf16.mxu0 0
    %356 = vmatpush1.bf16.msra.mxu0 0
    %357 = vmatprep.subr.bf16.mxu0 0
    %358 = vmatpush1.bf16.msra.mxu0 0
    %359 = vmatprep.subr.bf16.mxu0 0
    %360 = vmatpush1.bf16.msra.mxu0 0
    %361 = vmatprep.subr.bf16.mxu0 0
    %362 = vmatpush1.bf16.msra.mxu0 0
    %363 = vmatprep.mubr.bf16.mxu0 0
    %364 = vmatmul.mubr.bf16.gmra.mrb[0].mxu0 %v234
    %v365 = vpop.f32.mrb[0].mxu0
    %v366 = vadd.f32 0.0, %v365
    %v367 = vpop.f32.mrb[0].mxu0
    %v368 = vadd.f32 0.0, %v367
    %v369 = vpop.f32.mrb[0].mxu0
    %v370 = vpop.f32.mrb[0].mxu0
    %371 = vdwg.mxu0
    %v372 = vrot.slane %v366, 4
    %v373 = vadd.f32 %v366, %v372
    %v374 = vrot.slane %v373, 2
    %v375 = vadd.f32 %v373, %v374
    %v376 = vrot.slane %v375, 1
    %v377 = vadd.f32 %v375, %v376
    %v378 = vrot.slane %v368, 4
    %v379 = vadd.f32 %v368, %v378
    %v380 = vrot.slane %v379, 2
    %v381 = vadd.f32 %v379, %v380
    %v382 = vrot.slane %v381, 1
    %v383 = vadd.f32 %v381, %v382
    %v384 = vrcp.pop 8.0
    %v385 = vmul.f32 %v377, %v384
    %v386 = vmul.f32 %v383, %v384
    %v387 = vsub.f32 %v366, %v385
    %v388 = vsub.f32 %v368, %v386
    %v389 = vmul.f32 %v387, %v387
    %v390 = vmul.f32 %v388, %v388
    %v391 = vrot.slane %v389, 4
    %v392 = vadd.f32 %v389, %v391
    %v393 = vrot.slane %v392, 2
    %v394 = vadd.f32 %v392, %v393
    %v395 = vrot.slane %v394, 1
    %v396 = vadd.f32 %v394, %v395
    %v397 = vrot.slane %v390, 4
    %v398 = vadd.f32 %v390, %v397
    %v399 = vrot.slane %v398, 2
    %v400 = vadd.f32 %v398, %v399
    %v401 = vrot.slane %v400, 1
    %v402 = vadd.f32 %v400, %v401
    %v403 = vmul.f32 %v396, %v384
    %v404 = vmul.f32 %v402, %v384
    %v405 = vld [vmem:[#allocation13 + $0x8] sm:$0x3]
    %v406 = vadd.f32 %v403, 1e-05
    %v407 = vadd.f32 %v404, 1e-05
    %v408 = vrsqrt.pop %v406
    %v409 = vrsqrt.pop %v407
    %v412 = vcombine.low %v408, %v409
    %v414 = vunpack.c.l.s4 1966171168
    %v415 = vunpack.c.0.s8 %v414
    %v416 = vlaneseq
    %v417 = vshrl.u32 %v416, 7
    %v418 = vsub.s32 %v415, %v417
    %v419 = vrot.slane %v412, %v418
    %v421 = vunpack.c.l.s4 1966171168
    %v422 = vunpack.c.0.s8 %v421
    %v423 = vlaneseq
    %v424 = vshrl.u32 %v423, 7
    %v425 = vsub.s32 %v422, %v424
    %v426 = vrot.slane %v419, %v425
    %v428 = vmul.f32 %v405, %v426
    %v429 = vld [vmem:[#allocation13 + $0x16] sm:$0x3]
    %v431 = vlaneseq
    %v432 = vshrl.u32 %v431, 7
    %v433 = vsub.s32 0, %v432
    %v434 = vrot.slane %v428, %v433
    %v435 = vlaneseq
    %v436 = vshrl.u32 %v435, 7
    %v437 = vsub.s32 1, %v436
    %v438 = vrot.slane %v428, %v437
    %v441 = vmul.f32 %v385, %v434
    %v442 = vmul.f32 %v386, %v438
    %v445 = vcombine.low %v441, %v442
    %v447 = vunpack.c.l.s4 1966171168
    %v448 = vunpack.c.0.s8 %v447
    %v449 = vlaneseq
    %v450 = vshrl.u32 %v449, 7
    %v451 = vsub.s32 %v448, %v450
    %v452 = vrot.slane %v445, %v451
    %v454 = vunpack.c.l.s4 1966171168
    %v455 = vunpack.c.0.s8 %v454
    %v456 = vlaneseq
    %v457 = vshrl.u32 %v456, 7
    %v458 = vsub.s32 %v455, %v457
    %v459 = vrot.slane %v452, %v458
    %v461 = vsub.f32 %v429, %v459
    %v462 = vmul.f32 %v366, %v434
    %v463 = vmul.f32 %v368, %v438
    %v465 = vlaneseq
    %v466 = vshrl.u32 %v465, 7
    %v467 = vsub.s32 0, %v466
    %v468 = vrot.slane %v461, %v467
    %v469 = vlaneseq
    %v470 = vshrl.u32 %v469, 7
    %v471 = vsub.s32 1, %v470
    %v472 = vrot.slane %v461, %v471
    %v475 = vadd.f32 %v462, %v468
    %v476 = vadd.f32 %v463, %v472
    %v477 = vmul.f32 %v475, 0.2
    %v478 = vmul.f32 %v476, 0.2
    %v479 = vmax.f32 %v475, %v477
    %v480 = vmax.f32 %v476, %v478
    %v481 = vpack.c.bf16 %v479, %v479
    %v482 = vpack.c.bf16 %v480, %v480
    %v483 = vld [vmem:[#allocation8] sm:$0xff]
    %v484 = vld [vmem:[#allocation8 + $0x8] sm:$0xff]
    %v485 = vld [vmem:[#allocation8 + $0x10] sm:$0xff]
    %v486 = vld [vmem:[#allocation8 + $0x18] sm:$0xff]
    %v487 = vld [vmem:[#allocation8 + $0x20] sm:$0xff]
    %v488 = vld [vmem:[#allocation8 + $0x28] sm:$0xff]
    %v489 = vld [vmem:[#allocation8 + $0x30] sm:$0xff]
    %v490 = vld [vmem:[#allocation8 + $0x38] sm:$0xff]
    %v491 = vld [vmem:[#allocation8 + $0x40] sm:$0xff]
    %v492 = vld [vmem:[#allocation8 + $0x48] sm:$0xff]
    %v493 = vld [vmem:[#allocation8 + $0x50] sm:$0xff]
    %v494 = vld [vmem:[#allocation8 + $0x58] sm:$0xff]
    %v495 = vld [vmem:[#allocation8 + $0x60] sm:$0xff]
    %v496 = vld [vmem:[#allocation8 + $0x68] sm:$0xff]
    %v497 = vld [vmem:[#allocation8 + $0x70] sm:$0xff]
    %v498 = vld [vmem:[#allocation8 + $0x78] sm:$0xff]
    %v499 = vld [vmem:[#allocation8 + $0x80] sm:$0xff]
    %v500 = vld [vmem:[#allocation8 + $0x88] sm:$0xff]
    %v501 = vld [vmem:[#allocation8 + $0x90] sm:$0xff]
    %v502 = vld [vmem:[#allocation8 + $0x98] sm:$0xff]
    %v503 = vld [vmem:[#allocation8 + $0xa0] sm:$0xff]
    %v504 = vld [vmem:[#allocation8 + $0xa8] sm:$0xff]
    %v505 = vld [vmem:[#allocation8 + $0xb0] sm:$0xff]
    %v506 = vld [vmem:[#allocation8 + $0xb8] sm:$0xff]
    %v507 = vld [vmem:[#allocation8 + $0xc0] sm:$0xff]
    %v508 = vld [vmem:[#allocation8 + $0xc8] sm:$0xff]
    %v509 = vld [vmem:[#allocation8 + $0xd0] sm:$0xff]
    %v510 = vld [vmem:[#allocation8 + $0xd8] sm:$0xff]
    %v511 = vld [vmem:[#allocation8 + $0xe0] sm:$0xff]
    %v512 = vld [vmem:[#allocation8 + $0xe8] sm:$0xff]
    %v513 = vld [vmem:[#allocation8 + $0xf0] sm:$0xff]
    %v514 = vld [vmem:[#allocation8 + $0xf8] sm:$0xff]
    %v515 = vld [vmem:[#allocation8 + $0x100] sm:$0xff]
    %v516 = vld [vmem:[#allocation8 + $0x108] sm:$0xff]
    %v517 = vld [vmem:[#allocation8 + $0x110] sm:$0xff]
    %v518 = vld [vmem:[#allocation8 + $0x118] sm:$0xff]
    %v519 = vld [vmem:[#allocation8 + $0x120] sm:$0xff]
    %v520 = vld [vmem:[#allocation8 + $0x128] sm:$0xff]
    %v521 = vld [vmem:[#allocation8 + $0x130] sm:$0xff]
    %v522 = vld [vmem:[#allocation8 + $0x138] sm:$0xff]
    %v523 = vld [vmem:[#allocation8 + $0x140] sm:$0xff]
    %v524 = vld [vmem:[#allocation8 + $0x148] sm:$0xff]
    %v525 = vld [vmem:[#allocation8 + $0x150] sm:$0xff]
    %v526 = vld [vmem:[#allocation8 + $0x158] sm:$0xff]
    %v527 = vld [vmem:[#allocation8 + $0x160] sm:$0xff]
    %v528 = vld [vmem:[#allocation8 + $0x168] sm:$0xff]
    %v529 = vld [vmem:[#allocation8 + $0x170] sm:$0xff]
    %v530 = vld [vmem:[#allocation8 + $0x178] sm:$0xff]
    %v531 = vld [vmem:[#allocation8 + $0x180] sm:$0xff]
    %v532 = vld [vmem:[#allocation8 + $0x188] sm:$0xff]
    %v533 = vld [vmem:[#allocation8 + $0x190] sm:$0xff]
    %v534 = vld [vmem:[#allocation8 + $0x198] sm:$0xff]
    %v535 = vld [vmem:[#allocation8 + $0x1a0] sm:$0xff]
    %v536 = vld [vmem:[#allocation8 + $0x1a8] sm:$0xff]
    %v537 = vld [vmem:[#allocation8 + $0x1b0] sm:$0xff]
    %v538 = vld [vmem:[#allocation8 + $0x1b8] sm:$0xff]
    %v539 = vld [vmem:[#allocation8 + $0x1c0] sm:$0xff]
    %v540 = vld [vmem:[#allocation8 + $0x1c8] sm:$0xff]
    %v541 = vld [vmem:[#allocation8 + $0x1d0] sm:$0xff]
    %v542 = vld [vmem:[#allocation8 + $0x1d8] sm:$0xff]
    %v543 = vld [vmem:[#allocation8 + $0x1e0] sm:$0xff]
    %v544 = vld [vmem:[#allocation8 + $0x1e8] sm:$0xff]
    %v545 = vld [vmem:[#allocation8 + $0x1f0] sm:$0xff]
    %v546 = vld [vmem:[#allocation8 + $0x1f8] sm:$0xff]
    %v611 = vunpack.c.l.b16 %v483
    %v612 = vunpack.c.h.b16 %v483
    %v613 = vunpack.c.l.b16 %v484
    %v614 = vunpack.c.h.b16 %v484
    %v615 = vunpack.c.l.b16 %v485
    %v616 = vunpack.c.h.b16 %v485
    %v617 = vunpack.c.l.b16 %v486
    %v618 = vunpack.c.h.b16 %v486
    %v619 = vunpack.c.l.b16 %v487
    %v620 = vunpack.c.h.b16 %v487
    %v621 = vunpack.c.l.b16 %v488
    %v622 = vunpack.c.h.b16 %v488
    %v623 = vunpack.c.l.b16 %v489
    %v624 = vunpack.c.h.b16 %v489
    %v625 = vunpack.c.l.b16 %v490
    %v626 = vunpack.c.h.b16 %v490
    %v627 = vunpack.c.l.b16 %v491
    %v628 = vunpack.c.h.b16 %v491
    %v629 = vunpack.c.l.b16 %v492
    %v630 = vunpack.c.h.b16 %v492
    %v631 = vunpack.c.l.b16 %v493
    %v632 = vunpack.c.h.b16 %v493
    %v633 = vunpack.c.l.b16 %v494
    %v634 = vunpack.c.h.b16 %v494
    %v635 = vunpack.c.l.b16 %v495
    %v636 = vunpack.c.h.b16 %v495
    %v637 = vunpack.c.l.b16 %v496
    %v638 = vunpack.c.h.b16 %v496
    %v639 = vunpack.c.l.b16 %v497
    %v640 = vunpack.c.h.b16 %v497
    %v641 = vunpack.c.l.b16 %v498
    %v642 = vunpack.c.h.b16 %v498
    %v643 = vunpack.c.l.b16 %v499
    %v644 = vunpack.c.h.b16 %v499
    %v645 = vunpack.c.l.b16 %v500
    %v646 = vunpack.c.h.b16 %v500
    %v647 = vunpack.c.l.b16 %v501
    %v648 = vunpack.c.h.b16 %v501
    %v649 = vunpack.c.l.b16 %v502
    %v650 = vunpack.c.h.b16 %v502
    %v651 = vunpack.c.l.b16 %v503
    %v652 = vunpack.c.h.b16 %v503
    %v653 = vunpack.c.l.b16 %v504
    %v654 = vunpack.c.h.b16 %v504
    %v655 = vunpack.c.l.b16 %v505
    %v656 = vunpack.c.h.b16 %v505
    %v657 = vunpack.c.l.b16 %v506
    %v658 = vunpack.c.h.b16 %v506
    %v659 = vunpack.c.l.b16 %v507
    %v660 = vunpack.c.h.b16 %v507
    %v661 = vunpack.c.l.b16 %v508
    %v662 = vunpack.c.h.b16 %v508
    %v663 = vunpack.c.l.b16 %v509
    %v664 = vunpack.c.h.b16 %v509
    %v665 = vunpack.c.l.b16 %v510
    %v666 = vunpack.c.h.b16 %v510
    %v667 = vunpack.c.l.b16 %v511
    %v668 = vunpack.c.h.b16 %v511
    %v669 = vunpack.c.l.b16 %v512
    %v670 = vunpack.c.h.b16 %v512
    %v671 = vunpack.c.l.b16 %v513
    %v672 = vunpack.c.h.b16 %v513
    %v673 = vunpack.c.l.b16 %v514
    %v674 = vunpack.c.h.b16 %v514
    %v675 = vunpack.c.l.b16 %v515
    %v676 = vunpack.c.h.b16 %v515
    %v677 = vunpack.c.l.b16 %v516
    %v678 = vunpack.c.h.b16 %v516
    %v679 = vunpack.c.l.b16 %v517
    %v680 = vunpack.c.h.b16 %v517
    %v681 = vunpack.c.l.b16 %v518
    %v682 = vunpack.c.h.b16 %v518
    %v683 = vunpack.c.l.b16 %v519
    %v684 = vunpack.c.h.b16 %v519
    %v685 = vunpack.c.l.b16 %v520
    %v686 = vunpack.c.h.b16 %v520
    %v687 = vunpack.c.l.b16 %v521
    %v688 = vunpack.c.h.b16 %v521
    %v689 = vunpack.c.l.b16 %v522
    %v690 = vunpack.c.h.b16 %v522
    %v691 = vunpack.c.l.b16 %v523
    %v692 = vunpack.c.h.b16 %v523
    %v693 = vunpack.c.l.b16 %v524
    %v694 = vunpack.c.h.b16 %v524
    %v695 = vunpack.c.l.b16 %v525
    %v696 = vunpack.c.h.b16 %v525
    %v697 = vunpack.c.l.b16 %v526
    %v698 = vunpack.c.h.b16 %v526
    %v699 = vunpack.c.l.b16 %v527
    %v700 = vunpack.c.h.b16 %v527
    %v701 = vunpack.c.l.b16 %v528
    %v702 = vunpack.c.h.b16 %v528
    %v703 = vunpack.c.l.b16 %v529
    %v704 = vunpack.c.h.b16 %v529
    %v705 = vunpack.c.l.b16 %v530
    %v706 = vunpack.c.h.b16 %v530
    %v707 = vunpack.c.l.b16 %v531
    %v708 = vunpack.c.h.b16 %v531
    %v709 = vunpack.c.l.b16 %v532
    %v710 = vunpack.c.h.b16 %v532
    %v711 = vunpack.c.l.b16 %v533
    %v712 = vunpack.c.h.b16 %v533
    %v713 = vunpack.c.l.b16 %v534
    %v714 = vunpack.c.h.b16 %v534
    %v715 = vunpack.c.l.b16 %v535
    %v716 = vunpack.c.h.b16 %v535
    %v717 = vunpack.c.l.b16 %v536
    %v718 = vunpack.c.h.b16 %v536
    %v719 = vunpack.c.l.b16 %v537
    %v720 = vunpack.c.h.b16 %v537
    %v721 = vunpack.c.l.b16 %v538
    %v722 = vunpack.c.h.b16 %v538
    %v723 = vunpack.c.l.b16 %v539
    %v724 = vunpack.c.h.b16 %v539
    %v725 = vunpack.c.l.b16 %v540
    %v726 = vunpack.c.h.b16 %v540
    %v727 = vunpack.c.l.b16 %v541
    %v728 = vunpack.c.h.b16 %v541
    %v729 = vunpack.c.l.b16 %v542
    %v730 = vunpack.c.h.b16 %v542
    %v731 = vunpack.c.l.b16 %v543
    %v732 = vunpack.c.h.b16 %v543
    %v733 = vunpack.c.l.b16 %v544
    %v734 = vunpack.c.h.b16 %v544
    %v735 = vunpack.c.l.b16 %v545
    %v736 = vunpack.c.h.b16 %v545
    %v737 = vunpack.c.l.b16 %v546
    %v738 = vunpack.c.h.b16 %v546
    %v739 = vpack.c.b16 %v615, %v611
    %v740 = vpack.c.b16 %v616, %v612
    %v741 = vpack.c.b16 %v617, %v613
    %v742 = vpack.c.b16 %v618, %v614
    %v743 = vpack.c.b16 %v623, %v619
    %v744 = vpack.c.b16 %v624, %v620
    %v745 = vpack.c.b16 %v625, %v621
    %v746 = vpack.c.b16 %v626, %v622
    %v747 = vpack.c.b16 %v631, %v627
    %v748 = vpack.c.b16 %v632, %v628
    %v749 = vpack.c.b16 %v633, %v629
    %v750 = vpack.c.b16 %v634, %v630
    %v751 = vpack.c.b16 %v639, %v635
    %v752 = vpack.c.b16 %v640, %v636
    %v753 = vpack.c.b16 %v641, %v637
    %v754 = vpack.c.b16 %v642, %v638
    %v755 = vpack.c.b16 %v647, %v643
    %v756 = vpack.c.b16 %v648, %v644
    %v757 = vpack.c.b16 %v649, %v645
    %v758 = vpack.c.b16 %v650, %v646
    %v759 = vpack.c.b16 %v655, %v651
    %v760 = vpack.c.b16 %v656, %v652
    %v761 = vpack.c.b16 %v657, %v653
    %v762 = vpack.c.b16 %v658, %v654
    %v763 = vpack.c.b16 %v663, %v659
    %v764 = vpack.c.b16 %v664, %v660
    %v765 = vpack.c.b16 %v665, %v661
    %v766 = vpack.c.b16 %v666, %v662
    %v767 = vpack.c.b16 %v671, %v667
    %v768 = vpack.c.b16 %v672, %v668
    %v769 = vpack.c.b16 %v673, %v669
    %v770 = vpack.c.b16 %v674, %v670
    %v771 = vpack.c.b16 %v679, %v675
    %v772 = vpack.c.b16 %v680, %v676
    %v773 = vpack.c.b16 %v681, %v677
    %v774 = vpack.c.b16 %v682, %v678
    %v775 = vpack.c.b16 %v687, %v683
    %v776 = vpack.c.b16 %v688, %v684
    %v777 = vpack.c.b16 %v689, %v685
    %v778 = vpack.c.b16 %v690, %v686
    %v779 = vpack.c.b16 %v695, %v691
    %v780 = vpack.c.b16 %v696, %v692
    %v781 = vpack.c.b16 %v697, %v693
    %v782 = vpack.c.b16 %v698, %v694
    %v783 = vpack.c.b16 %v703, %v699
    %v784 = vpack.c.b16 %v704, %v700
    %v785 = vpack.c.b16 %v705, %v701
    %v786 = vpack.c.b16 %v706, %v702
    %v787 = vpack.c.b16 %v711, %v707
    %v788 = vpack.c.b16 %v712, %v708
    %v789 = vpack.c.b16 %v713, %v709
    %v790 = vpack.c.b16 %v714, %v710
    %v791 = vpack.c.b16 %v719, %v715
    %v792 = vpack.c.b16 %v720, %v716
    %v793 = vpack.c.b16 %v721, %v717
    %v794 = vpack.c.b16 %v722, %v718
    %v795 = vpack.c.b16 %v727, %v723
    %v796 = vpack.c.b16 %v728, %v724
    %v797 = vpack.c.b16 %v729, %v725
    %v798 = vpack.c.b16 %v730, %v726
    %v799 = vpack.c.b16 %v735, %v731
    %v800 = vpack.c.b16 %v736, %v732
    %v801 = vpack.c.b16 %v737, %v733
    %v802 = vpack.c.b16 %v738, %v734
    %867 = vmatprep.subr.bf16.mxu0 %v740
    %868 = vmatpush1.bf16.msra.mxu0 %v739
    %869 = vmatprep.subr.bf16.mxu0 %v744
    %870 = vmatpush1.bf16.msra.mxu0 %v743
    %871 = vmatprep.subr.bf16.mxu0 %v748
    %872 = vmatpush1.bf16.msra.mxu0 %v747
    %873 = vmatprep.subr.bf16.mxu0 %v752
    %874 = vmatpush1.bf16.msra.mxu0 %v751
    %875 = vmatprep.subr.bf16.mxu0 %v756
    %876 = vmatpush1.bf16.msra.mxu0 %v755
    %877 = vmatprep.subr.bf16.mxu0 %v760
    %878 = vmatpush1.bf16.msra.mxu0 %v759
    %879 = vmatprep.subr.bf16.mxu0 %v764
    %880 = vmatpush1.bf16.msra.mxu0 %v763
    %881 = vmatprep.subr.bf16.mxu0 %v768
    %882 = vmatpush1.bf16.msra.mxu0 %v767
    %883 = vmatprep.subr.bf16.mxu0 %v772
    %884 = vmatpush1.bf16.msra.mxu0 %v771
    %885 = vmatprep.subr.bf16.mxu0 %v776
    %886 = vmatpush1.bf16.msra.mxu0 %v775
    %887 = vmatprep.subr.bf16.mxu0 %v780
    %888 = vmatpush1.bf16.msra.mxu0 %v779
    %889 = vmatprep.subr.bf16.mxu0 %v784
    %890 = vmatpush1.bf16.msra.mxu0 %v783
    %891 = vmatprep.subr.bf16.mxu0 %v788
    %892 = vmatpush1.bf16.msra.mxu0 %v787
    %893 = vmatprep.subr.bf16.mxu0 %v792
    %894 = vmatpush1.bf16.msra.mxu0 %v791
    %895 = vmatprep.subr.bf16.mxu0 %v796
    %896 = vmatpush1.bf16.msra.mxu0 %v795
    %897 = vmatprep.subr.bf16.mxu0 %v800
    %898 = vmatpush1.bf16.msra.mxu0 %v799
    %899 = vmatprep.mubr.bf16.mxu0 %v482
    %900 = vmatmul.mubr.bf16.gmra.mrb[0].mxu0 %v481
    %v901 = vpop.f32.mrb[0].mxu0
    %v902 = vadd.f32 0.0, %v901
    %v903 = vpop.f32.mrb[0].mxu0
    %v904 = vadd.f32 0.0, %v903
    %v905 = vpop.f32.mrb[0].mxu0
    %v906 = vpop.f32.mrb[0].mxu0
    %907 = vdwg.mxu0
    %908 = vmatprep.subr.bf16.mxu0 %v742
    %909 = vmatpush1.bf16.msra.mxu0 %v741
    %910 = vmatprep.subr.bf16.mxu0 %v746
    %911 = vmatpush1.bf16.msra.mxu0 %v745
    %912 = vmatprep.subr.bf16.mxu0 %v750
    %913 = vmatpush1.bf16.msra.mxu0 %v749
    %914 = vmatprep.subr.bf16.mxu0 %v754
    %915 = vmatpush1.bf16.msra.mxu0 %v753
    %916 = vmatprep.subr.bf16.mxu0 %v758
    %917 = vmatpush1.bf16.msra.mxu0 %v757
    %918 = vmatprep.subr.bf16.mxu0 %v762
    %919 = vmatpush1.bf16.msra.mxu0 %v761
    %920 = vmatprep.subr.bf16.mxu0 %v766
    %921 = vmatpush1.bf16.msra.mxu0 %v765
    %922 = vmatprep.subr.bf16.mxu0 %v770
    %923 = vmatpush1.bf16.msra.mxu0 %v769
    %924 = vmatprep.subr.bf16.mxu0 %v774
    %925 = vmatpush1.bf16.msra.mxu0 %v773
    %926 = vmatprep.subr.bf16.mxu0 %v778
    %927 = vmatpush1.bf16.msra.mxu0 %v777
    %928 = vmatprep.subr.bf16.mxu0 %v782
    %929 = vmatpush1.bf16.msra.mxu0 %v781
    %930 = vmatprep.subr.bf16.mxu0 %v786
    %931 = vmatpush1.bf16.msra.mxu0 %v785
    %932 = vmatprep.subr.bf16.mxu0 %v790
    %933 = vmatpush1.bf16.msra.mxu0 %v789
    %934 = vmatprep.subr.bf16.mxu0 %v794
    %935 = vmatpush1.bf16.msra.mxu0 %v793
    %936 = vmatprep.subr.bf16.mxu0 %v798
    %937 = vmatpush1.bf16.msra.mxu0 %v797
    %938 = vmatprep.subr.bf16.mxu0 %v802
    %939 = vmatpush1.bf16.msra.mxu0 %v801
    %940 = vmatprep.mubr.bf16.mxu0 %v482
    %941 = vmatmul.mubr.bf16.gmra.mrb[0].mxu0 %v481
    %v942 = vpop.f32.mrb[0].mxu0
    %v943 = vadd.f32 0.0, %v942
    %v944 = vpop.f32.mrb[0].mxu0
    %v945 = vadd.f32 0.0, %v944
    %v946 = vpop.f32.mrb[0].mxu0
    %v947 = vpop.f32.mrb[0].mxu0
    %948 = vdwg.mxu0
    %v949 = vrot.slane %v902, 4
    %v950 = vadd.f32 %v902, %v949
    %v951 = vrot.slane %v950, 2
    %v952 = vadd.f32 %v950, %v951
    %v953 = vrot.slane %v952, 1
    %v954 = vadd.f32 %v952, %v953
    %v955 = vrot.slane %v904, 4
    %v956 = vadd.f32 %v904, %v955
    %v957 = vrot.slane %v956, 2
    %v958 = vadd.f32 %v956, %v957
    %v959 = vrot.slane %v958, 1
    %v960 = vadd.f32 %v958, %v959
    %v961 = vrot.slane %v943, 4
    %v962 = vadd.f32 %v943, %v961
    %v963 = vrot.slane %v962, 2
    %v964 = vadd.f32 %v962, %v963
    %v965 = vrot.slane %v964, 1
    %v966 = vadd.f32 %v964, %v965
    %v967 = vrot.slane %v945, 4
    %v968 = vadd.f32 %v945, %v967
    %v969 = vrot.slane %v968, 2
    %v970 = vadd.f32 %v968, %v969
    %v971 = vrot.slane %v970, 1
    %v972 = vadd.f32 %v970, %v971
    %v973 = vmul.f32 %v954, %v384
    %v974 = vmul.f32 %v960, %v384
    %v975 = vmul.f32 %v966, %v384
    %v976 = vmul.f32 %v972, %v384
    %v977 = vsub.f32 %v902, %v973
    %v978 = vsub.f32 %v904, %v974
    %v979 = vsub.f32 %v943, %v975
    %v980 = vsub.f32 %v945, %v976
    %v981 = vmul.f32 %v977, %v977
    %v982 = vmul.f32 %v978, %v978
    %v983 = vmul.f32 %v979, %v979
    %v984 = vmul.f32 %v980, %v980
    %v985 = vrot.slane %v981, 4
    %v986 = vadd.f32 %v981, %v985
    %v987 = vrot.slane %v986, 2
    %v988 = vadd.f32 %v986, %v987
    %v989 = vrot.slane %v988, 1
    %v990 = vadd.f32 %v988, %v989
    %v991 = vrot.slane %v982, 4
    %v992 = vadd.f32 %v982, %v991
    %v993 = vrot.slane %v992, 2
    %v994 = vadd.f32 %v992, %v993
    %v995 = vrot.slane %v994, 1
    %v996 = vadd.f32 %v994, %v995
    %v997 = vrot.slane %v983, 4
    %v998 = vadd.f32 %v983, %v997
    %v999 = vrot.slane %v998, 2
    %v1000 = vadd.f32 %v998, %v999
    %v1001 = vrot.slane %v1000, 1
    %v1002 = vadd.f32 %v1000, %v1001
    %v1003 = vrot.slane %v984, 4
    %v1004 = vadd.f32 %v984, %v1003
    %v1005 = vrot.slane %v1004, 2
    %v1006 = vadd.f32 %v1004, %v1005
    %v1007 = vrot.slane %v1006, 1
    %v1008 = vadd.f32 %v1006, %v1007
    %v1009 = vmul.f32 %v990, %v384
    %v1010 = vmul.f32 %v996, %v384
    %v1011 = vmul.f32 %v1002, %v384
    %v1012 = vmul.f32 %v1008, %v384
    %v1013 = vld [vmem:[#allocation13 + $0xa] sm:$0xf]
    %v1014 = vadd.f32 %v1009, 1e-05
    %v1015 = vadd.f32 %v1010, 1e-05
    %v1016 = vadd.f32 %v1011, 1e-05
    %v1017 = vadd.f32 %v1012, 1e-05
    %v1018 = vrsqrt.pop %v1014
    %v1019 = vrsqrt.pop %v1015
    %v1020 = vrsqrt.pop %v1016
    %v1021 = vrsqrt.pop %v1017
    %v1026 = vcombine.low %v1018, %v1019
    %v1027 = vcombine.low %v1020, %v1021
    %v1029 = vunpack.c.l.s4 1966171168
    %v1030 = vunpack.c.0.s8 %v1029
    %v1031 = vlaneseq
    %v1032 = vshrl.u32 %v1031, 7
    %v1033 = vsub.s32 %v1030, %v1032
    %v1034 = vrot.slane %v1026, %v1033
    %v1036 = vunpack.c.l.s4 1966171168
    %v1037 = vunpack.c.0.s8 %v1036
    %v1038 = vlaneseq
    %v1039 = vshrl.u32 %v1038, 7
    %v1040 = vsub.s32 %v1037, %v1039
    %v1041 = vrot.slane %v1027, %v1040
    %v1042 = vcombine.low %v1034, %v1041
    %v1044 = vunpack.c.l.s4 1966171168
    %v1045 = vunpack.c.0.s8 %v1044
    %v1046 = vlaneseq
    %v1047 = vshrl.u32 %v1046, 7
    %v1048 = vsub.s32 %v1045, %v1047
    %v1049 = vrot.slane %v1042, %v1048
    %v1051 = vmul.f32 %v1013, %v1049
    %v1052 = vld [vmem:[#allocation13 + $0x18] sm:$0xf]
    %v1054 = vlaneseq
    %v1055 = vshrl.u32 %v1054, 7
    %v1056 = vsub.s32 0, %v1055
    %v1057 = vrot.slane %v1051, %v1056
    %v1058 = vlaneseq
    %v1059 = vshrl.u32 %v1058, 7
    %v1060 = vsub.s32 1, %v1059
    %v1061 = vrot.slane %v1051, %v1060
    %v1062 = vlaneseq
    %v1063 = vshrl.u32 %v1062, 7
    %v1064 = vsub.s32 2, %v1063
    %v1065 = vrot.slane %v1051, %v1064
    %v1066 = vlaneseq
    %v1067 = vshrl.u32 %v1066, 7
    %v1068 = vsub.s32 3, %v1067
    %v1069 = vrot.slane %v1051, %v1068
    %v1074 = vmul.f32 %v973, %v1057
    %v1075 = vmul.f32 %v974, %v1061
    %v1076 = vmul.f32 %v975, %v1065
    %v1077 = vmul.f32 %v976, %v1069
    %v1082 = vcombine.low %v1074, %v1075
    %v1083 = vcombine.low %v1076, %v1077
    %v1085 = vunpack.c.l.s4 1966171168
    %v1086 = vunpack.c.0.s8 %v1085
    %v1087 = vlaneseq
    %v1088 = vshrl.u32 %v1087, 7
    %v1089 = vsub.s32 %v1086, %v1088
    %v1090 = vrot.slane %v1082, %v1089
    %v1092 = vunpack.c.l.s4 1966171168
    %v1093 = vunpack.c.0.s8 %v1092
    %v1094 = vlaneseq
    %v1095 = vshrl.u32 %v1094, 7
    %v1096 = vsub.s32 %v1093, %v1095
    %v1097 = vrot.slane %v1083, %v1096
    %v1098 = vcombine.low %v1090, %v1097
    %v1100 = vunpack.c.l.s4 1966171168
    %v1101 = vunpack.c.0.s8 %v1100
    %v1102 = vlaneseq
    %v1103 = vshrl.u32 %v1102, 7
    %v1104 = vsub.s32 %v1101, %v1103
    %v1105 = vrot.slane %v1098, %v1104
    %v1107 = vsub.f32 %v1052, %v1105
    %v1108 = vmul.f32 %v902, %v1057
    %v1109 = vmul.f32 %v904, %v1061
    %v1110 = vmul.f32 %v943, %v1065
    %v1111 = vmul.f32 %v945, %v1069
    %v1113 = vlaneseq
    %v1114 = vshrl.u32 %v1113, 7
    %v1115 = vsub.s32 0, %v1114
    %v1116 = vrot.slane %v1107, %v1115
    %v1117 = vlaneseq
    %v1118 = vshrl.u32 %v1117, 7
    %v1119 = vsub.s32 1, %v1118
    %v1120 = vrot.slane %v1107, %v1119
    %v1121 = vlaneseq
    %v1122 = vshrl.u32 %v1121, 7
    %v1123 = vsub.s32 2, %v1122
    %v1124 = vrot.slane %v1107, %v1123
    %v1125 = vlaneseq
    %v1126 = vshrl.u32 %v1125, 7
    %v1127 = vsub.s32 3, %v1126
    %v1128 = vrot.slane %v1107, %v1127
    %v1133 = vadd.f32 %v1108, %v1116
    %v1134 = vadd.f32 %v1109, %v1120
    %v1135 = vadd.f32 %v1110, %v1124
    %v1136 = vadd.f32 %v1111, %v1128
    %v1137 = vmul.f32 %v1133, 0.2
    %v1138 = vmul.f32 %v1134, 0.2
    %v1139 = vmul.f32 %v1135, 0.2
    %v1140 = vmul.f32 %v1136, 0.2
    %v1141 = vmax.f32 %v1133, %v1137
    %v1142 = vmax.f32 %v1134, %v1138
    %v1143 = vmax.f32 %v1135, %v1139
    %v1144 = vmax.f32 %v1136, %v1140
    %v1145 = vpack.c.bf16 %v1141, %v1141
    %v1146 = vpack.c.bf16 %v1142, %v1142
    %v1147 = vpack.c.bf16 %v1143, %v1143
    %v1148 = vpack.c.bf16 %v1144, %v1144
    %v1149 = vld [vmem:[#allocation10] sm:$0xff]
    %v1150 = vld [vmem:[#allocation10 + $0x8] sm:$0xff]
    %v1151 = vld [vmem:[#allocation10 + $0x10] sm:$0xff]
    %v1152 = vld [vmem:[#allocation10 + $0x18] sm:$0xff]
    %v1153 = vld [vmem:[#allocation10 + $0x20] sm:$0xff]
    %v1154 = vld [vmem:[#allocation10 + $0x28] sm:$0xff]
    %v1155 = vld [vmem:[#allocation10 + $0x30] sm:$0xff]
    %v1156 = vld [vmem:[#allocation10 + $0x38] sm:$0xff]
    %v1157 = vld [vmem:[#allocation10 + $0x40] sm:$0xff]
    %v1158 = vld [vmem:[#allocation10 + $0x48] sm:$0xff]
    %v1159 = vld [vmem:[#allocation10 + $0x50] sm:$0xff]
    %v1160 = vld [vmem:[#allocation10 + $0x58] sm:$0xff]
    %v1161 = vld [vmem:[#allocation10 + $0x60] sm:$0xff]
    %v1162 = vld [vmem:[#allocation10 + $0x68] sm:$0xff]
    %v1163 = vld [vmem:[#allocation10 + $0x70] sm:$0xff]
    %v1164 = vld [vmem:[#allocation10 + $0x78] sm:$0xff]
    %v1165 = vld [vmem:[#allocation10 + $0x80] sm:$0xff]
    %v1166 = vld [vmem:[#allocation10 + $0x88] sm:$0xff]
    %v1167 = vld [vmem:[#allocation10 + $0x90] sm:$0xff]
    %v1168 = vld [vmem:[#allocation10 + $0x98] sm:$0xff]
    %v1169 = vld [vmem:[#allocation10 + $0xa0] sm:$0xff]
    %v1170 = vld [vmem:[#allocation10 + $0xa8] sm:$0xff]
    %v1171 = vld [vmem:[#allocation10 + $0xb0] sm:$0xff]
    %v1172 = vld [vmem:[#allocation10 + $0xb8] sm:$0xff]
    %v1173 = vld [vmem:[#allocation10 + $0xc0] sm:$0xff]
    %v1174 = vld [vmem:[#allocation10 + $0xc8] sm:$0xff]
    %v1175 = vld [vmem:[#allocation10 + $0xd0] sm:$0xff]
    %v1176 = vld [vmem:[#allocation10 + $0xd8] sm:$0xff]
    %v1177 = vld [vmem:[#allocation10 + $0xe0] sm:$0xff]
    %v1178 = vld [vmem:[#allocation10 + $0xe8] sm:$0xff]
    %v1179 = vld [vmem:[#allocation10 + $0xf0] sm:$0xff]
    %v1180 = vld [vmem:[#allocation10 + $0xf8] sm:$0xff]
    %v1181 = vld [vmem:[#allocation10 + $0x100] sm:$0xff]
    %v1182 = vld [vmem:[#allocation10 + $0x108] sm:$0xff]
    %v1183 = vld [vmem:[#allocation10 + $0x110] sm:$0xff]
    %v1184 = vld [vmem:[#allocation10 + $0x118] sm:$0xff]
    %v1185 = vld [vmem:[#allocation10 + $0x120] sm:$0xff]
    %v1186 = vld [vmem:[#allocation10 + $0x128] sm:$0xff]
    %v1187 = vld [vmem:[#allocation10 + $0x130] sm:$0xff]
    %v1188 = vld [vmem:[#allocation10 + $0x138] sm:$0xff]
    %v1189 = vld [vmem:[#allocation10 + $0x140] sm:$0xff]
    %v1190 = vld [vmem:[#allocation10 + $0x148] sm:$0xff]
    %v1191 = vld [vmem:[#allocation10 + $0x150] sm:$0xff]
    %v1192 = vld [vmem:[#allocation10 + $0x158] sm:$0xff]
    %v1193 = vld [vmem:[#allocation10 + $0x160] sm:$0xff]
    %v1194 = vld [vmem:[#allocation10 + $0x168] sm:$0xff]
    %v1195 = vld [vmem:[#allocation10 + $0x170] sm:$0xff]
    %v1196 = vld [vmem:[#allocation10 + $0x178] sm:$0xff]
    %v1197 = vld [vmem:[#allocation10 + $0x180] sm:$0xff]
    %v1198 = vld [vmem:[#allocation10 + $0x188] sm:$0xff]
    %v1199 = vld [vmem:[#allocation10 + $0x190] sm:$0xff]
    %v1200 = vld [vmem:[#allocation10 + $0x198] sm:$0xff]
    %v1201 = vld [vmem:[#allocation10 + $0x1a0] sm:$0xff]
    %v1202 = vld [vmem:[#allocation10 + $0x1a8] sm:$0xff]
    %v1203 = vld [vmem:[#allocation10 + $0x1b0] sm:$0xff]
    %v1204 = vld [vmem:[#allocation10 + $0x1b8] sm:$0xff]
    %v1205 = vld [vmem:[#allocation10 + $0x1c0] sm:$0xff]
    %v1206 = vld [vmem:[#allocation10 + $0x1c8] sm:$0xff]
    %v1207 = vld [vmem:[#allocation10 + $0x1d0] sm:$0xff]
    %v1208 = vld [vmem:[#allocation10 + $0x1d8] sm:$0xff]
    %v1209 = vld [vmem:[#allocation10 + $0x1e0] sm:$0xff]
    %v1210 = vld [vmem:[#allocation10 + $0x1e8] sm:$0xff]
    %v1211 = vld [vmem:[#allocation10 + $0x1f0] sm:$0xff]
    %v1212 = vld [vmem:[#allocation10 + $0x1f8] sm:$0xff]
    %v1213 = vld [vmem:[#allocation10 + $0x200] sm:$0xff]
    %v1214 = vld [vmem:[#allocation10 + $0x208] sm:$0xff]
    %v1215 = vld [vmem:[#allocation10 + $0x210] sm:$0xff]
    %v1216 = vld [vmem:[#allocation10 + $0x218] sm:$0xff]
    %v1217 = vld [vmem:[#allocation10 + $0x220] sm:$0xff]
    %v1218 = vld [vmem:[#allocation10 + $0x228] sm:$0xff]
    %v1219 = vld [vmem:[#allocation10 + $0x230] sm:$0xff]
    %v1220 = vld [vmem:[#allocation10 + $0x238] sm:$0xff]
    %v1221 = vld [vmem:[#allocation10 + $0x240] sm:$0xff]
    %v1222 = vld [vmem:[#allocation10 + $0x248] sm:$0xff]
    %v1223 = vld [vmem:[#allocation10 + $0x250] sm:$0xff]
    %v1224 = vld [vmem:[#allocation10 + $0x258] sm:$0xff]
    %v1225 = vld [vmem:[#allocation10 + $0x260] sm:$0xff]
    %v1226 = vld [vmem:[#allocation10 + $0x268] sm:$0xff]
    %v1227 = vld [vmem:[#allocation10 + $0x270] sm:$0xff]
    %v1228 = vld [vmem:[#allocation10 + $0x278] sm:$0xff]
    %v1229 = vld [vmem:[#allocation10 + $0x280] sm:$0xff]
    %v1230 = vld [vmem:[#allocation10 + $0x288] sm:$0xff]
    %v1231 = vld [vmem:[#allocation10 + $0x290] sm:$0xff]
    %v1232 = vld [vmem:[#allocation10 + $0x298] sm:$0xff]
    %v1233 = vld [vmem:[#allocation10 + $0x2a0] sm:$0xff]
    %v1234 = vld [vmem:[#allocation10 + $0x2a8] sm:$0xff]
    %v1235 = vld [vmem:[#allocation10 + $0x2b0] sm:$0xff]
    %v1236 = vld [vmem:[#allocation10 + $0x2b8] sm:$0xff]
    %v1237 = vld [vmem:[#allocation10 + $0x2c0] sm:$0xff]
    %v1238 = vld [vmem:[#allocation10 + $0x2c8] sm:$0xff]
    %v1239 = vld [vmem:[#allocation10 + $0x2d0] sm:$0xff]
    %v1240 = vld [vmem:[#allocation10 + $0x2d8] sm:$0xff]
    %v1241 = vld [vmem:[#allocation10 + $0x2e0] sm:$0xff]
    %v1242 = vld [vmem:[#allocation10 + $0x2e8] sm:$0xff]
    %v1243 = vld [vmem:[#allocation10 + $0x2f0] sm:$0xff]
    %v1244 = vld [vmem:[#allocation10 + $0x2f8] sm:$0xff]
    %v1245 = vld [vmem:[#allocation10 + $0x300] sm:$0xff]
    %v1246 = vld [vmem:[#allocation10 + $0x308] sm:$0xff]
    %v1247 = vld [vmem:[#allocation10 + $0x310] sm:$0xff]
    %v1248 = vld [vmem:[#allocation10 + $0x318] sm:$0xff]
    %v1249 = vld [vmem:[#allocation10 + $0x320] sm:$0xff]
    %v1250 = vld [vmem:[#allocation10 + $0x328] sm:$0xff]
    %v1251 = vld [vmem:[#allocation10 + $0x330] sm:$0xff]
    %v1252 = vld [vmem:[#allocation10 + $0x338] sm:$0xff]
    %v1253 = vld [vmem:[#allocation10 + $0x340] sm:$0xff]
    %v1254 = vld [vmem:[#allocation10 + $0x348] sm:$0xff]
    %v1255 = vld [vmem:[#allocation10 + $0x350] sm:$0xff]
    %v1256 = vld [vmem:[#allocation10 + $0x358] sm:$0xff]
    %v1257 = vld [vmem:[#allocation10 + $0x360] sm:$0xff]
    %v1258 = vld [vmem:[#allocation10 + $0x368] sm:$0xff]
    %v1259 = vld [vmem:[#allocation10 + $0x370] sm:$0xff]
    %v1260 = vld [vmem:[#allocation10 + $0x378] sm:$0xff]
    %v1261 = vld [vmem:[#allocation10 + $0x380] sm:$0xff]
    %v1262 = vld [vmem:[#allocation10 + $0x388] sm:$0xff]
    %v1263 = vld [vmem:[#allocation10 + $0x390] sm:$0xff]
    %v1264 = vld [vmem:[#allocation10 + $0x398] sm:$0xff]
    %v1265 = vld [vmem:[#allocation10 + $0x3a0] sm:$0xff]
    %v1266 = vld [vmem:[#allocation10 + $0x3a8] sm:$0xff]
    %v1267 = vld [vmem:[#allocation10 + $0x3b0] sm:$0xff]
    %v1268 = vld [vmem:[#allocation10 + $0x3b8] sm:$0xff]
    %v1269 = vld [vmem:[#allocation10 + $0x3c0] sm:$0xff]
    %v1270 = vld [vmem:[#allocation10 + $0x3c8] sm:$0xff]
    %v1271 = vld [vmem:[#allocation10 + $0x3d0] sm:$0xff]
    %v1272 = vld [vmem:[#allocation10 + $0x3d8] sm:$0xff]
    %v1273 = vld [vmem:[#allocation10 + $0x3e0] sm:$0xff]
    %v1274 = vld [vmem:[#allocation10 + $0x3e8] sm:$0xff]
    %v1275 = vld [vmem:[#allocation10 + $0x3f0] sm:$0xff]
    %v1276 = vld [vmem:[#allocation10 + $0x3f8] sm:$0xff]
    %v1277 = vld [vmem:[#allocation10 + $0x400] sm:$0xff]
    %v1278 = vld [vmem:[#allocation10 + $0x408] sm:$0xff]
    %v1279 = vld [vmem:[#allocation10 + $0x410] sm:$0xff]
    %v1280 = vld [vmem:[#allocation10 + $0x418] sm:$0xff]
    %v1281 = vld [vmem:[#allocation10 + $0x420] sm:$0xff]
    %v1282 = vld [vmem:[#allocation10 + $0x428] sm:$0xff]
    %v1283 = vld [vmem:[#allocation10 + $0x430] sm:$0xff]
    %v1284 = vld [vmem:[#allocation10 + $0x438] sm:$0xff]
    %v1285 = vld [vmem:[#allocation10 + $0x440] sm:$0xff]
    %v1286 = vld [vmem:[#allocation10 + $0x448] sm:$0xff]
    %v1287 = vld [vmem:[#allocation10 + $0x450] sm:$0xff]
    %v1288 = vld [vmem:[#allocation10 + $0x458] sm:$0xff]
    %v1289 = vld [vmem:[#allocation10 + $0x460] sm:$0xff]
    %v1290 = vld [vmem:[#allocation10 + $0x468] sm:$0xff]
    %v1291 = vld [vmem:[#allocation10 + $0x470] sm:$0xff]
    %v1292 = vld [vmem:[#allocation10 + $0x478] sm:$0xff]
    %v1293 = vld [vmem:[#allocation10 + $0x480] sm:$0xff]
    %v1294 = vld [vmem:[#allocation10 + $0x488] sm:$0xff]
    %v1295 = vld [vmem:[#allocation10 + $0x490] sm:$0xff]
    %v1296 = vld [vmem:[#allocation10 + $0x498] sm:$0xff]
    %v1297 = vld [vmem:[#allocation10 + $0x4a0] sm:$0xff]
    %v1298 = vld [vmem:[#allocation10 + $0x4a8] sm:$0xff]
    %v1299 = vld [vmem:[#allocation10 + $0x4b0] sm:$0xff]
    %v1300 = vld [vmem:[#allocation10 + $0x4b8] sm:$0xff]
    %v1301 = vld [vmem:[#allocation10 + $0x4c0] sm:$0xff]
    %v1302 = vld [vmem:[#allocation10 + $0x4c8] sm:$0xff]
    %v1303 = vld [vmem:[#allocation10 + $0x4d0] sm:$0xff]
    %v1304 = vld [vmem:[#allocation10 + $0x4d8] sm:$0xff]
    %v1305 = vld [vmem:[#allocation10 + $0x4e0] sm:$0xff]
    %v1306 = vld [vmem:[#allocation10 + $0x4e8] sm:$0xff]
    %v1307 = vld [vmem:[#allocation10 + $0x4f0] sm:$0xff]
    %v1308 = vld [vmem:[#allocation10 + $0x4f8] sm:$0xff]
    %v1309 = vld [vmem:[#allocation10 + $0x500] sm:$0xff]
    %v1310 = vld [vmem:[#allocation10 + $0x508] sm:$0xff]
    %v1311 = vld [vmem:[#allocation10 + $0x510] sm:$0xff]
    %v1312 = vld [vmem:[#allocation10 + $0x518] sm:$0xff]
    %v1313 = vld [vmem:[#allocation10 + $0x520] sm:$0xff]
    %v1314 = vld [vmem:[#allocation10 + $0x528] sm:$0xff]
    %v1315 = vld [vmem:[#allocation10 + $0x530] sm:$0xff]
    %v1316 = vld [vmem:[#allocation10 + $0x538] sm:$0xff]
    %v1317 = vld [vmem:[#allocation10 + $0x540] sm:$0xff]
    %v1318 = vld [vmem:[#allocation10 + $0x548] sm:$0xff]
    %v1319 = vld [vmem:[#allocation10 + $0x550] sm:$0xff]
    %v1320 = vld [vmem:[#allocation10 + $0x558] sm:$0xff]
    %v1321 = vld [vmem:[#allocation10 + $0x560] sm:$0xff]
    %v1322 = vld [vmem:[#allocation10 + $0x568] sm:$0xff]
    %v1323 = vld [vmem:[#allocation10 + $0x570] sm:$0xff]
    %v1324 = vld [vmem:[#allocation10 + $0x578] sm:$0xff]
    %v1325 = vld [vmem:[#allocation10 + $0x580] sm:$0xff]
    %v1326 = vld [vmem:[#allocation10 + $0x588] sm:$0xff]
    %v1327 = vld [vmem:[#allocation10 + $0x590] sm:$0xff]
    %v1328 = vld [vmem:[#allocation10 + $0x598] sm:$0xff]
    %v1329 = vld [vmem:[#allocation10 + $0x5a0] sm:$0xff]
    %v1330 = vld [vmem:[#allocation10 + $0x5a8] sm:$0xff]
    %v1331 = vld [vmem:[#allocation10 + $0x5b0] sm:$0xff]
    %v1332 = vld [vmem:[#allocation10 + $0x5b8] sm:$0xff]
    %v1333 = vld [vmem:[#allocation10 + $0x5c0] sm:$0xff]
    %v1334 = vld [vmem:[#allocation10 + $0x5c8] sm:$0xff]
    %v1335 = vld [vmem:[#allocation10 + $0x5d0] sm:$0xff]
    %v1336 = vld [vmem:[#allocation10 + $0x5d8] sm:$0xff]
    %v1337 = vld [vmem:[#allocation10 + $0x5e0] sm:$0xff]
    %v1338 = vld [vmem:[#allocation10 + $0x5e8] sm:$0xff]
    %v1339 = vld [vmem:[#allocation10 + $0x5f0] sm:$0xff]
    %v1340 = vld [vmem:[#allocation10 + $0x5f8] sm:$0xff]
    %v1341 = vld [vmem:[#allocation10 + $0x600] sm:$0xff]
    %v1342 = vld [vmem:[#allocation10 + $0x608] sm:$0xff]
    %v1343 = vld [vmem:[#allocation10 + $0x610] sm:$0xff]
    %v1344 = vld [vmem:[#allocation10 + $0x618] sm:$0xff]
    %v1345 = vld [vmem:[#allocation10 + $0x620] sm:$0xff]
    %v1346 = vld [vmem:[#allocation10 + $0x628] sm:$0xff]
    %v1347 = vld [vmem:[#allocation10 + $0x630] sm:$0xff]
    %v1348 = vld [vmem:[#allocation10 + $0x638] sm:$0xff]
    %v1349 = vld [vmem:[#allocation10 + $0x640] sm:$0xff]
    %v1350 = vld [vmem:[#allocation10 + $0x648] sm:$0xff]
    %v1351 = vld [vmem:[#allocation10 + $0x650] sm:$0xff]
    %v1352 = vld [vmem:[#allocation10 + $0x658] sm:$0xff]
    %v1353 = vld [vmem:[#allocation10 + $0x660] sm:$0xff]
    %v1354 = vld [vmem:[#allocation10 + $0x668] sm:$0xff]
    %v1355 = vld [vmem:[#allocation10 + $0x670] sm:$0xff]
    %v1356 = vld [vmem:[#allocation10 + $0x678] sm:$0xff]
    %v1357 = vld [vmem:[#allocation10 + $0x680] sm:$0xff]
    %v1358 = vld [vmem:[#allocation10 + $0x688] sm:$0xff]
    %v1359 = vld [vmem:[#allocation10 + $0x690] sm:$0xff]
    %v1360 = vld [vmem:[#allocation10 + $0x698] sm:$0xff]
    %v1361 = vld [vmem:[#allocation10 + $0x6a0] sm:$0xff]
    %v1362 = vld [vmem:[#allocation10 + $0x6a8] sm:$0xff]
    %v1363 = vld [vmem:[#allocation10 + $0x6b0] sm:$0xff]
    %v1364 = vld [vmem:[#allocation10 + $0x6b8] sm:$0xff]
    %v1365 = vld [vmem:[#allocation10 + $0x6c0] sm:$0xff]
    %v1366 = vld [vmem:[#allocation10 + $0x6c8] sm:$0xff]
    %v1367 = vld [vmem:[#allocation10 + $0x6d0] sm:$0xff]
    %v1368 = vld [vmem:[#allocation10 + $0x6d8] sm:$0xff]
    %v1369 = vld [vmem:[#allocation10 + $0x6e0] sm:$0xff]
    %v1370 = vld [vmem:[#allocation10 + $0x6e8] sm:$0xff]
    %v1371 = vld [vmem:[#allocation10 + $0x6f0] sm:$0xff]
    %v1372 = vld [vmem:[#allocation10 + $0x6f8] sm:$0xff]
    %v1373 = vld [vmem:[#allocation10 + $0x700] sm:$0xff]
    %v1374 = vld [vmem:[#allocation10 + $0x708] sm:$0xff]
    %v1375 = vld [vmem:[#allocation10 + $0x710] sm:$0xff]
    %v1376 = vld [vmem:[#allocation10 + $0x718] sm:$0xff]
    %v1377 = vld [vmem:[#allocation10 + $0x720] sm:$0xff]
    %v1378 = vld [vmem:[#allocation10 + $0x728] sm:$0xff]
    %v1379 = vld [vmem:[#allocation10 + $0x730] sm:$0xff]
    %v1380 = vld [vmem:[#allocation10 + $0x738] sm:$0xff]
    %v1381 = vld [vmem:[#allocation10 + $0x740] sm:$0xff]
    %v1382 = vld [vmem:[#allocation10 + $0x748] sm:$0xff]
    %v1383 = vld [vmem:[#allocation10 + $0x750] sm:$0xff]
    %v1384 = vld [vmem:[#allocation10 + $0x758] sm:$0xff]
    %v1385 = vld [vmem:[#allocation10 + $0x760] sm:$0xff]
    %v1386 = vld [vmem:[#allocation10 + $0x768] sm:$0xff]
    %v1387 = vld [vmem:[#allocation10 + $0x770] sm:$0xff]
    %v1388 = vld [vmem:[#allocation10 + $0x778] sm:$0xff]
    %v1389 = vld [vmem:[#allocation10 + $0x780] sm:$0xff]
    %v1390 = vld [vmem:[#allocation10 + $0x788] sm:$0xff]
    %v1391 = vld [vmem:[#allocation10 + $0x790] sm:$0xff]
    %v1392 = vld [vmem:[#allocation10 + $0x798] sm:$0xff]
    %v1393 = vld [vmem:[#allocation10 + $0x7a0] sm:$0xff]
    %v1394 = vld [vmem:[#allocation10 + $0x7a8] sm:$0xff]
    %v1395 = vld [vmem:[#allocation10 + $0x7b0] sm:$0xff]
    %v1396 = vld [vmem:[#allocation10 + $0x7b8] sm:$0xff]
    %v1397 = vld [vmem:[#allocation10 + $0x7c0] sm:$0xff]
    %v1398 = vld [vmem:[#allocation10 + $0x7c8] sm:$0xff]
    %v1399 = vld [vmem:[#allocation10 + $0x7d0] sm:$0xff]
    %v1400 = vld [vmem:[#allocation10 + $0x7d8] sm:$0xff]
    %v1401 = vld [vmem:[#allocation10 + $0x7e0] sm:$0xff]
    %v1402 = vld [vmem:[#allocation10 + $0x7e8] sm:$0xff]
    %v1403 = vld [vmem:[#allocation10 + $0x7f0] sm:$0xff]
    %v1404 = vld [vmem:[#allocation10 + $0x7f8] sm:$0xff]
    %v1661 = vunpack.c.l.b16 %v1149
    %v1662 = vunpack.c.h.b16 %v1149
    %v1663 = vunpack.c.l.b16 %v1150
    %v1664 = vunpack.c.h.b16 %v1150
    %v1665 = vunpack.c.l.b16 %v1151
    %v1666 = vunpack.c.h.b16 %v1151
    %v1667 = vunpack.c.l.b16 %v1152
    %v1668 = vunpack.c.h.b16 %v1152
    %v1669 = vunpack.c.l.b16 %v1153
    %v1670 = vunpack.c.h.b16 %v1153
    %v1671 = vunpack.c.l.b16 %v1154
    %v1672 = vunpack.c.h.b16 %v1154
    %v1673 = vunpack.c.l.b16 %v1155
    %v1674 = vunpack.c.h.b16 %v1155
    %v1675 = vunpack.c.l.b16 %v1156
    %v1676 = vunpack.c.h.b16 %v1156
    %v1677 = vunpack.c.l.b16 %v1157
    %v1678 = vunpack.c.h.b16 %v1157
    %v1679 = vunpack.c.l.b16 %v1158
    %v1680 = vunpack.c.h.b16 %v1158
    %v1681 = vunpack.c.l.b16 %v1159
    %v1682 = vunpack.c.h.b16 %v1159
    %v1683 = vunpack.c.l.b16 %v1160
    %v1684 = vunpack.c.h.b16 %v1160
    %v1685 = vunpack.c.l.b16 %v1161
    %v1686 = vunpack.c.h.b16 %v1161
    %v1687 = vunpack.c.l.b16 %v1162
    %v1688 = vunpack.c.h.b16 %v1162
    %v1689 = vunpack.c.l.b16 %v1163
    %v1690 = vunpack.c.h.b16 %v1163
    %v1691 = vunpack.c.l.b16 %v1164
    %v1692 = vunpack.c.h.b16 %v1164
    %v1693 = vunpack.c.l.b16 %v1165
    %v1694 = vunpack.c.h.b16 %v1165
    %v1695 = vunpack.c.l.b16 %v1166
    %v1696 = vunpack.c.h.b16 %v1166
    %v1697 = vunpack.c.l.b16 %v1167
    %v1698 = vunpack.c.h.b16 %v1167
    %v1699 = vunpack.c.l.b16 %v1168
    %v1700 = vunpack.c.h.b16 %v1168
    %v1701 = vunpack.c.l.b16 %v1169
    %v1702 = vunpack.c.h.b16 %v1169
    %v1703 = vunpack.c.l.b16 %v1170
    %v1704 = vunpack.c.h.b16 %v1170
    %v1705 = vunpack.c.l.b16 %v1171
    %v1706 = vunpack.c.h.b16 %v1171
    %v1707 = vunpack.c.l.b16 %v1172
    %v1708 = vunpack.c.h.b16 %v1172
    %v1709 = vunpack.c.l.b16 %v1173
    %v1710 = vunpack.c.h.b16 %v1173
    %v1711 = vunpack.c.l.b16 %v1174
    %v1712 = vunpack.c.h.b16 %v1174
    %v1713 = vunpack.c.l.b16 %v1175
    %v1714 = vunpack.c.h.b16 %v1175
    %v1715 = vunpack.c.l.b16 %v1176
    %v1716 = vunpack.c.h.b16 %v1176
    %v1717 = vunpack.c.l.b16 %v1177
    %v1718 = vunpack.c.h.b16 %v1177
    %v1719 = vunpack.c.l.b16 %v1178
    %v1720 = vunpack.c.h.b16 %v1178
    %v1721 = vunpack.c.l.b16 %v1179
    %v1722 = vunpack.c.h.b16 %v1179
    %v1723 = vunpack.c.l.b16 %v1180
    %v1724 = vunpack.c.h.b16 %v1180
    %v1725 = vunpack.c.l.b16 %v1181
    %v1726 = vunpack.c.h.b16 %v1181
    %v1727 = vunpack.c.l.b16 %v1182
    %v1728 = vunpack.c.h.b16 %v1182
    %v1729 = vunpack.c.l.b16 %v1183
    %v1730 = vunpack.c.h.b16 %v1183
    %v1731 = vunpack.c.l.b16 %v1184
    %v1732 = vunpack.c.h.b16 %v1184
    %v1733 = vunpack.c.l.b16 %v1185
    %v1734 = vunpack.c.h.b16 %v1185
    %v1735 = vunpack.c.l.b16 %v1186
    %v1736 = vunpack.c.h.b16 %v1186
    %v1737 = vunpack.c.l.b16 %v1187
    %v1738 = vunpack.c.h.b16 %v1187
    %v1739 = vunpack.c.l.b16 %v1188
    %v1740 = vunpack.c.h.b16 %v1188
    %v1741 = vunpack.c.l.b16 %v1189
    %v1742 = vunpack.c.h.b16 %v1189
    %v1743 = vunpack.c.l.b16 %v1190
    %v1744 = vunpack.c.h.b16 %v1190
    %v1745 = vunpack.c.l.b16 %v1191
    %v1746 = vunpack.c.h.b16 %v1191
    %v1747 = vunpack.c.l.b16 %v1192
    %v1748 = vunpack.c.h.b16 %v1192
    %v1749 = vunpack.c.l.b16 %v1193
    %v1750 = vunpack.c.h.b16 %v1193
    %v1751 = vunpack.c.l.b16 %v1194
    %v1752 = vunpack.c.h.b16 %v1194
    %v1753 = vunpack.c.l.b16 %v1195
    %v1754 = vunpack.c.h.b16 %v1195
    %v1755 = vunpack.c.l.b16 %v1196
    %v1756 = vunpack.c.h.b16 %v1196
    %v1757 = vunpack.c.l.b16 %v1197
    %v1758 = vunpack.c.h.b16 %v1197
    %v1759 = vunpack.c.l.b16 %v1198
    %v1760 = vunpack.c.h.b16 %v1198
    %v1761 = vunpack.c.l.b16 %v1199
    %v1762 = vunpack.c.h.b16 %v1199
    %v1763 = vunpack.c.l.b16 %v1200
    %v1764 = vunpack.c.h.b16 %v1200
    %v1765 = vunpack.c.l.b16 %v1201
    %v1766 = vunpack.c.h.b16 %v1201
    %v1767 = vunpack.c.l.b16 %v1202
    %v1768 = vunpack.c.h.b16 %v1202
    %v1769 = vunpack.c.l.b16 %v1203
    %v1770 = vunpack.c.h.b16 %v1203
    %v1771 = vunpack.c.l.b16 %v1204
    %v1772 = vunpack.c.h.b16 %v1204
    %v1773 = vunpack.c.l.b16 %v1205
    %v1774 = vunpack.c.h.b16 %v1205
    %v1775 = vunpack.c.l.b16 %v1206
    %v1776 = vunpack.c.h.b16 %v1206
    %v1777 = vunpack.c.l.b16 %v1207
    %v1778 = vunpack.c.h.b16 %v1207
    %v1779 = vunpack.c.l.b16 %v1208
    %v1780 = vunpack.c.h.b16 %v1208
    %v1781 = vunpack.c.l.b16 %v1209
    %v1782 = vunpack.c.h.b16 %v1209
    %v1783 = vunpack.c.l.b16 %v1210
    %v1784 = vunpack.c.h.b16 %v1210
    %v1785 = vunpack.c.l.b16 %v1211
    %v1786 = vunpack.c.h.b16 %v1211
    %v1787 = vunpack.c.l.b16 %v1212
    %v1788 = vunpack.c.h.b16 %v1212
    %v1789 = vunpack.c.l.b16 %v1213
    %v1790 = vunpack.c.h.b16 %v1213
    %v1791 = vunpack.c.l.b16 %v1214
    %v1792 = vunpack.c.h.b16 %v1214
    %v1793 = vunpack.c.l.b16 %v1215
    %v1794 = vunpack.c.h.b16 %v1215
    %v1795 = vunpack.c.l.b16 %v1216
    %v1796 = vunpack.c.h.b16 %v1216
    %v1797 = vunpack.c.l.b16 %v1217
    %v1798 = vunpack.c.h.b16 %v1217
    %v1799 = vunpack.c.l.b16 %v1218
    %v1800 = vunpack.c.h.b16 %v1218
    %v1801 = vunpack.c.l.b16 %v1219
    %v1802 = vunpack.c.h.b16 %v1219
    %v1803 = vunpack.c.l.b16 %v1220
    %v1804 = vunpack.c.h.b16 %v1220
    %v1805 = vunpack.c.l.b16 %v1221
    %v1806 = vunpack.c.h.b16 %v1221
    %v1807 = vunpack.c.l.b16 %v1222
    %v1808 = vunpack.c.h.b16 %v1222
    %v1809 = vunpack.c.l.b16 %v1223
    %v1810 = vunpack.c.h.b16 %v1223
    %v1811 = vunpack.c.l.b16 %v1224
    %v1812 = vunpack.c.h.b16 %v1224
    %v1813 = vunpack.c.l.b16 %v1225
    %v1814 = vunpack.c.h.b16 %v1225
    %v1815 = vunpack.c.l.b16 %v1226
    %v1816 = vunpack.c.h.b16 %v1226
    %v1817 = vunpack.c.l.b16 %v1227
    %v1818 = vunpack.c.h.b16 %v1227
    %v1819 = vunpack.c.l.b16 %v1228
    %v1820 = vunpack.c.h.b16 %v1228
    %v1821 = vunpack.c.l.b16 %v1229
    %v1822 = vunpack.c.h.b16 %v1229
    %v1823 = vunpack.c.l.b16 %v1230
    %v1824 = vunpack.c.h.b16 %v1230
    %v1825 = vunpack.c.l.b16 %v1231
    %v1826 = vunpack.c.h.b16 %v1231
    %v1827 = vunpack.c.l.b16 %v1232
    %v1828 = vunpack.c.h.b16 %v1232
    %v1829 = vunpack.c.l.b16 %v1233
    %v1830 = vunpack.c.h.b16 %v1233
    %v1831 = vunpack.c.l.b16 %v1234
    %v1832 = vunpack.c.h.b16 %v1234
    %v1833 = vunpack.c.l.b16 %v1235
    %v1834 = vunpack.c.h.b16 %v1235
    %v1835 = vunpack.c.l.b16 %v1236
    %v1836 = vunpack.c.h.b16 %v1236
    %v1837 = vunpack.c.l.b16 %v1237
    %v1838 = vunpack.c.h.b16 %v1237
    %v1839 = vunpack.c.l.b16 %v1238
    %v1840 = vunpack.c.h.b16 %v1238
    %v1841 = vunpack.c.l.b16 %v1239
    %v1842 = vunpack.c.h.b16 %v1239
    %v1843 = vunpack.c.l.b16 %v1240
    %v1844 = vunpack.c.h.b16 %v1240
    %v1845 = vunpack.c.l.b16 %v1241
    %v1846 = vunpack.c.h.b16 %v1241
    %v1847 = vunpack.c.l.b16 %v1242
    %v1848 = vunpack.c.h.b16 %v1242
    %v1849 = vunpack.c.l.b16 %v1243
    %v1850 = vunpack.c.h.b16 %v1243
    %v1851 = vunpack.c.l.b16 %v1244
    %v1852 = vunpack.c.h.b16 %v1244
    %v1853 = vunpack.c.l.b16 %v1245
    %v1854 = vunpack.c.h.b16 %v1245
    %v1855 = vunpack.c.l.b16 %v1246
    %v1856 = vunpack.c.h.b16 %v1246
    %v1857 = vunpack.c.l.b16 %v1247
    %v1858 = vunpack.c.h.b16 %v1247
    %v1859 = vunpack.c.l.b16 %v1248
    %v1860 = vunpack.c.h.b16 %v1248
    %v1861 = vunpack.c.l.b16 %v1249
    %v1862 = vunpack.c.h.b16 %v1249
    %v1863 = vunpack.c.l.b16 %v1250
    %v1864 = vunpack.c.h.b16 %v1250
    %v1865 = vunpack.c.l.b16 %v1251
    %v1866 = vunpack.c.h.b16 %v1251
    %v1867 = vunpack.c.l.b16 %v1252
    %v1868 = vunpack.c.h.b16 %v1252
    %v1869 = vunpack.c.l.b16 %v1253
    %v1870 = vunpack.c.h.b16 %v1253
    %v1871 = vunpack.c.l.b16 %v1254
    %v1872 = vunpack.c.h.b16 %v1254
    %v1873 = vunpack.c.l.b16 %v1255
    %v1874 = vunpack.c.h.b16 %v1255
    %v1875 = vunpack.c.l.b16 %v1256
    %v1876 = vunpack.c.h.b16 %v1256
    %v1877 = vunpack.c.l.b16 %v1257
    %v1878 = vunpack.c.h.b16 %v1257
    %v1879 = vunpack.c.l.b16 %v1258
    %v1880 = vunpack.c.h.b16 %v1258
    %v1881 = vunpack.c.l.b16 %v1259
    %v1882 = vunpack.c.h.b16 %v1259
    %v1883 = vunpack.c.l.b16 %v1260
    %v1884 = vunpack.c.h.b16 %v1260
    %v1885 = vunpack.c.l.b16 %v1261
    %v1886 = vunpack.c.h.b16 %v1261
    %v1887 = vunpack.c.l.b16 %v1262
    %v1888 = vunpack.c.h.b16 %v1262
    %v1889 = vunpack.c.l.b16 %v1263
    %v1890 = vunpack.c.h.b16 %v1263
    %v1891 = vunpack.c.l.b16 %v1264
    %v1892 = vunpack.c.h.b16 %v1264
    %v1893 = vunpack.c.l.b16 %v1265
    %v1894 = vunpack.c.h.b16 %v1265
    %v1895 = vunpack.c.l.b16 %v1266
    %v1896 = vunpack.c.h.b16 %v1266
    %v1897 = vunpack.c.l.b16 %v1267
    %v1898 = vunpack.c.h.b16 %v1267
    %v1899 = vunpack.c.l.b16 %v1268
    %v1900 = vunpack.c.h.b16 %v1268
    %v1901 = vunpack.c.l.b16 %v1269
    %v1902 = vunpack.c.h.b16 %v1269
    %v1903 = vunpack.c.l.b16 %v1270
    %v1904 = vunpack.c.h.b16 %v1270
    %v1905 = vunpack.c.l.b16 %v1271
    %v1906 = vunpack.c.h.b16 %v1271
    %v1907 = vunpack.c.l.b16 %v1272
    %v1908 = vunpack.c.h.b16 %v1272
    %v1909 = vunpack.c.l.b16 %v1273
    %v1910 = vunpack.c.h.b16 %v1273
    %v1911 = vunpack.c.l.b16 %v1274
    %v1912 = vunpack.c.h.b16 %v1274
    %v1913 = vunpack.c.l.b16 %v1275
    %v1914 = vunpack.c.h.b16 %v1275
    %v1915 = vunpack.c.l.b16 %v1276
    %v1916 = vunpack.c.h.b16 %v1276
    %v1917 = vunpack.c.l.b16 %v1277
    %v1918 = vunpack.c.h.b16 %v1277
    %v1919 = vunpack.c.l.b16 %v1278
    %v1920 = vunpack.c.h.b16 %v1278
    %v1921 = vunpack.c.l.b16 %v1279
    %v1922 = vunpack.c.h.b16 %v1279
    %v1923 = vunpack.c.l.b16 %v1280
    %v1924 = vunpack.c.h.b16 %v1280
    %v1925 = vunpack.c.l.b16 %v1281
    %v1926 = vunpack.c.h.b16 %v1281
    %v1927 = vunpack.c.l.b16 %v1282
    %v1928 = vunpack.c.h.b16 %v1282
    %v1929 = vunpack.c.l.b16 %v1283
    %v1930 = vunpack.c.h.b16 %v1283
    %v1931 = vunpack.c.l.b16 %v1284
    %v1932 = vunpack.c.h.b16 %v1284
    %v1933 = vunpack.c.l.b16 %v1285
    %v1934 = vunpack.c.h.b16 %v1285
    %v1935 = vunpack.c.l.b16 %v1286
    %v1936 = vunpack.c.h.b16 %v1286
    %v1937 = vunpack.c.l.b16 %v1287
    %v1938 = vunpack.c.h.b16 %v1287
    %v1939 = vunpack.c.l.b16 %v1288
    %v1940 = vunpack.c.h.b16 %v1288
    %v1941 = vunpack.c.l.b16 %v1289
    %v1942 = vunpack.c.h.b16 %v1289
    %v1943 = vunpack.c.l.b16 %v1290
    %v1944 = vunpack.c.h.b16 %v1290
    %v1945 = vunpack.c.l.b16 %v1291
    %v1946 = vunpack.c.h.b16 %v1291
    %v1947 = vunpack.c.l.b16 %v1292
    %v1948 = vunpack.c.h.b16 %v1292
    %v1949 = vunpack.c.l.b16 %v1293
    %v1950 = vunpack.c.h.b16 %v1293
    %v1951 = vunpack.c.l.b16 %v1294
    %v1952 = vunpack.c.h.b16 %v1294
    %v1953 = vunpack.c.l.b16 %v1295
    %v1954 = vunpack.c.h.b16 %v1295
    %v1955 = vunpack.c.l.b16 %v1296
    %v1956 = vunpack.c.h.b16 %v1296
    %v1957 = vunpack.c.l.b16 %v1297
    %v1958 = vunpack.c.h.b16 %v1297
    %v1959 = vunpack.c.l.b16 %v1298
    %v1960 = vunpack.c.h.b16 %v1298
    %v1961 = vunpack.c.l.b16 %v1299
    %v1962 = vunpack.c.h.b16 %v1299
    %v1963 = vunpack.c.l.b16 %v1300
    %v1964 = vunpack.c.h.b16 %v1300
    %v1965 = vunpack.c.l.b16 %v1301
    %v1966 = vunpack.c.h.b16 %v1301
    %v1967 = vunpack.c.l.b16 %v1302
    %v1968 = vunpack.c.h.b16 %v1302
    %v1969 = vunpack.c.l.b16 %v1303
    %v1970 = vunpack.c.h.b16 %v1303
    %v1971 = vunpack.c.l.b16 %v1304
    %v1972 = vunpack.c.h.b16 %v1304
    %v1973 = vunpack.c.l.b16 %v1305
    %v1974 = vunpack.c.h.b16 %v1305
    %v1975 = vunpack.c.l.b16 %v1306
    %v1976 = vunpack.c.h.b16 %v1306
    %v1977 = vunpack.c.l.b16 %v1307
    %v1978 = vunpack.c.h.b16 %v1307
    %v1979 = vunpack.c.l.b16 %v1308
    %v1980 = vunpack.c.h.b16 %v1308
    %v1981 = vunpack.c.l.b16 %v1309
    %v1982 = vunpack.c.h.b16 %v1309
    %v1983 = vunpack.c.l.b16 %v1310
    %v1984 = vunpack.c.h.b16 %v1310
    %v1985 = vunpack.c.l.b16 %v1311
    %v1986 = vunpack.c.h.b16 %v1311
    %v1987 = vunpack.c.l.b16 %v1312
    %v1988 = vunpack.c.h.b16 %v1312
    %v1989 = vunpack.c.l.b16 %v1313
    %v1990 = vunpack.c.h.b16 %v1313
    %v1991 = vunpack.c.l.b16 %v1314
    %v1992 = vunpack.c.h.b16 %v1314
    %v1993 = vunpack.c.l.b16 %v1315
    %v1994 = vunpack.c.h.b16 %v1315
    %v1995 = vunpack.c.l.b16 %v1316
    %v1996 = vunpack.c.h.b16 %v1316
    %v1997 = vunpack.c.l.b16 %v1317
    %v1998 = vunpack.c.h.b16 %v1317
    %v1999 = vunpack.c.l.b16 %v1318
    %v2000 = vunpack.c.h.b16 %v1318
    %v2001 = vunpack.c.l.b16 %v1319
    %v2002 = vunpack.c.h.b16 %v1319
    %v2003 = vunpack.c.l.b16 %v1320
    %v2004 = vunpack.c.h.b16 %v1320
    %v2005 = vunpack.c.l.b16 %v1321
    %v2006 = vunpack.c.h.b16 %v1321
    %v2007 = vunpack.c.l.b16 %v1322
    %v2008 = vunpack.c.h.b16 %v1322
    %v2009 = vunpack.c.l.b16 %v1323
    %v2010 = vunpack.c.h.b16 %v1323
    %v2011 = vunpack.c.l.b16 %v1324
    %v2012 = vunpack.c.h.b16 %v1324
    %v2013 = vunpack.c.l.b16 %v1325
    %v2014 = vunpack.c.h.b16 %v1325
    %v2015 = vunpack.c.l.b16 %v1326
    %v2016 = vunpack.c.h.b16 %v1326
    %v2017 = vunpack.c.l.b16 %v1327
    %v2018 = vunpack.c.h.b16 %v1327
    %v2019 = vunpack.c.l.b16 %v1328
    %v2020 = vunpack.c.h.b16 %v1328
    %v2021 = vunpack.c.l.b16 %v1329
    %v2022 = vunpack.c.h.b16 %v1329
    %v2023 = vunpack.c.l.b16 %v1330
    %v2024 = vunpack.c.h.b16 %v1330
    %v2025 = vunpack.c.l.b16 %v1331
    %v2026 = vunpack.c.h.b16 %v1331
    %v2027 = vunpack.c.l.b16 %v1332
    %v2028 = vunpack.c.h.b16 %v1332
    %v2029 = vunpack.c.l.b16 %v1333
    %v2030 = vunpack.c.h.b16 %v1333
    %v2031 = vunpack.c.l.b16 %v1334
    %v2032 = vunpack.c.h.b16 %v1334
    %v2033 = vunpack.c.l.b16 %v1335
    %v2034 = vunpack.c.h.b16 %v1335
    %v2035 = vunpack.c.l.b16 %v1336
    %v2036 = vunpack.c.h.b16 %v1336
    %v2037 = vunpack.c.l.b16 %v1337
    %v2038 = vunpack.c.h.b16 %v1337
    %v2039 = vunpack.c.l.b16 %v1338
    %v2040 = vunpack.c.h.b16 %v1338
    %v2041 = vunpack.c.l.b16 %v1339
    %v2042 = vunpack.c.h.b16 %v1339
    %v2043 = vunpack.c.l.b16 %v1340
    %v2044 = vunpack.c.h.b16 %v1340
    %v2045 = vunpack.c.l.b16 %v1341
    %v2046 = vunpack.c.h.b16 %v1341
    %v2047 = vunpack.c.l.b16 %v1342
    %v2048 = vunpack.c.h.b16 %v1342
    %v2049 = vunpack.c.l.b16 %v1343
    %v2050 = vunpack.c.h.b16 %v1343
    %v2051 = vunpack.c.l.b16 %v1344
    %v2052 = vunpack.c.h.b16 %v1344
    %v2053 = vunpack.c.l.b16 %v1345
    %v2054 = vunpack.c.h.b16 %v1345
    %v2055 = vunpack.c.l.b16 %v1346
    %v2056 = vunpack.c.h.b16 %v1346
    %v2057 = vunpack.c.l.b16 %v1347
    %v2058 = vunpack.c.h.b16 %v1347
    %v2059 = vunpack.c.l.b16 %v1348
    %v2060 = vunpack.c.h.b16 %v1348
    %v2061 = vunpack.c.l.b16 %v1349
    %v2062 = vunpack.c.h.b16 %v1349
    %v2063 = vunpack.c.l.b16 %v1350
    %v2064 = vunpack.c.h.b16 %v1350
    %v2065 = vunpack.c.l.b16 %v1351
    %v2066 = vunpack.c.h.b16 %v1351
    %v2067 = vunpack.c.l.b16 %v1352
    %v2068 = vunpack.c.h.b16 %v1352
    %v2069 = vunpack.c.l.b16 %v1353
    %v2070 = vunpack.c.h.b16 %v1353
    %v2071 = vunpack.c.l.b16 %v1354
    %v2072 = vunpack.c.h.b16 %v1354
    %v2073 = vunpack.c.l.b16 %v1355
    %v2074 = vunpack.c.h.b16 %v1355
    %v2075 = vunpack.c.l.b16 %v1356
    %v2076 = vunpack.c.h.b16 %v1356
    %v2077 = vunpack.c.l.b16 %v1357
    %v2078 = vunpack.c.h.b16 %v1357
    %v2079 = vunpack.c.l.b16 %v1358
    %v2080 = vunpack.c.h.b16 %v1358
    %v2081 = vunpack.c.l.b16 %v1359
    %v2082 = vunpack.c.h.b16 %v1359
    %v2083 = vunpack.c.l.b16 %v1360
    %v2084 = vunpack.c.h.b16 %v1360
    %v2085 = vunpack.c.l.b16 %v1361
    %v2086 = vunpack.c.h.b16 %v1361
    %v2087 = vunpack.c.l.b16 %v1362
    %v2088 = vunpack.c.h.b16 %v1362
    %v2089 = vunpack.c.l.b16 %v1363
    %v2090 = vunpack.c.h.b16 %v1363
    %v2091 = vunpack.c.l.b16 %v1364
    %v2092 = vunpack.c.h.b16 %v1364
    %v2093 = vunpack.c.l.b16 %v1365
    %v2094 = vunpack.c.h.b16 %v1365
    %v2095 = vunpack.c.l.b16 %v1366
    %v2096 = vunpack.c.h.b16 %v1366
    %v2097 = vunpack.c.l.b16 %v1367
    %v2098 = vunpack.c.h.b16 %v1367
    %v2099 = vunpack.c.l.b16 %v1368
    %v2100 = vunpack.c.h.b16 %v1368
    %v2101 = vunpack.c.l.b16 %v1369
    %v2102 = vunpack.c.h.b16 %v1369
    %v2103 = vunpack.c.l.b16 %v1370
    %v2104 = vunpack.c.h.b16 %v1370
    %v2105 = vunpack.c.l.b16 %v1371
    %v2106 = vunpack.c.h.b16 %v1371
    %v2107 = vunpack.c.l.b16 %v1372
    %v2108 = vunpack.c.h.b16 %v1372
    %v2109 = vunpack.c.l.b16 %v1373
    %v2110 = vunpack.c.h.b16 %v1373
    %v2111 = vunpack.c.l.b16 %v1374
    %v2112 = vunpack.c.h.b16 %v1374
    %v2113 = vunpack.c.l.b16 %v1375
    %v2114 = vunpack.c.h.b16 %v1375
    %v2115 = vunpack.c.l.b16 %v1376
    %v2116 = vunpack.c.h.b16 %v1376
    %v2117 = vunpack.c.l.b16 %v1377
    %v2118 = vunpack.c.h.b16 %v1377
    %v2119 = vunpack.c.l.b16 %v1378
    %v2120 = vunpack.c.h.b16 %v1378
    %v2121 = vunpack.c.l.b16 %v1379
    %v2122 = vunpack.c.h.b16 %v1379
    %v2123 = vunpack.c.l.b16 %v1380
    %v2124 = vunpack.c.h.b16 %v1380
    %v2125 = vunpack.c.l.b16 %v1381
    %v2126 = vunpack.c.h.b16 %v1381
    %v2127 = vunpack.c.l.b16 %v1382
    %v2128 = vunpack.c.h.b16 %v1382
    %v2129 = vunpack.c.l.b16 %v1383
    %v2130 = vunpack.c.h.b16 %v1383
    %v2131 = vunpack.c.l.b16 %v1384
    %v2132 = vunpack.c.h.b16 %v1384
    %v2133 = vunpack.c.l.b16 %v1385
    %v2134 = vunpack.c.h.b16 %v1385
    %v2135 = vunpack.c.l.b16 %v1386
    %v2136 = vunpack.c.h.b16 %v1386
    %v2137 = vunpack.c.l.b16 %v1387
    %v2138 = vunpack.c.h.b16 %v1387
    %v2139 = vunpack.c.l.b16 %v1388
    %v2140 = vunpack.c.h.b16 %v1388
    %v2141 = vunpack.c.l.b16 %v1389
    %v2142 = vunpack.c.h.b16 %v1389
    %v2143 = vunpack.c.l.b16 %v1390
    %v2144 = vunpack.c.h.b16 %v1390
    %v2145 = vunpack.c.l.b16 %v1391
    %v2146 = vunpack.c.h.b16 %v1391
    %v2147 = vunpack.c.l.b16 %v1392
    %v2148 = vunpack.c.h.b16 %v1392
    %v2149 = vunpack.c.l.b16 %v1393
    %v2150 = vunpack.c.h.b16 %v1393
    %v2151 = vunpack.c.l.b16 %v1394
    %v2152 = vunpack.c.h.b16 %v1394
    %v2153 = vunpack.c.l.b16 %v1395
    %v2154 = vunpack.c.h.b16 %v1395
    %v2155 = vunpack.c.l.b16 %v1396
    %v2156 = vunpack.c.h.b16 %v1396
    %v2157 = vunpack.c.l.b16 %v1397
    %v2158 = vunpack.c.h.b16 %v1397
    %v2159 = vunpack.c.l.b16 %v1398
    %v2160 = vunpack.c.h.b16 %v1398
    %v2161 = vunpack.c.l.b16 %v1399
    %v2162 = vunpack.c.h.b16 %v1399
    %v2163 = vunpack.c.l.b16 %v1400
    %v2164 = vunpack.c.h.b16 %v1400
    %v2165 = vunpack.c.l.b16 %v1401
    %v2166 = vunpack.c.h.b16 %v1401
    %v2167 = vunpack.c.l.b16 %v1402
    %v2168 = vunpack.c.h.b16 %v1402
    %v2169 = vunpack.c.l.b16 %v1403
    %v2170 = vunpack.c.h.b16 %v1403
    %v2171 = vunpack.c.l.b16 %v1404
    %v2172 = vunpack.c.h.b16 %v1404
    %v2173 = vpack.c.b16 %v1669, %v1661
    %v2174 = vpack.c.b16 %v1670, %v1662
    %v2175 = vpack.c.b16 %v1671, %v1663
    %v2176 = vpack.c.b16 %v1672, %v1664
    %v2177 = vpack.c.b16 %v1673, %v1665
    %v2178 = vpack.c.b16 %v1674, %v1666
    %v2179 = vpack.c.b16 %v1675, %v1667
    %v2180 = vpack.c.b16 %v1676, %v1668
    %v2181 = vpack.c.b16 %v1685, %v1677
    %v2182 = vpack.c.b16 %v1686, %v1678
    %v2183 = vpack.c.b16 %v1687, %v1679
    %v2184 = vpack.c.b16 %v1688, %v1680
    %v2185 = vpack.c.b16 %v1689, %v1681
    %v2186 = vpack.c.b16 %v1690, %v1682
    %v2187 = vpack.c.b16 %v1691, %v1683
    %v2188 = vpack.c.b16 %v1692, %v1684
    %v2189 = vpack.c.b16 %v1701, %v1693
    %v2190 = vpack.c.b16 %v1702, %v1694
    %v2191 = vpack.c.b16 %v1703, %v1695
    %v2192 = vpack.c.b16 %v1704, %v1696
    %v2193 = vpack.c.b16 %v1705, %v1697
    %v2194 = vpack.c.b16 %v1706, %v1698
    %v2195 = vpack.c.b16 %v1707, %v1699
    %v2196 = vpack.c.b16 %v1708, %v1700
    %v2197 = vpack.c.b16 %v1717, %v1709
    %v2198 = vpack.c.b16 %v1718, %v1710
    %v2199 = vpack.c.b16 %v1719, %v1711
    %v2200 = vpack.c.b16 %v1720, %v1712
    %v2201 = vpack.c.b16 %v1721, %v1713
    %v2202 = vpack.c.b16 %v1722, %v1714
    %v2203 = vpack.c.b16 %v1723, %v1715
    %v2204 = vpack.c.b16 %v1724, %v1716
    %v2205 = vpack.c.b16 %v1733, %v1725
    %v2206 = vpack.c.b16 %v1734, %v1726
    %v2207 = vpack.c.b16 %v1735, %v1727
    %v2208 = vpack.c.b16 %v1736, %v1728
    %v2209 = vpack.c.b16 %v1737, %v1729
    %v2210 = vpack.c.b16 %v1738, %v1730
    %v2211 = vpack.c.b16 %v1739, %v1731
    %v2212 = vpack.c.b16 %v1740, %v1732
    %v2213 = vpack.c.b16 %v1749, %v1741
    %v2214 = vpack.c.b16 %v1750, %v1742
    %v2215 = vpack.c.b16 %v1751, %v1743
    %v2216 = vpack.c.b16 %v1752, %v1744
    %v2217 = vpack.c.b16 %v1753, %v1745
    %v2218 = vpack.c.b16 %v1754, %v1746
    %v2219 = vpack.c.b16 %v1755, %v1747
    %v2220 = vpack.c.b16 %v1756, %v1748
    %v2221 = vpack.c.b16 %v1765, %v1757
    %v2222 = vpack.c.b16 %v1766, %v1758
    %v2223 = vpack.c.b16 %v1767, %v1759
    %v2224 = vpack.c.b16 %v1768, %v1760
    %v2225 = vpack.c.b16 %v1769, %v1761
    %v2226 = vpack.c.b16 %v1770, %v1762
    %v2227 = vpack.c.b16 %v1771, %v1763
    %v2228 = vpack.c.b16 %v1772, %v1764
    %v2229 = vpack.c.b16 %v1781, %v1773
    %v2230 = vpack.c.b16 %v1782, %v1774
    %v2231 = vpack.c.b16 %v1783, %v1775
    %v2232 = vpack.c.b16 %v1784, %v1776
    %v2233 = vpack.c.b16 %v1785, %v1777
    %v2234 = vpack.c.b16 %v1786, %v1778
    %v2235 = vpack.c.b16 %v1787, %v1779
    %v2236 = vpack.c.b16 %v1788, %v1780
    %v2237 = vpack.c.b16 %v1797, %v1789
    %v2238 = vpack.c.b16 %v1798, %v1790
    %v2239 = vpack.c.b16 %v1799, %v1791
    %v2240 = vpack.c.b16 %v1800, %v1792
    %v2241 = vpack.c.b16 %v1801, %v1793
    %v2242 = vpack.c.b16 %v1802, %v1794
    %v2243 = vpack.c.b16 %v1803, %v1795
    %v2244 = vpack.c.b16 %v1804, %v1796
    %v2245 = vpack.c.b16 %v1813, %v1805
    %v2246 = vpack.c.b16 %v1814, %v1806
    %v2247 = vpack.c.b16 %v1815, %v1807
    %v2248 = vpack.c.b16 %v1816, %v1808
    %v2249 = vpack.c.b16 %v1817, %v1809
    %v2250 = vpack.c.b16 %v1818, %v1810
    %v2251 = vpack.c.b16 %v1819, %v1811
    %v2252 = vpack.c.b16 %v1820, %v1812
    %v2253 = vpack.c.b16 %v1829, %v1821
    %v2254 = vpack.c.b16 %v1830, %v1822
    %v2255 = vpack.c.b16 %v1831, %v1823
    %v2256 = vpack.c.b16 %v1832, %v1824
    %v2257 = vpack.c.b16 %v1833, %v1825
    %v2258 = vpack.c.b16 %v1834, %v1826
    %v2259 = vpack.c.b16 %v1835, %v1827
    %v2260 = vpack.c.b16 %v1836, %v1828
    %v2261 = vpack.c.b16 %v1845, %v1837
    %v2262 = vpack.c.b16 %v1846, %v1838
    %v2263 = vpack.c.b16 %v1847, %v1839
    %v2264 = vpack.c.b16 %v1848, %v1840
    %v2265 = vpack.c.b16 %v1849, %v1841
    %v2266 = vpack.c.b16 %v1850, %v1842
    %v2267 = vpack.c.b16 %v1851, %v1843
    %v2268 = vpack.c.b16 %v1852, %v1844
    %v2269 = vpack.c.b16 %v1861, %v1853
    %v2270 = vpack.c.b16 %v1862, %v1854
    %v2271 = vpack.c.b16 %v1863, %v1855
    %v2272 = vpack.c.b16 %v1864, %v1856
    %v2273 = vpack.c.b16 %v1865, %v1857
    %v2274 = vpack.c.b16 %v1866, %v1858
    %v2275 = vpack.c.b16 %v1867, %v1859
    %v2276 = vpack.c.b16 %v1868, %v1860
    %v2277 = vpack.c.b16 %v1877, %v1869
    %v2278 = vpack.c.b16 %v1878, %v1870
    %v2279 = vpack.c.b16 %v1879, %v1871
    %v2280 = vpack.c.b16 %v1880, %v1872
    %v2281 = vpack.c.b16 %v1881, %v1873
    %v2282 = vpack.c.b16 %v1882, %v1874
    %v2283 = vpack.c.b16 %v1883, %v1875
    %v2284 = vpack.c.b16 %v1884, %v1876
    %v2285 = vpack.c.b16 %v1893, %v1885
    %v2286 = vpack.c.b16 %v1894, %v1886
    %v2287 = vpack.c.b16 %v1895, %v1887
    %v2288 = vpack.c.b16 %v1896, %v1888
    %v2289 = vpack.c.b16 %v1897, %v1889
    %v2290 = vpack.c.b16 %v1898, %v1890
    %v2291 = vpack.c.b16 %v1899, %v1891
    %v2292 = vpack.c.b16 %v1900, %v1892
    %v2293 = vpack.c.b16 %v1909, %v1901
    %v2294 = vpack.c.b16 %v1910, %v1902
    %v2295 = vpack.c.b16 %v1911, %v1903
    %v2296 = vpack.c.b16 %v1912, %v1904
    %v2297 = vpack.c.b16 %v1913, %v1905
    %v2298 = vpack.c.b16 %v1914, %v1906
    %v2299 = vpack.c.b16 %v1915, %v1907
    %v2300 = vpack.c.b16 %v1916, %v1908
    %v2301 = vpack.c.b16 %v1925, %v1917
    %v2302 = vpack.c.b16 %v1926, %v1918
    %v2303 = vpack.c.b16 %v1927, %v1919
    %v2304 = vpack.c.b16 %v1928, %v1920
    %v2305 = vpack.c.b16 %v1929, %v1921
    %v2306 = vpack.c.b16 %v1930, %v1922
    %v2307 = vpack.c.b16 %v1931, %v1923
    %v2308 = vpack.c.b16 %v1932, %v1924
    %v2309 = vpack.c.b16 %v1941, %v1933
    %v2310 = vpack.c.b16 %v1942, %v1934
    %v2311 = vpack.c.b16 %v1943, %v1935
    %v2312 = vpack.c.b16 %v1944, %v1936
    %v2313 = vpack.c.b16 %v1945, %v1937
    %v2314 = vpack.c.b16 %v1946, %v1938
    %v2315 = vpack.c.b16 %v1947, %v1939
    %v2316 = vpack.c.b16 %v1948, %v1940
    %v2317 = vpack.c.b16 %v1957, %v1949
    %v2318 = vpack.c.b16 %v1958, %v1950
    %v2319 = vpack.c.b16 %v1959, %v1951
    %v2320 = vpack.c.b16 %v1960, %v1952
    %v2321 = vpack.c.b16 %v1961, %v1953
    %v2322 = vpack.c.b16 %v1962, %v1954
    %v2323 = vpack.c.b16 %v1963, %v1955
    %v2324 = vpack.c.b16 %v1964, %v1956
    %v2325 = vpack.c.b16 %v1973, %v1965
    %v2326 = vpack.c.b16 %v1974, %v1966
    %v2327 = vpack.c.b16 %v1975, %v1967
    %v2328 = vpack.c.b16 %v1976, %v1968
    %v2329 = vpack.c.b16 %v1977, %v1969
    %v2330 = vpack.c.b16 %v1978, %v1970
    %v2331 = vpack.c.b16 %v1979, %v1971
    %v2332 = vpack.c.b16 %v1980, %v1972
    %v2333 = vpack.c.b16 %v1989, %v1981
    %v2334 = vpack.c.b16 %v1990, %v1982
    %v2335 = vpack.c.b16 %v1991, %v1983
    %v2336 = vpack.c.b16 %v1992, %v1984
    %v2337 = vpack.c.b16 %v1993, %v1985
    %v2338 = vpack.c.b16 %v1994, %v1986
    %v2339 = vpack.c.b16 %v1995, %v1987
    %v2340 = vpack.c.b16 %v1996, %v1988
    %v2341 = vpack.c.b16 %v2005, %v1997
    %v2342 = vpack.c.b16 %v2006, %v1998
    %v2343 = vpack.c.b16 %v2007, %v1999
    %v2344 = vpack.c.b16 %v2008, %v2000
    %v2345 = vpack.c.b16 %v2009, %v2001
    %v2346 = vpack.c.b16 %v2010, %v2002
    %v2347 = vpack.c.b16 %v2011, %v2003
    %v2348 = vpack.c.b16 %v2012, %v2004
    %v2349 = vpack.c.b16 %v2021, %v2013
    %v2350 = vpack.c.b16 %v2022, %v2014
    %v2351 = vpack.c.b16 %v2023, %v2015
    %v2352 = vpack.c.b16 %v2024, %v2016
    %v2353 = vpack.c.b16 %v2025, %v2017
    %v2354 = vpack.c.b16 %v2026, %v2018
    %v2355 = vpack.c.b16 %v2027, %v2019
    %v2356 = vpack.c.b16 %v2028, %v2020
    %v2357 = vpack.c.b16 %v2037, %v2029
    %v2358 = vpack.c.b16 %v2038, %v2030
    %v2359 = vpack.c.b16 %v2039, %v2031
    %v2360 = vpack.c.b16 %v2040, %v2032
    %v2361 = vpack.c.b16 %v2041, %v2033
    %v2362 = vpack.c.b16 %v2042, %v2034
    %v2363 = vpack.c.b16 %v2043, %v2035
    %v2364 = vpack.c.b16 %v2044, %v2036
    %v2365 = vpack.c.b16 %v2053, %v2045
    %v2366 = vpack.c.b16 %v2054, %v2046
    %v2367 = vpack.c.b16 %v2055, %v2047
    %v2368 = vpack.c.b16 %v2056, %v2048
    %v2369 = vpack.c.b16 %v2057, %v2049
    %v2370 = vpack.c.b16 %v2058, %v2050
    %v2371 = vpack.c.b16 %v2059, %v2051
    %v2372 = vpack.c.b16 %v2060, %v2052
    %v2373 = vpack.c.b16 %v2069, %v2061
    %v2374 = vpack.c.b16 %v2070, %v2062
    %v2375 = vpack.c.b16 %v2071, %v2063
    %v2376 = vpack.c.b16 %v2072, %v2064
    %v2377 = vpack.c.b16 %v2073, %v2065
    %v2378 = vpack.c.b16 %v2074, %v2066
    %v2379 = vpack.c.b16 %v2075, %v2067
    %v2380 = vpack.c.b16 %v2076, %v2068
    %v2381 = vpack.c.b16 %v2085, %v2077
    %v2382 = vpack.c.b16 %v2086, %v2078
    %v2383 = vpack.c.b16 %v2087, %v2079
    %v2384 = vpack.c.b16 %v2088, %v2080
    %v2385 = vpack.c.b16 %v2089, %v2081
    %v2386 = vpack.c.b16 %v2090, %v2082
    %v2387 = vpack.c.b16 %v2091, %v2083
    %v2388 = vpack.c.b16 %v2092, %v2084
    %v2389 = vpack.c.b16 %v2101, %v2093
    %v2390 = vpack.c.b16 %v2102, %v2094
    %v2391 = vpack.c.b16 %v2103, %v2095
    %v2392 = vpack.c.b16 %v2104, %v2096
    %v2393 = vpack.c.b16 %v2105, %v2097
    %v2394 = vpack.c.b16 %v2106, %v2098
    %v2395 = vpack.c.b16 %v2107, %v2099
    %v2396 = vpack.c.b16 %v2108, %v2100
    %v2397 = vpack.c.b16 %v2117, %v2109
    %v2398 = vpack.c.b16 %v2118, %v2110
    %v2399 = vpack.c.b16 %v2119, %v2111
    %v2400 = vpack.c.b16 %v2120, %v2112
    %v2401 = vpack.c.b16 %v2121, %v2113
    %v2402 = vpack.c.b16 %v2122, %v2114
    %v2403 = vpack.c.b16 %v2123, %v2115
    %v2404 = vpack.c.b16 %v2124, %v2116
    %v2405 = vpack.c.b16 %v2133, %v2125
    %v2406 = vpack.c.b16 %v2134, %v2126
    %v2407 = vpack.c.b16 %v2135, %v2127
    %v2408 = vpack.c.b16 %v2136, %v2128
    %v2409 = vpack.c.b16 %v2137, %v2129
    %v2410 = vpack.c.b16 %v2138, %v2130
    %v2411 = vpack.c.b16 %v2139, %v2131
    %v2412 = vpack.c.b16 %v2140, %v2132
    %v2413 = vpack.c.b16 %v2149, %v2141
    %v2414 = vpack.c.b16 %v2150, %v2142
    %v2415 = vpack.c.b16 %v2151, %v2143
    %v2416 = vpack.c.b16 %v2152, %v2144
    %v2417 = vpack.c.b16 %v2153, %v2145
    %v2418 = vpack.c.b16 %v2154, %v2146
    %v2419 = vpack.c.b16 %v2155, %v2147
    %v2420 = vpack.c.b16 %v2156, %v2148
    %v2421 = vpack.c.b16 %v2165, %v2157
    %v2422 = vpack.c.b16 %v2166, %v2158
    %v2423 = vpack.c.b16 %v2167, %v2159
    %v2424 = vpack.c.b16 %v2168, %v2160
    %v2425 = vpack.c.b16 %v2169, %v2161
    %v2426 = vpack.c.b16 %v2170, %v2162
    %v2427 = vpack.c.b16 %v2171, %v2163
    %v2428 = vpack.c.b16 %v2172, %v2164
    %2685 = vmatprep.subr.bf16.mxu0 %v2174
    %2686 = vmatpush1.bf16.msra.mxu0 %v2173
    %2687 = vmatprep.subr.bf16.mxu0 %v2182
    %2688 = vmatpush1.bf16.msra.mxu0 %v2181
    %2689 = vmatprep.subr.bf16.mxu0 %v2190
    %2690 = vmatpush1.bf16.msra.mxu0 %v2189
    %2691 = vmatprep.subr.bf16.mxu0 %v2198
    %2692 = vmatpush1.bf16.msra.mxu0 %v2197
    %2693 = vmatprep.subr.bf16.mxu0 %v2206
    %2694 = vmatpush1.bf16.msra.mxu0 %v2205
    %2695 = vmatprep.subr.bf16.mxu0 %v2214
    %2696 = vmatpush1.bf16.msra.mxu0 %v2213
    %2697 = vmatprep.subr.bf16.mxu0 %v2222
    %2698 = vmatpush1.bf16.msra.mxu0 %v2221
    %2699 = vmatprep.subr.bf16.mxu0 %v2230
    %2700 = vmatpush1.bf16.msra.mxu0 %v2229
    %2701 = vmatprep.subr.bf16.mxu0 %v2238
    %2702 = vmatpush1.bf16.msra.mxu0 %v2237
    %2703 = vmatprep.subr.bf16.mxu0 %v2246
    %2704 = vmatpush1.bf16.msra.mxu0 %v2245
    %2705 = vmatprep.subr.bf16.mxu0 %v2254
    %2706 = vmatpush1.bf16.msra.mxu0 %v2253
    %2707 = vmatprep.subr.bf16.mxu0 %v2262
    %2708 = vmatpush1.bf16.msra.mxu0 %v2261
    %2709 = vmatprep.subr.bf16.mxu0 %v2270
    %2710 = vmatpush1.bf16.msra.mxu0 %v2269
    %2711 = vmatprep.subr.bf16.mxu0 %v2278
    %2712 = vmatpush1.bf16.msra.mxu0 %v2277
    %2713 = vmatprep.subr.bf16.mxu0 %v2286
    %2714 = vmatpush1.bf16.msra.mxu0 %v2285
    %2715 = vmatprep.subr.bf16.mxu0 %v2294
    %2716 = vmatpush1.bf16.msra.mxu0 %v2293
    %2717 = vmatprep.mubr.bf16.mxu0 %v1146
    %2718 = vmatmul.mubr.bf16.gmra.mrb[0].mxu0 %v1145
    %v2719 = vpop.f32.mrb[0].mxu0
    %v2720 = vadd.f32 0.0, %v2719
    %v2721 = vpop.f32.mrb[0].mxu0
    %v2722 = vadd.f32 0.0, %v2721
    %v2723 = vpop.f32.mrb[0].mxu0
    %v2724 = vpop.f32.mrb[0].mxu0
    %2725 = vdwg.mxu0
    %2726 = vmatprep.subr.bf16.mxu0 %v2302
    %2727 = vmatpush1.bf16.msra.mxu0 %v2301
    %2728 = vmatprep.subr.bf16.mxu0 %v2310
    %2729 = vmatpush1.bf16.msra.mxu0 %v2309
    %2730 = vmatprep.subr.bf16.mxu0 %v2318
    %2731 = vmatpush1.bf16.msra.mxu0 %v2317
    %2732 = vmatprep.subr.bf16.mxu0 %v2326
    %2733 = vmatpush1.bf16.msra.mxu0 %v2325
    %2734 = vmatprep.subr.bf16.mxu0 %v2334
    %2735 = vmatpush1.bf16.msra.mxu0 %v2333
    %2736 = vmatprep.subr.bf16.mxu0 %v2342
    %2737 = vmatpush1.bf16.msra.mxu0 %v2341
    %2738 = vmatprep.subr.bf16.mxu0 %v2350
    %2739 = vmatpush1.bf16.msra.mxu0 %v2349
    %2740 = vmatprep.subr.bf16.mxu0 %v2358
    %2741 = vmatpush1.bf16.msra.mxu0 %v2357
    %2742 = vmatprep.subr.bf16.mxu0 %v2366
    %2743 = vmatpush1.bf16.msra.mxu0 %v2365
    %2744 = vmatprep.subr.bf16.mxu0 %v2374
    %2745 = vmatpush1.bf16.msra.mxu0 %v2373
    %2746 = vmatprep.subr.bf16.mxu0 %v2382
    %2747 = vmatpush1.bf16.msra.mxu0 %v2381
    %2748 = vmatprep.subr.bf16.mxu0 %v2390
    %2749 = vmatpush1.bf16.msra.mxu0 %v2389
    %2750 = vmatprep.subr.bf16.mxu0 %v2398
    %2751 = vmatpush1.bf16.msra.mxu0 %v2397
    %2752 = vmatprep.subr.bf16.mxu0 %v2406
    %2753 = vmatpush1.bf16.msra.mxu0 %v2405
    %2754 = vmatprep.subr.bf16.mxu0 %v2414
    %2755 = vmatpush1.bf16.msra.mxu0 %v2413
    %2756 = vmatprep.subr.bf16.mxu0 %v2422
    %2757 = vmatpush1.bf16.msra.mxu0 %v2421
    %2758 = vmatprep.mubr.bf16.mxu0 %v1148
    %2759 = vmatmul.mubr.bf16.gmra.mrb[0].mxu0 %v1147
    %v2760 = vpop.f32.mrb[0].mxu0
    %v2761 = vadd.f32 %v2720, %v2760
    %v2762 = vpop.f32.mrb[0].mxu0
    %v2763 = vadd.f32 %v2722, %v2762
    %v2764 = vpop.f32.mrb[0].mxu0
    %v2765 = vpop.f32.mrb[0].mxu0
    %2766 = vdwg.mxu0
    %2767 = vmatprep.subr.bf16.mxu0 %v2176
    %2768 = vmatpush1.bf16.msra.mxu0 %v2175
    %2769 = vmatprep.subr.bf16.mxu0 %v2184
    %2770 = vmatpush1.bf16.msra.mxu0 %v2183
    %2771 = vmatprep.subr.bf16.mxu0 %v2192
    %2772 = vmatpush1.bf16.msra.mxu0 %v2191
    %2773 = vmatprep.subr.bf16.mxu0 %v2200
    %2774 = vmatpush1.bf16.msra.mxu0 %v2199
    %2775 = vmatprep.subr.bf16.mxu0 %v2208
    %2776 = vmatpush1.bf16.msra.mxu0 %v2207
    %2777 = vmatprep.subr.bf16.mxu0 %v2216
    %2778 = vmatpush1.bf16.msra.mxu0 %v2215
    %2779 = vmatprep.subr.bf16.mxu0 %v2224
    %2780 = vmatpush1.bf16.msra.mxu0 %v2223
    %2781 = vmatprep.subr.bf16.mxu0 %v2232
    %2782 = vmatpush1.bf16.msra.mxu0 %v2231
    %2783 = vmatprep.subr.bf16.mxu0 %v2240
    %2784 = vmatpush1.bf16.msra.mxu0 %v2239
    %2785 = vmatprep.subr.bf16.mxu0 %v2248
    %2786 = vmatpush1.bf16.msra.mxu0 %v2247
    %2787 = vmatprep.subr.bf16.mxu0 %v2256
    %2788 = vmatpush1.bf16.msra.mxu0 %v2255
    %2789 = vmatprep.subr.bf16.mxu0 %v2264
    %2790 = vmatpush1.bf16.msra.mxu0 %v2263
    %2791 = vmatprep.subr.bf16.mxu0 %v2272
    %2792 = vmatpush1.bf16.msra.mxu0 %v2271
    %2793 = vmatprep.subr.bf16.mxu0 %v2280
    %2794 = vmatpush1.bf16.msra.mxu0 %v2279
    %2795 = vmatprep.subr.bf16.mxu0 %v2288
    %2796 = vmatpush1.bf16.msra.mxu0 %v2287
    %2797 = vmatprep.subr.bf16.mxu0 %v2296
    %2798 = vmatpush1.bf16.msra.mxu0 %v2295
    %2799 = vmatprep.mubr.bf16.mxu0 %v1146
    %2800 = vmatmul.mubr.bf16.gmra.mrb[0].mxu0 %v1145
    %v2801 = vpop.f32.mrb[0].mxu0
    %v2802 = vadd.f32 0.0, %v2801
    %v2803 = vpop.f32.mrb[0].mxu0
    %v2804 = vadd.f32 0.0, %v2803
    %v2805 = vpop.f32.mrb[0].mxu0
    %v2806 = vpop.f32.mrb[0].mxu0
    %2807 = vdwg.mxu0
    %2808 = vmatprep.subr.bf16.mxu0 %v2304
    %2809 = vmatpush1.bf16.msra.mxu0 %v2303
    %2810 = vmatprep.subr.bf16.mxu0 %v2312
    %2811 = vmatpush1.bf16.msra.mxu0 %v2311
    %2812 = vmatprep.subr.bf16.mxu0 %v2320
    %2813 = vmatpush1.bf16.msra.mxu0 %v2319
    %2814 = vmatprep.subr.bf16.mxu0 %v2328
    %2815 = vmatpush1.bf16.msra.mxu0 %v2327
    %2816 = vmatprep.subr.bf16.mxu0 %v2336
    %2817 = vmatpush1.bf16.msra.mxu0 %v2335
    %2818 = vmatprep.subr.bf16.mxu0 %v2344
    %2819 = vmatpush1.bf16.msra.mxu0 %v2343
    %2820 = vmatprep.subr.bf16.mxu0 %v2352
    %2821 = vmatpush1.bf16.msra.mxu0 %v2351
    %2822 = vmatprep.subr.bf16.mxu0 %v2360
    %2823 = vmatpush1.bf16.msra.mxu0 %v2359
    %2824 = vmatprep.subr.bf16.mxu0 %v2368
    %2825 = vmatpush1.bf16.msra.mxu0 %v2367
    %2826 = vmatprep.subr.bf16.mxu0 %v2376
    %2827 = vmatpush1.bf16.msra.mxu0 %v2375
    %2828 = vmatprep.subr.bf16.mxu0 %v2384
    %2829 = vmatpush1.bf16.msra.mxu0 %v2383
    %2830 = vmatprep.subr.bf16.mxu0 %v2392
    %2831 = vmatpush1.bf16.msra.mxu0 %v2391
    %2832 = vmatprep.subr.bf16.mxu0 %v2400
    %2833 = vmatpush1.bf16.msra.mxu0 %v2399
    %2834 = vmatprep.subr.bf16.mxu0 %v2408
    %2835 = vmatpush1.bf16.msra.mxu0 %v2407
    %2836 = vmatprep.subr.bf16.mxu0 %v2416
    %2837 = vmatpush1.bf16.msra.mxu0 %v2415
    %2838 = vmatprep.subr.bf16.mxu0 %v2424
    %2839 = vmatpush1.bf16.msra.mxu0 %v2423
    %2840 = vmatprep.mubr.bf16.mxu0 %v1148
    %2841 = vmatmul.mubr.bf16.gmra.mrb[0].mxu0 %v1147
    %v2842 = vpop.f32.mrb[0].mxu0
    %v2843 = vadd.f32 %v2802, %v2842
    %v2844 = vpop.f32.mrb[0].mxu0
    %v2845 = vadd.f32 %v2804, %v2844
    %v2846 = vpop.f32.mrb[0].mxu0
    %v2847 = vpop.f32.mrb[0].mxu0
    %2848 = vdwg.mxu0
    %2849 = vmatprep.subr.bf16.mxu0 %v2178
    %2850 = vmatpush1.bf16.msra.mxu0 %v2177
    %2851 = vmatprep.subr.bf16.mxu0 %v2186
    %2852 = vmatpush1.bf16.msra.mxu0 %v2185
    %2853 = vmatprep.subr.bf16.mxu0 %v2194
    %2854 = vmatpush1.bf16.msra.mxu0 %v2193
    %2855 = vmatprep.subr.bf16.mxu0 %v2202
    %2856 = vmatpush1.bf16.msra.mxu0 %v2201
    %2857 = vmatprep.subr.bf16.mxu0 %v2210
    %2858 = vmatpush1.bf16.msra.mxu0 %v2209
    %2859 = vmatprep.subr.bf16.mxu0 %v2218
    %2860 = vmatpush1.bf16.msra.mxu0 %v2217
    %2861 = vmatprep.subr.bf16.mxu0 %v2226
    %2862 = vmatpush1.bf16.msra.mxu0 %v2225
    %2863 = vmatprep.subr.bf16.mxu0 %v2234
    %2864 = vmatpush1.bf16.msra.mxu0 %v2233
    %2865 = vmatprep.subr.bf16.mxu0 %v2242
    %2866 = vmatpush1.bf16.msra.mxu0 %v2241
    %2867 = vmatprep.subr.bf16.mxu0 %v2250
    %2868 = vmatpush1.bf16.msra.mxu0 %v2249
    %2869 = vmatprep.subr.bf16.mxu0 %v2258
    %2870 = vmatpush1.bf16.msra.mxu0 %v2257
    %2871 = vmatprep.subr.bf16.mxu0 %v2266
    %2872 = vmatpush1.bf16.msra.mxu0 %v2265
    %2873 = vmatprep.subr.bf16.mxu0 %v2274
    %2874 = vmatpush1.bf16.msra.mxu0 %v2273
    %2875 = vmatprep.subr.bf16.mxu0 %v2282
    %2876 = vmatpush1.bf16.msra.mxu0 %v2281
    %2877 = vmatprep.subr.bf16.mxu0 %v2290
    %2878 = vmatpush1.bf16.msra.mxu0 %v2289
    %2879 = vmatprep.subr.bf16.mxu0 %v2298
    %2880 = vmatpush1.bf16.msra.mxu0 %v2297
    %2881 = vmatprep.mubr.bf16.mxu0 %v1146
    %2882 = vmatmul.mubr.bf16.gmra.mrb[0].mxu0 %v1145
    %v2883 = vpop.f32.mrb[0].mxu0
    %v2884 = vadd.f32 0.0, %v2883
    %v2885 = vpop.f32.mrb[0].mxu0
    %v2886 = vadd.f32 0.0, %v2885
    %v2887 = vpop.f32.mrb[0].mxu0
    %v2888 = vpop.f32.mrb[0].mxu0
    %2889 = vdwg.mxu0
    %2890 = vmatprep.subr.bf16.mxu0 %v2306
    %2891 = vmatpush1.bf16.msra.mxu0 %v2305
    %2892 = vmatprep.subr.bf16.mxu0 %v2314
    %2893 = vmatpush1.bf16.msra.mxu0 %v2313
    %2894 = vmatprep.subr.bf16.mxu0 %v2322
    %2895 = vmatpush1.bf16.msra.mxu0 %v2321
    %2896 = vmatprep.subr.bf16.mxu0 %v2330
    %2897 = vmatpush1.bf16.msra.mxu0 %v2329
    %2898 = vmatprep.subr.bf16.mxu0 %v2338
    %2899 = vmatpush1.bf16.msra.mxu0 %v2337
    %2900 = vmatprep.subr.bf16.mxu0 %v2346
    %2901 = vmatpush1.bf16.msra.mxu0 %v2345
    %2902 = vmatprep.subr.bf16.mxu0 %v2354
    %2903 = vmatpush1.bf16.msra.mxu0 %v2353
    %2904 = vmatprep.subr.bf16.mxu0 %v2362
    %2905 = vmatpush1.bf16.msra.mxu0 %v2361
    %2906 = vmatprep.subr.bf16.mxu0 %v2370
    %2907 = vmatpush1.bf16.msra.mxu0 %v2369
    %2908 = vmatprep.subr.bf16.mxu0 %v2378
    %2909 = vmatpush1.bf16.msra.mxu0 %v2377
    %2910 = vmatprep.subr.bf16.mxu0 %v2386
    %2911 = vmatpush1.bf16.msra.mxu0 %v2385
    %2912 = vmatprep.subr.bf16.mxu0 %v2394
    %2913 = vmatpush1.bf16.msra.mxu0 %v2393
    %2914 = vmatprep.subr.bf16.mxu0 %v2402
    %2915 = vmatpush1.bf16.msra.mxu0 %v2401
    %2916 = vmatprep.subr.bf16.mxu0 %v2410
    %2917 = vmatpush1.bf16.msra.mxu0 %v2409
    %2918 = vmatprep.subr.bf16.mxu0 %v2418
    %2919 = vmatpush1.bf16.msra.mxu0 %v2417
    %2920 = vmatprep.subr.bf16.mxu0 %v2426
    %2921 = vmatpush1.bf16.msra.mxu0 %v2425
    %2922 = vmatprep.mubr.bf16.mxu0 %v1148
    %2923 = vmatmul.mubr.bf16.gmra.mrb[0].mxu0 %v1147
    %v2924 = vpop.f32.mrb[0].mxu0
    %v2925 = vadd.f32 %v2884, %v2924
    %v2926 = vpop.f32.mrb[0].mxu0
    %v2927 = vadd.f32 %v2886, %v2926
    %v2928 = vpop.f32.mrb[0].mxu0
    %v2929 = vpop.f32.mrb[0].mxu0
    %2930 = vdwg.mxu0
    %2931 = vmatprep.subr.bf16.mxu0 %v2180
    %2932 = vmatpush1.bf16.msra.mxu0 %v2179
    %2933 = vmatprep.subr.bf16.mxu0 %v2188
    %2934 = vmatpush1.bf16.msra.mxu0 %v2187
    %2935 = vmatprep.subr.bf16.mxu0 %v2196
    %2936 = vmatpush1.bf16.msra.mxu0 %v2195
    %2937 = vmatprep.subr.bf16.mxu0 %v2204
    %2938 = vmatpush1.bf16.msra.mxu0 %v2203
    %2939 = vmatprep.subr.bf16.mxu0 %v2212
    %2940 = vmatpush1.bf16.msra.mxu0 %v2211
    %2941 = vmatprep.subr.bf16.mxu0 %v2220
    %2942 = vmatpush1.bf16.msra.mxu0 %v2219
    %2943 = vmatprep.subr.bf16.mxu0 %v2228
    %2944 = vmatpush1.bf16.msra.mxu0 %v2227
    %2945 = vmatprep.subr.bf16.mxu0 %v2236
    %2946 = vmatpush1.bf16.msra.mxu0 %v2235
    %2947 = vmatprep.subr.bf16.mxu0 %v2244
    %2948 = vmatpush1.bf16.msra.mxu0 %v2243
    %2949 = vmatprep.subr.bf16.mxu0 %v2252
    %2950 = vmatpush1.bf16.msra.mxu0 %v2251
    %2951 = vmatprep.subr.bf16.mxu0 %v2260
    %2952 = vmatpush1.bf16.msra.mxu0 %v2259
    %2953 = vmatprep.subr.bf16.mxu0 %v2268
    %2954 = vmatpush1.bf16.msra.mxu0 %v2267
    %2955 = vmatprep.subr.bf16.mxu0 %v2276
    %2956 = vmatpush1.bf16.msra.mxu0 %v2275
    %2957 = vmatprep.subr.bf16.mxu0 %v2284
    %2958 = vmatpush1.bf16.msra.mxu0 %v2283
    %2959 = vmatprep.subr.bf16.mxu0 %v2292
    %2960 = vmatpush1.bf16.msra.mxu0 %v2291
    %2961 = vmatprep.subr.bf16.mxu0 %v2300
    %2962 = vmatpush1.bf16.msra.mxu0 %v2299
    %2963 = vmatprep.mubr.bf16.mxu0 %v1146
    %2964 = vmatmul.mubr.bf16.gmra.mrb[0].mxu0 %v1145
    %v2965 = vpop.f32.mrb[0].mxu0
    %v2966 = vadd.f32 0.0, %v2965
    %v2967 = vpop.f32.mrb[0].mxu0
    %v2968 = vadd.f32 0.0, %v2967
    %v2969 = vpop.f32.mrb[0].mxu0
    %v2970 = vpop.f32.mrb[0].mxu0
    %2971 = vdwg.mxu0
    %2972 = vmatprep.subr.bf16.mxu0 %v2308
    %2973 = vmatpush1.bf16.msra.mxu0 %v2307
    %2974 = vmatprep.subr.bf16.mxu0 %v2316
    %2975 = vmatpush1.bf16.msra.mxu0 %v2315
    %2976 = vmatprep.subr.bf16.mxu0 %v2324
    %2977 = vmatpush1.bf16.msra.mxu0 %v2323
    %2978 = vmatprep.subr.bf16.mxu0 %v2332
    %2979 = vmatpush1.bf16.msra.mxu0 %v2331
    %2980 = vmatprep.subr.bf16.mxu0 %v2340
    %2981 = vmatpush1.bf16.msra.mxu0 %v2339
    %2982 = vmatprep.subr.bf16.mxu0 %v2348
    %2983 = vmatpush1.bf16.msra.mxu0 %v2347
    %2984 = vmatprep.subr.bf16.mxu0 %v2356
    %2985 = vmatpush1.bf16.msra.mxu0 %v2355
    %2986 = vmatprep.subr.bf16.mxu0 %v2364
    %2987 = vmatpush1.bf16.msra.mxu0 %v2363
    %2988 = vmatprep.subr.bf16.mxu0 %v2372
    %2989 = vmatpush1.bf16.msra.mxu0 %v2371
    %2990 = vmatprep.subr.bf16.mxu0 %v2380
    %2991 = vmatpush1.bf16.msra.mxu0 %v2379
    %2992 = vmatprep.subr.bf16.mxu0 %v2388
    %2993 = vmatpush1.bf16.msra.mxu0 %v2387
    %2994 = vmatprep.subr.bf16.mxu0 %v2396
    %2995 = vmatpush1.bf16.msra.mxu0 %v2395
    %2996 = vmatprep.subr.bf16.mxu0 %v2404
    %2997 = vmatpush1.bf16.msra.mxu0 %v2403
    %2998 = vmatprep.subr.bf16.mxu0 %v2412
    %2999 = vmatpush1.bf16.msra.mxu0 %v2411
    %3000 = vmatprep.subr.bf16.mxu0 %v2420
    %3001 = vmatpush1.bf16.msra.mxu0 %v2419
    %3002 = vmatprep.subr.bf16.mxu0 %v2428
    %3003 = vmatpush1.bf16.msra.mxu0 %v2427
    %3004 = vmatprep.mubr.bf16.mxu0 %v1148
    %3005 = vmatmul.mubr.bf16.gmra.mrb[0].mxu0 %v1147
    %v3006 = vpop.f32.mrb[0].mxu0
    %v3007 = vadd.f32 %v2966, %v3006
    %v3008 = vpop.f32.mrb[0].mxu0
    %v3009 = vadd.f32 %v2968, %v3008
    %v3010 = vpop.f32.mrb[0].mxu0
    %v3011 = vpop.f32.mrb[0].mxu0
    %3012 = vdwg.mxu0
    %v3013 = vrot.slane %v2761, 4
    %v3014 = vadd.f32 %v2761, %v3013
    %v3015 = vrot.slane %v3014, 2
    %v3016 = vadd.f32 %v3014, %v3015
    %v3017 = vrot.slane %v3016, 1
    %v3018 = vadd.f32 %v3016, %v3017
    %v3019 = vrot.slane %v2763, 4
    %v3020 = vadd.f32 %v2763, %v3019
    %v3021 = vrot.slane %v3020, 2
    %v3022 = vadd.f32 %v3020, %v3021
    %v3023 = vrot.slane %v3022, 1
    %v3024 = vadd.f32 %v3022, %v3023
    %v3025 = vrot.slane %v2843, 4
    %v3026 = vadd.f32 %v2843, %v3025
    %v3027 = vrot.slane %v3026, 2
    %v3028 = vadd.f32 %v3026, %v3027
    %v3029 = vrot.slane %v3028, 1
    %v3030 = vadd.f32 %v3028, %v3029
    %v3031 = vrot.slane %v2845, 4
    %v3032 = vadd.f32 %v2845, %v3031
    %v3033 = vrot.slane %v3032, 2
    %v3034 = vadd.f32 %v3032, %v3033
    %v3035 = vrot.slane %v3034, 1
    %v3036 = vadd.f32 %v3034, %v3035
    %v3037 = vrot.slane %v2925, 4
    %v3038 = vadd.f32 %v2925, %v3037
    %v3039 = vrot.slane %v3038, 2
    %v3040 = vadd.f32 %v3038, %v3039
    %v3041 = vrot.slane %v3040, 1
    %v3042 = vadd.f32 %v3040, %v3041
    %v3043 = vrot.slane %v2927, 4
    %v3044 = vadd.f32 %v2927, %v3043
    %v3045 = vrot.slane %v3044, 2
    %v3046 = vadd.f32 %v3044, %v3045
    %v3047 = vrot.slane %v3046, 1
    %v3048 = vadd.f32 %v3046, %v3047
    %v3049 = vrot.slane %v3007, 4
    %v3050 = vadd.f32 %v3007, %v3049
    %v3051 = vrot.slane %v3050, 2
    %v3052 = vadd.f32 %v3050, %v3051
    %v3053 = vrot.slane %v3052, 1
    %v3054 = vadd.f32 %v3052, %v3053
    %v3055 = vrot.slane %v3009, 4
    %v3056 = vadd.f32 %v3009, %v3055
    %v3057 = vrot.slane %v3056, 2
    %v3058 = vadd.f32 %v3056, %v3057
    %v3059 = vrot.slane %v3058, 1
    %v3060 = vadd.f32 %v3058, %v3059
    %v3061 = vmul.f32 %v3018, %v384
    %v3062 = vmul.f32 %v3024, %v384
    %v3063 = vmul.f32 %v3030, %v384
    %v3064 = vmul.f32 %v3036, %v384
    %v3065 = vmul.f32 %v3042, %v384
    %v3066 = vmul.f32 %v3048, %v384
    %v3067 = vmul.f32 %v3054, %v384
    %v3068 = vmul.f32 %v3060, %v384
    %v3069 = vsub.f32 %v2761, %v3061
    %v3070 = vsub.f32 %v2763, %v3062
    %v3071 = vsub.f32 %v2843, %v3063
    %v3072 = vsub.f32 %v2845, %v3064
    %v3073 = vsub.f32 %v2925, %v3065
    %v3074 = vsub.f32 %v2927, %v3066
    %v3075 = vsub.f32 %v3007, %v3067
    %v3076 = vsub.f32 %v3009, %v3068
    %v3077 = vmul.f32 %v3069, %v3069
    %v3078 = vmul.f32 %v3070, %v3070
    %v3079 = vmul.f32 %v3071, %v3071
    %v3080 = vmul.f32 %v3072, %v3072
    %v3081 = vmul.f32 %v3073, %v3073
    %v3082 = vmul.f32 %v3074, %v3074
    %v3083 = vmul.f32 %v3075, %v3075
    %v3084 = vmul.f32 %v3076, %v3076
    %v3085 = vrot.slane %v3077, 4
    %v3086 = vadd.f32 %v3077, %v3085
    %v3087 = vrot.slane %v3086, 2
    %v3088 = vadd.f32 %v3086, %v3087
    %v3089 = vrot.slane %v3088, 1
    %v3090 = vadd.f32 %v3088, %v3089
    %v3091 = vrot.slane %v3078, 4
    %v3092 = vadd.f32 %v3078, %v3091
    %v3093 = vrot.slane %v3092, 2
    %v3094 = vadd.f32 %v3092, %v3093
    %v3095 = vrot.slane %v3094, 1
    %v3096 = vadd.f32 %v3094, %v3095
    %v3097 = vrot.slane %v3079, 4
    %v3098 = vadd.f32 %v3079, %v3097
    %v3099 = vrot.slane %v3098, 2
    %v3100 = vadd.f32 %v3098, %v3099
    %v3101 = vrot.slane %v3100, 1
    %v3102 = vadd.f32 %v3100, %v3101
    %v3103 = vrot.slane %v3080, 4
    %v3104 = vadd.f32 %v3080, %v3103
    %v3105 = vrot.slane %v3104, 2
    %v3106 = vadd.f32 %v3104, %v3105
    %v3107 = vrot.slane %v3106, 1
    %v3108 = vadd.f32 %v3106, %v3107
    %v3109 = vrot.slane %v3081, 4
    %v3110 = vadd.f32 %v3081, %v3109
    %v3111 = vrot.slane %v3110, 2
    %v3112 = vadd.f32 %v3110, %v3111
    %v3113 = vrot.slane %v3112, 1
    %v3114 = vadd.f32 %v3112, %v3113
    %v3115 = vrot.slane %v3082, 4
    %v3116 = vadd.f32 %v3082, %v3115
    %v3117 = vrot.slane %v3116, 2
    %v3118 = vadd.f32 %v3116, %v3117
    %v3119 = vrot.slane %v3118, 1
    %v3120 = vadd.f32 %v3118, %v3119
    %v3121 = vrot.slane %v3083, 4
    %v3122 = vadd.f32 %v3083, %v3121
    %v3123 = vrot.slane %v3122, 2
    %v3124 = vadd.f32 %v3122, %v3123
    %v3125 = vrot.slane %v3124, 1
    %v3126 = vadd.f32 %v3124, %v3125
    %v3127 = vrot.slane %v3084, 4
    %v3128 = vadd.f32 %v3084, %v3127
    %v3129 = vrot.slane %v3128, 2
    %v3130 = vadd.f32 %v3128, %v3129
    %v3131 = vrot.slane %v3130, 1
    %v3132 = vadd.f32 %v3130, %v3131
    %v3133 = vmul.f32 %v3090, %v384
    %v3134 = vmul.f32 %v3096, %v384
    %v3135 = vmul.f32 %v3102, %v384
    %v3136 = vmul.f32 %v3108, %v384
    %v3137 = vmul.f32 %v3114, %v384
    %v3138 = vmul.f32 %v3120, %v384
    %v3139 = vmul.f32 %v3126, %v384
    %v3140 = vmul.f32 %v3132, %v384
    %v3141 = vld [vmem:[#allocation13 + $0xe] sm:$0xff]
    %v3142 = vadd.f32 %v3133, 1e-05
    %v3143 = vadd.f32 %v3134, 1e-05
    %v3144 = vadd.f32 %v3135, 1e-05
    %v3145 = vadd.f32 %v3136, 1e-05
    %v3146 = vadd.f32 %v3137, 1e-05
    %v3147 = vadd.f32 %v3138, 1e-05
    %v3148 = vadd.f32 %v3139, 1e-05
    %v3149 = vadd.f32 %v3140, 1e-05
    %v3150 = vrsqrt.pop %v3142
    %v3151 = vrsqrt.pop %v3143
    %v3152 = vrsqrt.pop %v3144
    %v3153 = vrsqrt.pop %v3145
    %v3154 = vrsqrt.pop %v3146
    %v3155 = vrsqrt.pop %v3147
    %v3156 = vrsqrt.pop %v3148
    %v3157 = vrsqrt.pop %v3149
    %v3166 = vcombine.low %v3150, %v3151
    %v3167 = vcombine.low %v3152, %v3153
    %v3168 = vcombine.low %v3154, %v3155
    %v3169 = vcombine.low %v3156, %v3157
    %v3171 = vunpack.c.l.s4 1966171168
    %v3172 = vunpack.c.0.s8 %v3171
    %v3173 = vlaneseq
    %v3174 = vshrl.u32 %v3173, 7
    %v3175 = vsub.s32 %v3172, %v3174
    %v3176 = vrot.slane %v3166, %v3175
    %v3178 = vunpack.c.l.s4 1966171168
    %v3179 = vunpack.c.0.s8 %v3178
    %v3180 = vlaneseq
    %v3181 = vshrl.u32 %v3180, 7
    %v3182 = vsub.s32 %v3179, %v3181
    %v3183 = vrot.slane %v3167, %v3182
    %v3185 = vunpack.c.l.s4 1966171168
    %v3186 = vunpack.c.0.s8 %v3185
    %v3187 = vlaneseq
    %v3188 = vshrl.u32 %v3187, 7
    %v3189 = vsub.s32 %v3186, %v3188
    %v3190 = vrot.slane %v3168, %v3189
    %v3192 = vunpack.c.l.s4 1966171168
    %v3193 = vunpack.c.0.s8 %v3192
    %v3194 = vlaneseq
    %v3195 = vshrl.u32 %v3194, 7
    %v3196 = vsub.s32 %v3193, %v3195
    %v3197 = vrot.slane %v3169, %v3196
    %v3198 = vcombine.low %v3176, %v3183
    %v3199 = vcombine.low %v3190, %v3197
    %v3201 = vunpack.c.l.s4 1966171168
    %v3202 = vunpack.c.0.s8 %v3201
    %v3203 = vlaneseq
    %v3204 = vshrl.u32 %v3203, 7
    %v3205 = vsub.s32 %v3202, %v3204
    %v3206 = vrot.slane %v3198, %v3205
    %v3208 = vunpack.c.l.s4 1966171168
    %v3209 = vunpack.c.0.s8 %v3208
    %v3210 = vlaneseq
    %v3211 = vshrl.u32 %v3210, 7
    %v3212 = vsub.s32 %v3209, %v3211
    %v3213 = vrot.slane %v3199, %v3212
    %v3214 = vcombine.low %v3206, %v3213
    %v3216 = vmul.f32 %v3141, %v3214
    %v3217 = vld [vmem:[#allocation13 + $0x1c] sm:$0xff]
    %v3219 = vlaneseq
    %v3220 = vshrl.u32 %v3219, 7
    %v3221 = vsub.s32 0, %v3220
    %v3222 = vrot.slane %v3216, %v3221
    %v3223 = vlaneseq
    %v3224 = vshrl.u32 %v3223, 7
    %v3225 = vsub.s32 1, %v3224
    %v3226 = vrot.slane %v3216, %v3225
    %v3227 = vlaneseq
    %v3228 = vshrl.u32 %v3227, 7
    %v3229 = vsub.s32 2, %v3228
    %v3230 = vrot.slane %v3216, %v3229
    %v3231 = vlaneseq
    %v3232 = vshrl.u32 %v3231, 7
    %v3233 = vsub.s32 3, %v3232
    %v3234 = vrot.slane %v3216, %v3233
    %v3235 = vlaneseq
    %v3236 = vshrl.u32 %v3235, 7
    %v3237 = vsub.s32 4, %v3236
    %v3238 = vrot.slane %v3216, %v3237
    %v3239 = vlaneseq
    %v3240 = vshrl.u32 %v3239, 7
    %v3241 = vsub.s32 5, %v3240
    %v3242 = vrot.slane %v3216, %v3241
    %v3243 = vlaneseq
    %v3244 = vshrl.u32 %v3243, 7
    %v3245 = vsub.s32 6, %v3244
    %v3246 = vrot.slane %v3216, %v3245
    %v3247 = vlaneseq
    %v3248 = vshrl.u32 %v3247, 7
    %v3249 = vsub.s32 7, %v3248
    %v3250 = vrot.slane %v3216, %v3249
    %v3259 = vmul.f32 %v3061, %v3222
    %v3260 = vmul.f32 %v3062, %v3226
    %v3261 = vmul.f32 %v3063, %v3230
    %v3262 = vmul.f32 %v3064, %v3234
    %v3263 = vmul.f32 %v3065, %v3238
    %v3264 = vmul.f32 %v3066, %v3242
    %v3265 = vmul.f32 %v3067, %v3246
    %v3266 = vmul.f32 %v3068, %v3250
    %v3275 = vcombine.low %v3259, %v3260
    %v3276 = vcombine.low %v3261, %v3262
    %v3277 = vcombine.low %v3263, %v3264
    %v3278 = vcombine.low %v3265, %v3266
    %v3280 = vunpack.c.l.s4 1966171168
    %v3281 = vunpack.c.0.s8 %v3280
    %v3282 = vlaneseq
    %v3283 = vshrl.u32 %v3282, 7
    %v3284 = vsub.s32 %v3281, %v3283
    %v3285 = vrot.slane %v3275, %v3284
    %v3287 = vunpack.c.l.s4 1966171168
    %v3288 = vunpack.c.0.s8 %v3287
    %v3289 = vlaneseq
    %v3290 = vshrl.u32 %v3289, 7
    %v3291 = vsub.s32 %v3288, %v3290
    %v3292 = vrot.slane %v3276, %v3291
    %v3294 = vunpack.c.l.s4 1966171168
    %v3295 = vunpack.c.0.s8 %v3294
    %v3296 = vlaneseq
    %v3297 = vshrl.u32 %v3296, 7
    %v3298 = vsub.s32 %v3295, %v3297
    %v3299 = vrot.slane %v3277, %v3298
    %v3301 = vunpack.c.l.s4 1966171168
    %v3302 = vunpack.c.0.s8 %v3301
    %v3303 = vlaneseq
    %v3304 = vshrl.u32 %v3303, 7
    %v3305 = vsub.s32 %v3302, %v3304
    %v3306 = vrot.slane %v3278, %v3305
    %v3307 = vcombine.low %v3285, %v3292
    %v3308 = vcombine.low %v3299, %v3306
    %v3310 = vunpack.c.l.s4 1966171168
    %v3311 = vunpack.c.0.s8 %v3310
    %v3312 = vlaneseq
    %v3313 = vshrl.u32 %v3312, 7
    %v3314 = vsub.s32 %v3311, %v3313
    %v3315 = vrot.slane %v3307, %v3314
    %v3317 = vunpack.c.l.s4 1966171168
    %v3318 = vunpack.c.0.s8 %v3317
    %v3319 = vlaneseq
    %v3320 = vshrl.u32 %v3319, 7
    %v3321 = vsub.s32 %v3318, %v3320
    %v3322 = vrot.slane %v3308, %v3321
    %v3323 = vcombine.low %v3315, %v3322
    %v3325 = vsub.f32 %v3217, %v3323
    %v3326 = vmul.f32 %v2761, %v3222
    %v3327 = vmul.f32 %v2763, %v3226
    %v3328 = vmul.f32 %v2843, %v3230
    %v3329 = vmul.f32 %v2845, %v3234
    %v3330 = vmul.f32 %v2925, %v3238
    %v3331 = vmul.f32 %v2927, %v3242
    %v3332 = vmul.f32 %v3007, %v3246
    %v3333 = vmul.f32 %v3009, %v3250
    %v3335 = vlaneseq
    %v3336 = vshrl.u32 %v3335, 7
    %v3337 = vsub.s32 0, %v3336
    %v3338 = vrot.slane %v3325, %v3337
    %v3339 = vlaneseq
    %v3340 = vshrl.u32 %v3339, 7
    %v3341 = vsub.s32 1, %v3340
    %v3342 = vrot.slane %v3325, %v3341
    %v3343 = vlaneseq
    %v3344 = vshrl.u32 %v3343, 7
    %v3345 = vsub.s32 2, %v3344
    %v3346 = vrot.slane %v3325, %v3345
    %v3347 = vlaneseq
    %v3348 = vshrl.u32 %v3347, 7
    %v3349 = vsub.s32 3, %v3348
    %v3350 = vrot.slane %v3325, %v3349
    %v3351 = vlaneseq
    %v3352 = vshrl.u32 %v3351, 7
    %v3353 = vsub.s32 4, %v3352
    %v3354 = vrot.slane %v3325, %v3353
    %v3355 = vlaneseq
    %v3356 = vshrl.u32 %v3355, 7
    %v3357 = vsub.s32 5, %v3356
    %v3358 = vrot.slane %v3325, %v3357
    %v3359 = vlaneseq
    %v3360 = vshrl.u32 %v3359, 7
    %v3361 = vsub.s32 6, %v3360
    %v3362 = vrot.slane %v3325, %v3361
    %v3363 = vlaneseq
    %v3364 = vshrl.u32 %v3363, 7
    %v3365 = vsub.s32 7, %v3364
    %v3366 = vrot.slane %v3325, %v3365
    %v3375 = vadd.f32 %v3326, %v3338
    %v3376 = vadd.f32 %v3327, %v3342
    %v3377 = vadd.f32 %v3328, %v3346
    %v3378 = vadd.f32 %v3329, %v3350
    %v3379 = vadd.f32 %v3330, %v3354
    %v3380 = vadd.f32 %v3331, %v3358
    %v3381 = vadd.f32 %v3332, %v3362
    %v3382 = vadd.f32 %v3333, %v3366
    %v3383 = vmul.f32 %v3375, 0.2
    %v3384 = vmul.f32 %v3376, 0.2
    %v3385 = vmul.f32 %v3377, 0.2
    %v3386 = vmul.f32 %v3378, 0.2
    %v3387 = vmul.f32 %v3379, 0.2
    %v3388 = vmul.f32 %v3380, 0.2
    %v3389 = vmul.f32 %v3381, 0.2
    %v3390 = vmul.f32 %v3382, 0.2
    %v3391 = vmax.f32 %v3375, %v3383
    %v3392 = vmax.f32 %v3376, %v3384
    %v3393 = vmax.f32 %v3377, %v3385
    %v3394 = vmax.f32 %v3378, %v3386
    %v3395 = vmax.f32 %v3379, %v3387
    %v3396 = vmax.f32 %v3380, %v3388
    %v3397 = vmax.f32 %v3381, %v3389
    %v3398 = vmax.f32 %v3382, %v3390
    %v3399 = vpack.c.bf16 %v3391, %v3391
    %v3400 = vpack.c.bf16 %v3392, %v3392
    %v3401 = vpack.c.bf16 %v3393, %v3393
    %v3402 = vpack.c.bf16 %v3394, %v3394
    %v3403 = vpack.c.bf16 %v3395, %v3395
    %v3404 = vpack.c.bf16 %v3396, %v3396
    %v3405 = vpack.c.bf16 %v3397, %v3397
    %v3406 = vpack.c.bf16 %v3398, %v3398
    %v3407 = vld [vmem:[#allocation11] sm:$0xff]
    %v3408 = vld [vmem:[#allocation11 + $0x8] sm:$0xff]
    %v3409 = vld [vmem:[#allocation11 + $0x10] sm:$0xff]
    %v3410 = vld [vmem:[#allocation11 + $0x18] sm:$0xf]
    %v3411 = vld [vmem:[#allocation11 + $0x1c] sm:$0xff]
    %v3412 = vld [vmem:[#allocation11 + $0x24] sm:$0xff]
    %v3413 = vld [vmem:[#allocation11 + $0x2c] sm:$0xff]
    %v3414 = vld [vmem:[#allocation11 + $0x34] sm:$0xf]
    %v3415 = vld [vmem:[#allocation11 + $0x38] sm:$0xff]
    %v3416 = vld [vmem:[#allocation11 + $0x40] sm:$0xff]
    %v3417 = vld [vmem:[#allocation11 + $0x48] sm:$0xff]
    %v3418 = vld [vmem:[#allocation11 + $0x50] sm:$0xf]
    %v3419 = vld [vmem:[#allocation11 + $0x54] sm:$0xff]
    %v3420 = vld [vmem:[#allocation11 + $0x5c] sm:$0xff]
    %v3421 = vld [vmem:[#allocation11 + $0x64] sm:$0xff]
    %v3422 = vld [vmem:[#allocation11 + $0x6c] sm:$0xf]
    %v3423 = vld [vmem:[#allocation11 + $0x70] sm:$0xff]
    %v3424 = vld [vmem:[#allocation11 + $0x78] sm:$0xff]
    %v3425 = vld [vmem:[#allocation11 + $0x80] sm:$0xff]
    %v3426 = vld [vmem:[#allocation11 + $0x88] sm:$0xf]
    %v3427 = vld [vmem:[#allocation11 + $0x8c] sm:$0xff]
    %v3428 = vld [vmem:[#allocation11 + $0x94] sm:$0xff]
    %v3429 = vld [vmem:[#allocation11 + $0x9c] sm:$0xff]
    %v3430 = vld [vmem:[#allocation11 + $0xa4] sm:$0xf]
    %v3431 = vld [vmem:[#allocation11 + $0xa8] sm:$0xff]
    %v3432 = vld [vmem:[#allocation11 + $0xb0] sm:$0xff]
    %v3433 = vld [vmem:[#allocation11 + $0xb8] sm:$0xff]
    %v3434 = vld [vmem:[#allocation11 + $0xc0] sm:$0xf]
    %v3435 = vld [vmem:[#allocation11 + $0xc4] sm:$0xff]
    %v3436 = vld [vmem:[#allocation11 + $0xcc] sm:$0xff]
    %v3437 = vld [vmem:[#allocation11 + $0xd4] sm:$0xff]
    %v3438 = vld [vmem:[#allocation11 + $0xdc] sm:$0xf]
    %v3439 = vld [vmem:[#allocation11 + $0xe0] sm:$0xff]
    %v3440 = vld [vmem:[#allocation11 + $0xe8] sm:$0xff]
    %v3441 = vld [vmem:[#allocation11 + $0xf0] sm:$0xff]
    %v3442 = vld [vmem:[#allocation11 + $0xf8] sm:$0xf]
    %v3443 = vld [vmem:[#allocation11 + $0xfc] sm:$0xff]
    %v3444 = vld [vmem:[#allocation11 + $0x104] sm:$0xff]
    %v3445 = vld [vmem:[#allocation11 + $0x10c] sm:$0xff]
    %v3446 = vld [vmem:[#allocation11 + $0x114] sm:$0xf]
    %v3447 = vld [vmem:[#allocation11 + $0x118] sm:$0xff]
    %v3448 = vld [vmem:[#allocation11 + $0x120] sm:$0xff]
    %v3449 = vld [vmem:[#allocation11 + $0x128] sm:$0xff]
    %v3450 = vld [vmem:[#allocation11 + $0x130] sm:$0xf]
    %v3451 = vld [vmem:[#allocation11 + $0x134] sm:$0xff]
    %v3452 = vld [vmem:[#allocation11 + $0x13c] sm:$0xff]
    %v3453 = vld [vmem:[#allocation11 + $0x144] sm:$0xff]
    %v3454 = vld [vmem:[#allocation11 + $0x14c] sm:$0xf]
    %v3455 = vld [vmem:[#allocation11 + $0x150] sm:$0xff]
    %v3456 = vld [vmem:[#allocation11 + $0x158] sm:$0xff]
    %v3457 = vld [vmem:[#allocation11 + $0x160] sm:$0xff]
    %v3458 = vld [vmem:[#allocation11 + $0x168] sm:$0xf]
    %v3459 = vld [vmem:[#allocation11 + $0x16c] sm:$0xff]
    %v3460 = vld [vmem:[#allocation11 + $0x174] sm:$0xff]
    %v3461 = vld [vmem:[#allocation11 + $0x17c] sm:$0xff]
    %v3462 = vld [vmem:[#allocation11 + $0x184] sm:$0xf]
    %v3463 = vld [vmem:[#allocation11 + $0x188] sm:$0xff]
    %v3464 = vld [vmem:[#allocation11 + $0x190] sm:$0xff]
    %v3465 = vld [vmem:[#allocation11 + $0x198] sm:$0xff]
    %v3466 = vld [vmem:[#allocation11 + $0x1a0] sm:$0xf]
    %v3467 = vld [vmem:[#allocation11 + $0x1a4] sm:$0xff]
    %v3468 = vld [vmem:[#allocation11 + $0x1ac] sm:$0xff]
    %v3469 = vld [vmem:[#allocation11 + $0x1b4] sm:$0xff]
    %v3470 = vld [vmem:[#allocation11 + $0x1bc] sm:$0xf]
    %v3471 = vld [vmem:[#allocation11 + $0x1c0] sm:$0xff]
    %v3472 = vld [vmem:[#allocation11 + $0x1c8] sm:$0xff]
    %v3473 = vld [vmem:[#allocation11 + $0x1d0] sm:$0xff]
    %v3474 = vld [vmem:[#allocation11 + $0x1d8] sm:$0xf]
    %v3475 = vld [vmem:[#allocation11 + $0x1dc] sm:$0xff]
    %v3476 = vld [vmem:[#allocation11 + $0x1e4] sm:$0xff]
    %v3477 = vld [vmem:[#allocation11 + $0x1ec] sm:$0xff]
    %v3478 = vld [vmem:[#allocation11 + $0x1f4] sm:$0xf]
    %v3479 = vld [vmem:[#allocation11 + $0x1f8] sm:$0xff]
    %v3480 = vld [vmem:[#allocation11 + $0x200] sm:$0xff]
    %v3481 = vld [vmem:[#allocation11 + $0x208] sm:$0xff]
    %v3482 = vld [vmem:[#allocation11 + $0x210] sm:$0xf]
    %v3483 = vld [vmem:[#allocation11 + $0x214] sm:$0xff]
    %v3484 = vld [vmem:[#allocation11 + $0x21c] sm:$0xff]
    %v3485 = vld [vmem:[#allocation11 + $0x224] sm:$0xff]
    %v3486 = vld [vmem:[#allocation11 + $0x22c] sm:$0xf]
    %v3487 = vld [vmem:[#allocation11 + $0x230] sm:$0xff]
    %v3488 = vld [vmem:[#allocation11 + $0x238] sm:$0xff]
    %v3489 = vld [vmem:[#allocation11 + $0x240] sm:$0xff]
    %v3490 = vld [vmem:[#allocation11 + $0x248] sm:$0xf]
    %v3491 = vld [vmem:[#allocation11 + $0x24c] sm:$0xff]
    %v3492 = vld [vmem:[#allocation11 + $0x254] sm:$0xff]
    %v3493 = vld [vmem:[#allocation11 + $0x25c] sm:$0xff]
    %v3494 = vld [vmem:[#allocation11 + $0x264] sm:$0xf]
    %v3495 = vld [vmem:[#allocation11 + $0x268] sm:$0xff]
    %v3496 = vld [vmem:[#allocation11 + $0x270] sm:$0xff]
    %v3497 = vld [vmem:[#allocation11 + $0x278] sm:$0xff]
    %v3498 = vld [vmem:[#allocation11 + $0x280] sm:$0xf]
    %v3499 = vld [vmem:[#allocation11 + $0x284] sm:$0xff]
    %v3500 = vld [vmem:[#allocation11 + $0x28c] sm:$0xff]
    %v3501 = vld [vmem:[#allocation11 + $0x294] sm:$0xff]
    %v3502 = vld [vmem:[#allocation11 + $0x29c] sm:$0xf]
    %v3503 = vld [vmem:[#allocation11 + $0x2a0] sm:$0xff]
    %v3504 = vld [vmem:[#allocation11 + $0x2a8] sm:$0xff]
    %v3505 = vld [vmem:[#allocation11 + $0x2b0] sm:$0xff]
    %v3506 = vld [vmem:[#allocation11 + $0x2b8] sm:$0xf]
    %v3507 = vld [vmem:[#allocation11 + $0x2bc] sm:$0xff]
    %v3508 = vld [vmem:[#allocation11 + $0x2c4] sm:$0xff]
    %v3509 = vld [vmem:[#allocation11 + $0x2cc] sm:$0xff]
    %v3510 = vld [vmem:[#allocation11 + $0x2d4] sm:$0xf]
    %v3511 = vld [vmem:[#allocation11 + $0x2d8] sm:$0xff]
    %v3512 = vld [vmem:[#allocation11 + $0x2e0] sm:$0xff]
    %v3513 = vld [vmem:[#allocation11 + $0x2e8] sm:$0xff]
    %v3514 = vld [vmem:[#allocation11 + $0x2f0] sm:$0xf]
    %v3515 = vld [vmem:[#allocation11 + $0x2f4] sm:$0xff]
    %v3516 = vld [vmem:[#allocation11 + $0x2fc] sm:$0xff]
    %v3517 = vld [vmem:[#allocation11 + $0x304] sm:$0xff]
    %v3518 = vld [vmem:[#allocation11 + $0x30c] sm:$0xf]
    %v3519 = vld [vmem:[#allocation11 + $0x310] sm:$0xff]
    %v3520 = vld [vmem:[#allocation11 + $0x318] sm:$0xff]
    %v3521 = vld [vmem:[#allocation11 + $0x320] sm:$0xff]
    %v3522 = vld [vmem:[#allocation11 + $0x328] sm:$0xf]
    %v3523 = vld [vmem:[#allocation11 + $0x32c] sm:$0xff]
    %v3524 = vld [vmem:[#allocation11 + $0x334] sm:$0xff]
    %v3525 = vld [vmem:[#allocation11 + $0x33c] sm:$0xff]
    %v3526 = vld [vmem:[#allocation11 + $0x344] sm:$0xf]
    %v3527 = vld [vmem:[#allocation11 + $0x348] sm:$0xff]
    %v3528 = vld [vmem:[#allocation11 + $0x350] sm:$0xff]
    %v3529 = vld [vmem:[#allocation11 + $0x358] sm:$0xff]
    %v3530 = vld [vmem:[#allocation11 + $0x360] sm:$0xf]
    %v3531 = vld [vmem:[#allocation11 + $0x364] sm:$0xff]
    %v3532 = vld [vmem:[#allocation11 + $0x36c] sm:$0xff]
    %v3533 = vld [vmem:[#allocation11 + $0x374] sm:$0xff]
    %v3534 = vld [vmem:[#allocation11 + $0x37c] sm:$0xf]
    %v3535 = vld [vmem:[#allocation11 + $0x380] sm:$0xff]
    %v3536 = vld [vmem:[#allocation11 + $0x388] sm:$0xff]
    %v3537 = vld [vmem:[#allocation11 + $0x390] sm:$0xff]
    %v3538 = vld [vmem:[#allocation11 + $0x398] sm:$0xf]
    %v3539 = vld [vmem:[#allocation11 + $0x39c] sm:$0xff]
    %v3540 = vld [vmem:[#allocation11 + $0x3a4] sm:$0xff]
    %v3541 = vld [vmem:[#allocation11 + $0x3ac] sm:$0xff]
    %v3542 = vld [vmem:[#allocation11 + $0x3b4] sm:$0xf]
    %v3543 = vld [vmem:[#allocation11 + $0x3b8] sm:$0xff]
    %v3544 = vld [vmem:[#allocation11 + $0x3c0] sm:$0xff]
    %v3545 = vld [vmem:[#allocation11 + $0x3c8] sm:$0xff]
    %v3546 = vld [vmem:[#allocation11 + $0x3d0] sm:$0xf]
    %v3547 = vld [vmem:[#allocation11 + $0x3d4] sm:$0xff]
    %v3548 = vld [vmem:[#allocation11 + $0x3dc] sm:$0xff]
    %v3549 = vld [vmem:[#allocation11 + $0x3e4] sm:$0xff]
    %v3550 = vld [vmem:[#allocation11 + $0x3ec] sm:$0xf]
    %v3551 = vld [vmem:[#allocation11 + $0x3f0] sm:$0xff]
    %v3552 = vld [vmem:[#allocation11 + $0x3f8] sm:$0xff]
    %v3553 = vld [vmem:[#allocation11 + $0x400] sm:$0xff]
    %v3554 = vld [vmem:[#allocation11 + $0x408] sm:$0xf]
    %v3555 = vld [vmem:[#allocation11 + $0x40c] sm:$0xff]
    %v3556 = vld [vmem:[#allocation11 + $0x414] sm:$0xff]
    %v3557 = vld [vmem:[#allocation11 + $0x41c] sm:$0xff]
    %v3558 = vld [vmem:[#allocation11 + $0x424] sm:$0xf]
    %v3559 = vld [vmem:[#allocation11 + $0x428] sm:$0xff]
    %v3560 = vld [vmem:[#allocation11 + $0x430] sm:$0xff]
    %v3561 = vld [vmem:[#allocation11 + $0x438] sm:$0xff]
    %v3562 = vld [vmem:[#allocation11 + $0x440] sm:$0xf]
    %v3563 = vld [vmem:[#allocation11 + $0x444] sm:$0xff]
    %v3564 = vld [vmem:[#allocation11 + $0x44c] sm:$0xff]
    %v3565 = vld [vmem:[#allocation11 + $0x454] sm:$0xff]
    %v3566 = vld [vmem:[#allocation11 + $0x45c] sm:$0xf]
    %v3567 = vld [vmem:[#allocation11 + $0x460] sm:$0xff]
    %v3568 = vld [vmem:[#allocation11 + $0x468] sm:$0xff]
    %v3569 = vld [vmem:[#allocation11 + $0x470] sm:$0xff]
    %v3570 = vld [vmem:[#allocation11 + $0x478] sm:$0xf]
    %v3571 = vld [vmem:[#allocation11 + $0x47c] sm:$0xff]
    %v3572 = vld [vmem:[#allocation11 + $0x484] sm:$0xff]
    %v3573 = vld [vmem:[#allocation11 + $0x48c] sm:$0xff]
    %v3574 = vld [vmem:[#allocation11 + $0x494] sm:$0xf]
    %v3575 = vld [vmem:[#allocation11 + $0x498] sm:$0xff]
    %v3576 = vld [vmem:[#allocation11 + $0x4a0] sm:$0xff]
    %v3577 = vld [vmem:[#allocation11 + $0x4a8] sm:$0xff]
    %v3578 = vld [vmem:[#allocation11 + $0x4b0] sm:$0xf]
    %v3579 = vld [vmem:[#allocation11 + $0x4b4] sm:$0xff]
    %v3580 = vld [vmem:[#allocation11 + $0x4bc] sm:$0xff]
    %v3581 = vld [vmem:[#allocation11 + $0x4c4] sm:$0xff]
    %v3582 = vld [vmem:[#allocation11 + $0x4cc] sm:$0xf]
    %v3583 = vld [vmem:[#allocation11 + $0x4d0] sm:$0xff]
    %v3584 = vld [vmem:[#allocation11 + $0x4d8] sm:$0xff]
    %v3585 = vld [vmem:[#allocation11 + $0x4e0] sm:$0xff]
    %v3586 = vld [vmem:[#allocation11 + $0x4e8] sm:$0xf]
    %v3587 = vld [vmem:[#allocation11 + $0x4ec] sm:$0xff]
    %v3588 = vld [vmem:[#allocation11 + $0x4f4] sm:$0xff]
    %v3589 = vld [vmem:[#allocation11 + $0x4fc] sm:$0xff]
    %v3590 = vld [vmem:[#allocation11 + $0x504] sm:$0xf]
    %v3591 = vld [vmem:[#allocation11 + $0x508] sm:$0xff]
    %v3592 = vld [vmem:[#allocation11 + $0x510] sm:$0xff]
    %v3593 = vld [vmem:[#allocation11 + $0x518] sm:$0xff]
    %v3594 = vld [vmem:[#allocation11 + $0x520] sm:$0xf]
    %v3595 = vld [vmem:[#allocation11 + $0x524] sm:$0xff]
    %v3596 = vld [vmem:[#allocation11 + $0x52c] sm:$0xff]
    %v3597 = vld [vmem:[#allocation11 + $0x534] sm:$0xff]
    %v3598 = vld [vmem:[#allocation11 + $0x53c] sm:$0xf]
    %v3599 = vld [vmem:[#allocation11 + $0x540] sm:$0xff]
    %v3600 = vld [vmem:[#allocation11 + $0x548] sm:$0xff]
    %v3601 = vld [vmem:[#allocation11 + $0x550] sm:$0xff]
    %v3602 = vld [vmem:[#allocation11 + $0x558] sm:$0xf]
    %v3603 = vld [vmem:[#allocation11 + $0x55c] sm:$0xff]
    %v3604 = vld [vmem:[#allocation11 + $0x564] sm:$0xff]
    %v3605 = vld [vmem:[#allocation11 + $0x56c] sm:$0xff]
    %v3606 = vld [vmem:[#allocation11 + $0x574] sm:$0xf]
    %v3607 = vld [vmem:[#allocation11 + $0x578] sm:$0xff]
    %v3608 = vld [vmem:[#allocation11 + $0x580] sm:$0xff]
    %v3609 = vld [vmem:[#allocation11 + $0x588] sm:$0xff]
    %v3610 = vld [vmem:[#allocation11 + $0x590] sm:$0xf]
    %v3611 = vld [vmem:[#allocation11 + $0x594] sm:$0xff]
    %v3612 = vld [vmem:[#allocation11 + $0x59c] sm:$0xff]
    %v3613 = vld [vmem:[#allocation11 + $0x5a4] sm:$0xff]
    %v3614 = vld [vmem:[#allocation11 + $0x5ac] sm:$0xf]
    %v3615 = vld [vmem:[#allocation11 + $0x5b0] sm:$0xff]
    %v3616 = vld [vmem:[#allocation11 + $0x5b8] sm:$0xff]
    %v3617 = vld [vmem:[#allocation11 + $0x5c0] sm:$0xff]
    %v3618 = vld [vmem:[#allocation11 + $0x5c8] sm:$0xf]
    %v3619 = vld [vmem:[#allocation11 + $0x5cc] sm:$0xff]
    %v3620 = vld [vmem:[#allocation11 + $0x5d4] sm:$0xff]
    %v3621 = vld [vmem:[#allocation11 + $0x5dc] sm:$0xff]
    %v3622 = vld [vmem:[#allocation11 + $0x5e4] sm:$0xf]
    %v3623 = vld [vmem:[#allocation11 + $0x5e8] sm:$0xff]
    %v3624 = vld [vmem:[#allocation11 + $0x5f0] sm:$0xff]
    %v3625 = vld [vmem:[#allocation11 + $0x5f8] sm:$0xff]
    %v3626 = vld [vmem:[#allocation11 + $0x600] sm:$0xf]
    %v3627 = vld [vmem:[#allocation11 + $0x604] sm:$0xff]
    %v3628 = vld [vmem:[#allocation11 + $0x60c] sm:$0xff]
    %v3629 = vld [vmem:[#allocation11 + $0x614] sm:$0xff]
    %v3630 = vld [vmem:[#allocation11 + $0x61c] sm:$0xf]
    %v3631 = vld [vmem:[#allocation11 + $0x620] sm:$0xff]
    %v3632 = vld [vmem:[#allocation11 + $0x628] sm:$0xff]
    %v3633 = vld [vmem:[#allocation11 + $0x630] sm:$0xff]
    %v3634 = vld [vmem:[#allocation11 + $0x638] sm:$0xf]
    %v3635 = vld [vmem:[#allocation11 + $0x63c] sm:$0xff]
    %v3636 = vld [vmem:[#allocation11 + $0x644] sm:$0xff]
    %v3637 = vld [vmem:[#allocation11 + $0x64c] sm:$0xff]
    %v3638 = vld [vmem:[#allocation11 + $0x654] sm:$0xf]
    %v3639 = vld [vmem:[#allocation11 + $0x658] sm:$0xff]
    %v3640 = vld [vmem:[#allocation11 + $0x660] sm:$0xff]
    %v3641 = vld [vmem:[#allocation11 + $0x668] sm:$0xff]
    %v3642 = vld [vmem:[#allocation11 + $0x670] sm:$0xf]
    %v3643 = vld [vmem:[#allocation11 + $0x674] sm:$0xff]
    %v3644 = vld [vmem:[#allocation11 + $0x67c] sm:$0xff]
    %v3645 = vld [vmem:[#allocation11 + $0x684] sm:$0xff]
    %v3646 = vld [vmem:[#allocation11 + $0x68c] sm:$0xf]
    %v3647 = vld [vmem:[#allocation11 + $0x690] sm:$0xff]
    %v3648 = vld [vmem:[#allocation11 + $0x698] sm:$0xff]
    %v3649 = vld [vmem:[#allocation11 + $0x6a0] sm:$0xff]
    %v3650 = vld [vmem:[#allocation11 + $0x6a8] sm:$0xf]
    %v3651 = vld [vmem:[#allocation11 + $0x6ac] sm:$0xff]
    %v3652 = vld [vmem:[#allocation11 + $0x6b4] sm:$0xff]
    %v3653 = vld [vmem:[#allocation11 + $0x6bc] sm:$0xff]
    %v3654 = vld [vmem:[#allocation11 + $0x6c4] sm:$0xf]
    %v3655 = vld [vmem:[#allocation11 + $0x6c8] sm:$0xff]
    %v3656 = vld [vmem:[#allocation11 + $0x6d0] sm:$0xff]
    %v3657 = vld [vmem:[#allocation11 + $0x6d8] sm:$0xff]
    %v3658 = vld [vmem:[#allocation11 + $0x6e0] sm:$0xf]
    %v3659 = vld [vmem:[#allocation11 + $0x6e4] sm:$0xff]
    %v3660 = vld [vmem:[#allocation11 + $0x6ec] sm:$0xff]
    %v3661 = vld [vmem:[#allocation11 + $0x6f4] sm:$0xff]
    %v3662 = vld [vmem:[#allocation11 + $0x6fc] sm:$0xf]
    %v3663 = vld [vmem:[#allocation11 + $0x700] sm:$0xff]
    %v3664 = vld [vmem:[#allocation11 + $0x708] sm:$0xff]
    %v3665 = vld [vmem:[#allocation11 + $0x710] sm:$0xff]
    %v3666 = vld [vmem:[#allocation11 + $0x718] sm:$0xf]
    %v3667 = vld [vmem:[#allocation11 + $0x71c] sm:$0xff]
    %v3668 = vld [vmem:[#allocation11 + $0x724] sm:$0xff]
    %v3669 = vld [vmem:[#allocation11 + $0x72c] sm:$0xff]
    %v3670 = vld [vmem:[#allocation11 + $0x734] sm:$0xf]
    %v3671 = vld [vmem:[#allocation11 + $0x738] sm:$0xff]
    %v3672 = vld [vmem:[#allocation11 + $0x740] sm:$0xff]
    %v3673 = vld [vmem:[#allocation11 + $0x748] sm:$0xff]
    %v3674 = vld [vmem:[#allocation11 + $0x750] sm:$0xf]
    %v3675 = vld [vmem:[#allocation11 + $0x754] sm:$0xff]
    %v3676 = vld [vmem:[#allocation11 + $0x75c] sm:$0xff]
    %v3677 = vld [vmem:[#allocation11 + $0x764] sm:$0xff]
    %v3678 = vld [vmem:[#allocation11 + $0x76c] sm:$0xf]
    %v3679 = vld [vmem:[#allocation11 + $0x770] sm:$0xff]
    %v3680 = vld [vmem:[#allocation11 + $0x778] sm:$0xff]
    %v3681 = vld [vmem:[#allocation11 + $0x780] sm:$0xff]
    %v3682 = vld [vmem:[#allocation11 + $0x788] sm:$0xf]
    %v3683 = vld [vmem:[#allocation11 + $0x78c] sm:$0xff]
    %v3684 = vld [vmem:[#allocation11 + $0x794] sm:$0xff]
    %v3685 = vld [vmem:[#allocation11 + $0x79c] sm:$0xff]
    %v3686 = vld [vmem:[#allocation11 + $0x7a4] sm:$0xf]
    %v3687 = vld [vmem:[#allocation11 + $0x7a8] sm:$0xff]
    %v3688 = vld [vmem:[#allocation11 + $0x7b0] sm:$0xff]
    %v3689 = vld [vmem:[#allocation11 + $0x7b8] sm:$0xff]
    %v3690 = vld [vmem:[#allocation11 + $0x7c0] sm:$0xf]
    %v3691 = vld [vmem:[#allocation11 + $0x7c4] sm:$0xff]
    %v3692 = vld [vmem:[#allocation11 + $0x7cc] sm:$0xff]
    %v3693 = vld [vmem:[#allocation11 + $0x7d4] sm:$0xff]
    %v3694 = vld [vmem:[#allocation11 + $0x7dc] sm:$0xf]
    %v3695 = vld [vmem:[#allocation11 + $0x7e0] sm:$0xff]
    %v3696 = vld [vmem:[#allocation11 + $0x7e8] sm:$0xff]
    %v3697 = vld [vmem:[#allocation11 + $0x7f0] sm:$0xff]
    %v3698 = vld [vmem:[#allocation11 + $0x7f8] sm:$0xf]
    %v3699 = vld [vmem:[#allocation11 + $0x7fc] sm:$0xff]
    %v3700 = vld [vmem:[#allocation11 + $0x804] sm:$0xff]
    %v3701 = vld [vmem:[#allocation11 + $0x80c] sm:$0xff]
    %v3702 = vld [vmem:[#allocation11 + $0x814] sm:$0xf]
    %v3703 = vld [vmem:[#allocation11 + $0x818] sm:$0xff]
    %v3704 = vld [vmem:[#allocation11 + $0x820] sm:$0xff]
    %v3705 = vld [vmem:[#allocation11 + $0x828] sm:$0xff]
    %v3706 = vld [vmem:[#allocation11 + $0x830] sm:$0xf]
    %v3707 = vld [vmem:[#allocation11 + $0x834] sm:$0xff]
    %v3708 = vld [vmem:[#allocation11 + $0x83c] sm:$0xff]
    %v3709 = vld [vmem:[#allocation11 + $0x844] sm:$0xff]
    %v3710 = vld [vmem:[#allocation11 + $0x84c] sm:$0xf]
    %v3711 = vld [vmem:[#allocation11 + $0x850] sm:$0xff]
    %v3712 = vld [vmem:[#allocation11 + $0x858] sm:$0xff]
    %v3713 = vld [vmem:[#allocation11 + $0x860] sm:$0xff]
    %v3714 = vld [vmem:[#allocation11 + $0x868] sm:$0xf]
    %v3715 = vld [vmem:[#allocation11 + $0x86c] sm:$0xff]
    %v3716 = vld [vmem:[#allocation11 + $0x874] sm:$0xff]
    %v3717 = vld [vmem:[#allocation11 + $0x87c] sm:$0xff]
    %v3718 = vld [vmem:[#allocation11 + $0x884] sm:$0xf]
    %v3719 = vld [vmem:[#allocation11 + $0x888] sm:$0xff]
    %v3720 = vld [vmem:[#allocation11 + $0x890] sm:$0xff]
    %v3721 = vld [vmem:[#allocation11 + $0x898] sm:$0xff]
    %v3722 = vld [vmem:[#allocation11 + $0x8a0] sm:$0xf]
    %v3723 = vld [vmem:[#allocation11 + $0x8a4] sm:$0xff]
    %v3724 = vld [vmem:[#allocation11 + $0x8ac] sm:$0xff]
    %v3725 = vld [vmem:[#allocation11 + $0x8b4] sm:$0xff]
    %v3726 = vld [vmem:[#allocation11 + $0x8bc] sm:$0xf]
    %v3727 = vld [vmem:[#allocation11 + $0x8c0] sm:$0xff]
    %v3728 = vld [vmem:[#allocation11 + $0x8c8] sm:$0xff]
    %v3729 = vld [vmem:[#allocation11 + $0x8d0] sm:$0xff]
    %v3730 = vld [vmem:[#allocation11 + $0x8d8] sm:$0xf]
    %v3731 = vld [vmem:[#allocation11 + $0x8dc] sm:$0xff]
    %v3732 = vld [vmem:[#allocation11 + $0x8e4] sm:$0xff]
    %v3733 = vld [vmem:[#allocation11 + $0x8ec] sm:$0xff]
    %v3734 = vld [vmem:[#allocation11 + $0x8f4] sm:$0xf]
    %v3735 = vld [vmem:[#allocation11 + $0x8f8] sm:$0xff]
    %v3736 = vld [vmem:[#allocation11 + $0x900] sm:$0xff]
    %v3737 = vld [vmem:[#allocation11 + $0x908] sm:$0xff]
    %v3738 = vld [vmem:[#allocation11 + $0x910] sm:$0xf]
    %v3739 = vld [vmem:[#allocation11 + $0x914] sm:$0xff]
    %v3740 = vld [vmem:[#allocation11 + $0x91c] sm:$0xff]
    %v3741 = vld [vmem:[#allocation11 + $0x924] sm:$0xff]
    %v3742 = vld [vmem:[#allocation11 + $0x92c] sm:$0xf]
    %v3743 = vld [vmem:[#allocation11 + $0x930] sm:$0xff]
    %v3744 = vld [vmem:[#allocation11 + $0x938] sm:$0xff]
    %v3745 = vld [vmem:[#allocation11 + $0x940] sm:$0xff]
    %v3746 = vld [vmem:[#allocation11 + $0x948] sm:$0xf]
    %v3747 = vld [vmem:[#allocation11 + $0x94c] sm:$0xff]
    %v3748 = vld [vmem:[#allocation11 + $0x954] sm:$0xff]
    %v3749 = vld [vmem:[#allocation11 + $0x95c] sm:$0xff]
    %v3750 = vld [vmem:[#allocation11 + $0x964] sm:$0xf]
    %v3751 = vld [vmem:[#allocation11 + $0x968] sm:$0xff]
    %v3752 = vld [vmem:[#allocation11 + $0x970] sm:$0xff]
    %v3753 = vld [vmem:[#allocation11 + $0x978] sm:$0xff]
    %v3754 = vld [vmem:[#allocation11 + $0x980] sm:$0xf]
    %v3755 = vld [vmem:[#allocation11 + $0x984] sm:$0xff]
    %v3756 = vld [vmem:[#allocation11 + $0x98c] sm:$0xff]
    %v3757 = vld [vmem:[#allocation11 + $0x994] sm:$0xff]
    %v3758 = vld [vmem:[#allocation11 + $0x99c] sm:$0xf]
    %v3759 = vld [vmem:[#allocation11 + $0x9a0] sm:$0xff]
    %v3760 = vld [vmem:[#allocation11 + $0x9a8] sm:$0xff]
    %v3761 = vld [vmem:[#allocation11 + $0x9b0] sm:$0xff]
    %v3762 = vld [vmem:[#allocation11 + $0x9b8] sm:$0xf]
    %v3763 = vld [vmem:[#allocation11 + $0x9bc] sm:$0xff]
    %v3764 = vld [vmem:[#allocation11 + $0x9c4] sm:$0xff]
    %v3765 = vld [vmem:[#allocation11 + $0x9cc] sm:$0xff]
    %v3766 = vld [vmem:[#allocation11 + $0x9d4] sm:$0xf]
    %v3767 = vld [vmem:[#allocation11 + $0x9d8] sm:$0xff]
    %v3768 = vld [vmem:[#allocation11 + $0x9e0] sm:$0xff]
    %v3769 = vld [vmem:[#allocation11 + $0x9e8] sm:$0xff]
    %v3770 = vld [vmem:[#allocation11 + $0x9f0] sm:$0xf]
    %v3771 = vld [vmem:[#allocation11 + $0x9f4] sm:$0xff]
    %v3772 = vld [vmem:[#allocation11 + $0x9fc] sm:$0xff]
    %v3773 = vld [vmem:[#allocation11 + $0xa04] sm:$0xff]
    %v3774 = vld [vmem:[#allocation11 + $0xa0c] sm:$0xf]
    %v3775 = vld [vmem:[#allocation11 + $0xa10] sm:$0xff]
    %v3776 = vld [vmem:[#allocation11 + $0xa18] sm:$0xff]
    %v3777 = vld [vmem:[#allocation11 + $0xa20] sm:$0xff]
    %v3778 = vld [vmem:[#allocation11 + $0xa28] sm:$0xf]
    %v3779 = vld [vmem:[#allocation11 + $0xa2c] sm:$0xff]
    %v3780 = vld [vmem:[#allocation11 + $0xa34] sm:$0xff]
    %v3781 = vld [vmem:[#allocation11 + $0xa3c] sm:$0xff]
    %v3782 = vld [vmem:[#allocation11 + $0xa44] sm:$0xf]
    %v3783 = vld [vmem:[#allocation11 + $0xa48] sm:$0xff]
    %v3784 = vld [vmem:[#allocation11 + $0xa50] sm:$0xff]
    %v3785 = vld [vmem:[#allocation11 + $0xa58] sm:$0xff]
    %v3786 = vld [vmem:[#allocation11 + $0xa60] sm:$0xf]
    %v3787 = vld [vmem:[#allocation11 + $0xa64] sm:$0xff]
    %v3788 = vld [vmem:[#allocation11 + $0xa6c] sm:$0xff]
    %v3789 = vld [vmem:[#allocation11 + $0xa74] sm:$0xff]
    %v3790 = vld [vmem:[#allocation11 + $0xa7c] sm:$0xf]
    %v3791 = vld [vmem:[#allocation11 + $0xa80] sm:$0xff]
    %v3792 = vld [vmem:[#allocation11 + $0xa88] sm:$0xff]
    %v3793 = vld [vmem:[#allocation11 + $0xa90] sm:$0xff]
    %v3794 = vld [vmem:[#allocation11 + $0xa98] sm:$0xf]
    %v3795 = vld [vmem:[#allocation11 + $0xa9c] sm:$0xff]
    %v3796 = vld [vmem:[#allocation11 + $0xaa4] sm:$0xff]
    %v3797 = vld [vmem:[#allocation11 + $0xaac] sm:$0xff]
    %v3798 = vld [vmem:[#allocation11 + $0xab4] sm:$0xf]
    %v3799 = vld [vmem:[#allocation11 + $0xab8] sm:$0xff]
    %v3800 = vld [vmem:[#allocation11 + $0xac0] sm:$0xff]
    %v3801 = vld [vmem:[#allocation11 + $0xac8] sm:$0xff]
    %v3802 = vld [vmem:[#allocation11 + $0xad0] sm:$0xf]
    %v3803 = vld [vmem:[#allocation11 + $0xad4] sm:$0xff]
    %v3804 = vld [vmem:[#allocation11 + $0xadc] sm:$0xff]
    %v3805 = vld [vmem:[#allocation11 + $0xae4] sm:$0xff]
    %v3806 = vld [vmem:[#allocation11 + $0xaec] sm:$0xf]
    %v3807 = vld [vmem:[#allocation11 + $0xaf0] sm:$0xff]
    %v3808 = vld [vmem:[#allocation11 + $0xaf8] sm:$0xff]
    %v3809 = vld [vmem:[#allocation11 + $0xb00] sm:$0xff]
    %v3810 = vld [vmem:[#allocation11 + $0xb08] sm:$0xf]
    %v3811 = vld [vmem:[#allocation11 + $0xb0c] sm:$0xff]
    %v3812 = vld [vmem:[#allocation11 + $0xb14] sm:$0xff]
    %v3813 = vld [vmem:[#allocation11 + $0xb1c] sm:$0xff]
    %v3814 = vld [vmem:[#allocation11 + $0xb24] sm:$0xf]
    %v3815 = vld [vmem:[#allocation11 + $0xb28] sm:$0xff]
    %v3816 = vld [vmem:[#allocation11 + $0xb30] sm:$0xff]
    %v3817 = vld [vmem:[#allocation11 + $0xb38] sm:$0xff]
    %v3818 = vld [vmem:[#allocation11 + $0xb40] sm:$0xf]
    %v3819 = vld [vmem:[#allocation11 + $0xb44] sm:$0xff]
    %v3820 = vld [vmem:[#allocation11 + $0xb4c] sm:$0xff]
    %v3821 = vld [vmem:[#allocation11 + $0xb54] sm:$0xff]
    %v3822 = vld [vmem:[#allocation11 + $0xb5c] sm:$0xf]
    %v3823 = vld [vmem:[#allocation11 + $0xb60] sm:$0xff]
    %v3824 = vld [vmem:[#allocation11 + $0xb68] sm:$0xff]
    %v3825 = vld [vmem:[#allocation11 + $0xb70] sm:$0xff]
    %v3826 = vld [vmem:[#allocation11 + $0xb78] sm:$0xf]
    %v3827 = vld [vmem:[#allocation11 + $0xb7c] sm:$0xff]
    %v3828 = vld [vmem:[#allocation11 + $0xb84] sm:$0xff]
    %v3829 = vld [vmem:[#allocation11 + $0xb8c] sm:$0xff]
    %v3830 = vld [vmem:[#allocation11 + $0xb94] sm:$0xf]
    %v3831 = vld [vmem:[#allocation11 + $0xb98] sm:$0xff]
    %v3832 = vld [vmem:[#allocation11 + $0xba0] sm:$0xff]
    %v3833 = vld [vmem:[#allocation11 + $0xba8] sm:$0xff]
    %v3834 = vld [vmem:[#allocation11 + $0xbb0] sm:$0xf]
    %v3835 = vld [vmem:[#allocation11 + $0xbb4] sm:$0xff]
    %v3836 = vld [vmem:[#allocation11 + $0xbbc] sm:$0xff]
    %v3837 = vld [vmem:[#allocation11 + $0xbc4] sm:$0xff]
    %v3838 = vld [vmem:[#allocation11 + $0xbcc] sm:$0xf]
    %v3839 = vld [vmem:[#allocation11 + $0xbd0] sm:$0xff]
    %v3840 = vld [vmem:[#allocation11 + $0xbd8] sm:$0xff]
    %v3841 = vld [vmem:[#allocation11 + $0xbe0] sm:$0xff]
    %v3842 = vld [vmem:[#allocation11 + $0xbe8] sm:$0xf]
    %v3843 = vld [vmem:[#allocation11 + $0xbec] sm:$0xff]
    %v3844 = vld [vmem:[#allocation11 + $0xbf4] sm:$0xff]
    %v3845 = vld [vmem:[#allocation11 + $0xbfc] sm:$0xff]
    %v3846 = vld [vmem:[#allocation11 + $0xc04] sm:$0xf]
    %v3847 = vld [vmem:[#allocation11 + $0xc08] sm:$0xff]
    %v3848 = vld [vmem:[#allocation11 + $0xc10] sm:$0xff]
    %v3849 = vld [vmem:[#allocation11 + $0xc18] sm:$0xff]
    %v3850 = vld [vmem:[#allocation11 + $0xc20] sm:$0xf]
    %v3851 = vld [vmem:[#allocation11 + $0xc24] sm:$0xff]
    %v3852 = vld [vmem:[#allocation11 + $0xc2c] sm:$0xff]
    %v3853 = vld [vmem:[#allocation11 + $0xc34] sm:$0xff]
    %v3854 = vld [vmem:[#allocation11 + $0xc3c] sm:$0xf]
    %v3855 = vld [vmem:[#allocation11 + $0xc40] sm:$0xff]
    %v3856 = vld [vmem:[#allocation11 + $0xc48] sm:$0xff]
    %v3857 = vld [vmem:[#allocation11 + $0xc50] sm:$0xff]
    %v3858 = vld [vmem:[#allocation11 + $0xc58] sm:$0xf]
    %v3859 = vld [vmem:[#allocation11 + $0xc5c] sm:$0xff]
    %v3860 = vld [vmem:[#allocation11 + $0xc64] sm:$0xff]
    %v3861 = vld [vmem:[#allocation11 + $0xc6c] sm:$0xff]
    %v3862 = vld [vmem:[#allocation11 + $0xc74] sm:$0xf]
    %v3863 = vld [vmem:[#allocation11 + $0xc78] sm:$0xff]
    %v3864 = vld [vmem:[#allocation11 + $0xc80] sm:$0xff]
    %v3865 = vld [vmem:[#allocation11 + $0xc88] sm:$0xff]
    %v3866 = vld [vmem:[#allocation11 + $0xc90] sm:$0xf]
    %v3867 = vld [vmem:[#allocation11 + $0xc94] sm:$0xff]
    %v3868 = vld [vmem:[#allocation11 + $0xc9c] sm:$0xff]
    %v3869 = vld [vmem:[#allocation11 + $0xca4] sm:$0xff]
    %v3870 = vld [vmem:[#allocation11 + $0xcac] sm:$0xf]
    %v3871 = vld [vmem:[#allocation11 + $0xcb0] sm:$0xff]
    %v3872 = vld [vmem:[#allocation11 + $0xcb8] sm:$0xff]
    %v3873 = vld [vmem:[#allocation11 + $0xcc0] sm:$0xff]
    %v3874 = vld [vmem:[#allocation11 + $0xcc8] sm:$0xf]
    %v3875 = vld [vmem:[#allocation11 + $0xccc] sm:$0xff]
    %v3876 = vld [vmem:[#allocation11 + $0xcd4] sm:$0xff]
    %v3877 = vld [vmem:[#allocation11 + $0xcdc] sm:$0xff]
    %v3878 = vld [vmem:[#allocation11 + $0xce4] sm:$0xf]
    %v3879 = vld [vmem:[#allocation11 + $0xce8] sm:$0xff]
    %v3880 = vld [vmem:[#allocation11 + $0xcf0] sm:$0xff]
    %v3881 = vld [vmem:[#allocation11 + $0xcf8] sm:$0xff]
    %v3882 = vld [vmem:[#allocation11 + $0xd00] sm:$0xf]
    %v3883 = vld [vmem:[#allocation11 + $0xd04] sm:$0xff]
    %v3884 = vld [vmem:[#allocation11 + $0xd0c] sm:$0xff]
    %v3885 = vld [vmem:[#allocation11 + $0xd14] sm:$0xff]
    %v3886 = vld [vmem:[#allocation11 + $0xd1c] sm:$0xf]
    %v3887 = vld [vmem:[#allocation11 + $0xd20] sm:$0xff]
    %v3888 = vld [vmem:[#allocation11 + $0xd28] sm:$0xff]
    %v3889 = vld [vmem:[#allocation11 + $0xd30] sm:$0xff]
    %v3890 = vld [vmem:[#allocation11 + $0xd38] sm:$0xf]
    %v3891 = vld [vmem:[#allocation11 + $0xd3c] sm:$0xff]
    %v3892 = vld [vmem:[#allocation11 + $0xd44] sm:$0xff]
    %v3893 = vld [vmem:[#allocation11 + $0xd4c] sm:$0xff]
    %v3894 = vld [vmem:[#allocation11 + $0xd54] sm:$0xf]
    %v3895 = vld [vmem:[#allocation11 + $0xd58] sm:$0xff]
    %v3896 = vld [vmem:[#allocation11 + $0xd60] sm:$0xff]
    %v3897 = vld [vmem:[#allocation11 + $0xd68] sm:$0xff]
    %v3898 = vld [vmem:[#allocation11 + $0xd70] sm:$0xf]
    %v3899 = vld [vmem:[#allocation11 + $0xd74] sm:$0xff]
    %v3900 = vld [vmem:[#allocation11 + $0xd7c] sm:$0xff]
    %v3901 = vld [vmem:[#allocation11 + $0xd84] sm:$0xff]
    %v3902 = vld [vmem:[#allocation11 + $0xd8c] sm:$0xf]
    %v3903 = vld [vmem:[#allocation11 + $0xd90] sm:$0xff]
    %v3904 = vld [vmem:[#allocation11 + $0xd98] sm:$0xff]
    %v3905 = vld [vmem:[#allocation11 + $0xda0] sm:$0xff]
    %v3906 = vld [vmem:[#allocation11 + $0xda8] sm:$0xf]
    %v3907 = vld [vmem:[#allocation11 + $0xdac] sm:$0xff]
    %v3908 = vld [vmem:[#allocation11 + $0xdb4] sm:$0xff]
    %v3909 = vld [vmem:[#allocation11 + $0xdbc] sm:$0xff]
    %v3910 = vld [vmem:[#allocation11 + $0xdc4] sm:$0xf]
    %v3911 = vld [vmem:[#allocation11 + $0xdc8] sm:$0xff]
    %v3912 = vld [vmem:[#allocation11 + $0xdd0] sm:$0xff]
    %v3913 = vld [vmem:[#allocation11 + $0xdd8] sm:$0xff]
    %v3914 = vld [vmem:[#allocation11 + $0xde0] sm:$0xf]
    %v3915 = vld [vmem:[#allocation11 + $0xde4] sm:$0xff]
    %v3916 = vld [vmem:[#allocation11 + $0xdec] sm:$0xff]
    %v3917 = vld [vmem:[#allocation11 + $0xdf4] sm:$0xff]
    %v3918 = vld [vmem:[#allocation11 + $0xdfc] sm:$0xf]
    %v3919 = vld [vmem:[#allocation13 + $0x1] sm:$0xff]
    %v3921 = vlaneseq
    %v3922 = vshrl.u32 %v3921, 7
    %v3923 = vsub.s32 0, %v3922
    %v3924 = vrot.slane %v3919, %v3923
    %v3925 = vlaneseq
    %v3926 = vshrl.u32 %v3925, 7
    %v3927 = vsub.s32 1, %v3926
    %v3928 = vrot.slane %v3919, %v3927
    %v3929 = vlaneseq
    %v3930 = vshrl.u32 %v3929, 7
    %v3931 = vsub.s32 2, %v3930
    %v3932 = vrot.slane %v3919, %v3931
    %v3933 = vlaneseq
    %v3934 = vshrl.u32 %v3933, 7
    %v3935 = vsub.s32 3, %v3934
    %v3936 = vrot.slane %v3919, %v3935
    %v3937 = vlaneseq
    %v3938 = vshrl.u32 %v3937, 7
    %v3939 = vsub.s32 4, %v3938
    %v3940 = vrot.slane %v3919, %v3939
    %v3941 = vlaneseq
    %v3942 = vshrl.u32 %v3941, 7
    %v3943 = vsub.s32 5, %v3942
    %v3944 = vrot.slane %v3919, %v3943
    %v3945 = vlaneseq
    %v3946 = vshrl.u32 %v3945, 7
    %v3947 = vsub.s32 6, %v3946
    %v3948 = vrot.slane %v3919, %v3947
    %v4468 = vunpack.c.l.b16 %v3407
    %v4469 = vunpack.c.h.b16 %v3407
    %v4470 = vunpack.c.l.b16 %v3408
    %v4471 = vunpack.c.h.b16 %v3408
    %v4472 = vunpack.c.l.b16 %v3409
    %v4473 = vunpack.c.h.b16 %v3409
    %v4474 = vunpack.c.l.b16 %v3410
    %v4475 = vunpack.c.l.b16 %v3411
    %v4476 = vunpack.c.h.b16 %v3411
    %v4477 = vunpack.c.l.b16 %v3412
    %v4478 = vunpack.c.h.b16 %v3412
    %v4479 = vunpack.c.l.b16 %v3413
    %v4480 = vunpack.c.h.b16 %v3413
    %v4481 = vunpack.c.l.b16 %v3414
    %v4482 = vunpack.c.l.b16 %v3415
    %v4483 = vunpack.c.h.b16 %v3415
    %v4484 = vunpack.c.l.b16 %v3416
    %v4485 = vunpack.c.h.b16 %v3416
    %v4486 = vunpack.c.l.b16 %v3417
    %v4487 = vunpack.c.h.b16 %v3417
    %v4488 = vunpack.c.l.b16 %v3418
    %v4489 = vunpack.c.l.b16 %v3419
    %v4490 = vunpack.c.h.b16 %v3419
    %v4491 = vunpack.c.l.b16 %v3420
    %v4492 = vunpack.c.h.b16 %v3420
    %v4493 = vunpack.c.l.b16 %v3421
    %v4494 = vunpack.c.h.b16 %v3421
    %v4495 = vunpack.c.l.b16 %v3422
    %v4496 = vunpack.c.l.b16 %v3423
    %v4497 = vunpack.c.h.b16 %v3423
    %v4498 = vunpack.c.l.b16 %v3424
    %v4499 = vunpack.c.h.b16 %v3424
    %v4500 = vunpack.c.l.b16 %v3425
    %v4501 = vunpack.c.h.b16 %v3425
    %v4502 = vunpack.c.l.b16 %v3426
    %v4503 = vunpack.c.l.b16 %v3427
    %v4504 = vunpack.c.h.b16 %v3427
    %v4505 = vunpack.c.l.b16 %v3428
    %v4506 = vunpack.c.h.b16 %v3428
    %v4507 = vunpack.c.l.b16 %v3429
    %v4508 = vunpack.c.h.b16 %v3429
    %v4509 = vunpack.c.l.b16 %v3430
    %v4510 = vunpack.c.l.b16 %v3431
    %v4511 = vunpack.c.h.b16 %v3431
    %v4512 = vunpack.c.l.b16 %v3432
    %v4513 = vunpack.c.h.b16 %v3432
    %v4514 = vunpack.c.l.b16 %v3433
    %v4515 = vunpack.c.h.b16 %v3433
    %v4516 = vunpack.c.l.b16 %v3434
    %v4517 = vunpack.c.l.b16 %v3435
    %v4518 = vunpack.c.h.b16 %v3435
    %v4519 = vunpack.c.l.b16 %v3436
    %v4520 = vunpack.c.h.b16 %v3436
    %v4521 = vunpack.c.l.b16 %v3437
    %v4522 = vunpack.c.h.b16 %v3437
    %v4523 = vunpack.c.l.b16 %v3438
    %v4524 = vunpack.c.l.b16 %v3439
    %v4525 = vunpack.c.h.b16 %v3439
    %v4526 = vunpack.c.l.b16 %v3440
    %v4527 = vunpack.c.h.b16 %v3440
    %v4528 = vunpack.c.l.b16 %v3441
    %v4529 = vunpack.c.h.b16 %v3441
    %v4530 = vunpack.c.l.b16 %v3442
    %v4531 = vunpack.c.l.b16 %v3443
    %v4532 = vunpack.c.h.b16 %v3443
    %v4533 = vunpack.c.l.b16 %v3444
    %v4534 = vunpack.c.h.b16 %v3444
    %v4535 = vunpack.c.l.b16 %v3445
    %v4536 = vunpack.c.h.b16 %v3445
    %v4537 = vunpack.c.l.b16 %v3446
    %v4538 = vunpack.c.l.b16 %v3447
    %v4539 = vunpack.c.h.b16 %v3447
    %v4540 = vunpack.c.l.b16 %v3448
    %v4541 = vunpack.c.h.b16 %v3448
    %v4542 = vunpack.c.l.b16 %v3449
    %v4543 = vunpack.c.h.b16 %v3449
    %v4544 = vunpack.c.l.b16 %v3450
    %v4545 = vunpack.c.l.b16 %v3451
    %v4546 = vunpack.c.h.b16 %v3451
    %v4547 = vunpack.c.l.b16 %v3452
    %v4548 = vunpack.c.h.b16 %v3452
    %v4549 = vunpack.c.l.b16 %v3453
    %v4550 = vunpack.c.h.b16 %v3453
    %v4551 = vunpack.c.l.b16 %v3454
    %v4552 = vunpack.c.l.b16 %v3455
    %v4553 = vunpack.c.h.b16 %v3455
    %v4554 = vunpack.c.l.b16 %v3456
    %v4555 = vunpack.c.h.b16 %v3456
    %v4556 = vunpack.c.l.b16 %v3457
    %v4557 = vunpack.c.h.b16 %v3457
    %v4558 = vunpack.c.l.b16 %v3458
    %v4559 = vunpack.c.l.b16 %v3459
    %v4560 = vunpack.c.h.b16 %v3459
    %v4561 = vunpack.c.l.b16 %v3460
    %v4562 = vunpack.c.h.b16 %v3460
    %v4563 = vunpack.c.l.b16 %v3461
    %v4564 = vunpack.c.h.b16 %v3461
    %v4565 = vunpack.c.l.b16 %v3462
    %v4566 = vunpack.c.l.b16 %v3463
    %v4567 = vunpack.c.h.b16 %v3463
    %v4568 = vunpack.c.l.b16 %v3464
    %v4569 = vunpack.c.h.b16 %v3464
    %v4570 = vunpack.c.l.b16 %v3465
    %v4571 = vunpack.c.h.b16 %v3465
    %v4572 = vunpack.c.l.b16 %v3466
    %v4573 = vunpack.c.l.b16 %v3467
    %v4574 = vunpack.c.h.b16 %v3467
    %v4575 = vunpack.c.l.b16 %v3468
    %v4576 = vunpack.c.h.b16 %v3468
    %v4577 = vunpack.c.l.b16 %v3469
    %v4578 = vunpack.c.h.b16 %v3469
    %v4579 = vunpack.c.l.b16 %v3470
    %v4580 = vunpack.c.l.b16 %v3471
    %v4581 = vunpack.c.h.b16 %v3471
    %v4582 = vunpack.c.l.b16 %v3472
    %v4583 = vunpack.c.h.b16 %v3472
    %v4584 = vunpack.c.l.b16 %v3473
    %v4585 = vunpack.c.h.b16 %v3473
    %v4586 = vunpack.c.l.b16 %v3474
    %v4587 = vunpack.c.l.b16 %v3475
    %v4588 = vunpack.c.h.b16 %v3475
    %v4589 = vunpack.c.l.b16 %v3476
    %v4590 = vunpack.c.h.b16 %v3476
    %v4591 = vunpack.c.l.b16 %v3477
    %v4592 = vunpack.c.h.b16 %v3477
    %v4593 = vunpack.c.l.b16 %v3478
    %v4594 = vunpack.c.l.b16 %v3479
    %v4595 = vunpack.c.h.b16 %v3479
    %v4596 = vunpack.c.l.b16 %v3480
    %v4597 = vunpack.c.h.b16 %v3480
    %v4598 = vunpack.c.l.b16 %v3481
    %v4599 = vunpack.c.h.b16 %v3481
    %v4600 = vunpack.c.l.b16 %v3482
    %v4601 = vunpack.c.l.b16 %v3483
    %v4602 = vunpack.c.h.b16 %v3483
    %v4603 = vunpack.c.l.b16 %v3484
    %v4604 = vunpack.c.h.b16 %v3484
    %v4605 = vunpack.c.l.b16 %v3485
    %v4606 = vunpack.c.h.b16 %v3485
    %v4607 = vunpack.c.l.b16 %v3486
    %v4608 = vunpack.c.l.b16 %v3487
    %v4609 = vunpack.c.h.b16 %v3487
    %v4610 = vunpack.c.l.b16 %v3488
    %v4611 = vunpack.c.h.b16 %v3488
    %v4612 = vunpack.c.l.b16 %v3489
    %v4613 = vunpack.c.h.b16 %v3489
    %v4614 = vunpack.c.l.b16 %v3490
    %v4615 = vunpack.c.l.b16 %v3491
    %v4616 = vunpack.c.h.b16 %v3491
    %v4617 = vunpack.c.l.b16 %v3492
    %v4618 = vunpack.c.h.b16 %v3492
    %v4619 = vunpack.c.l.b16 %v3493
    %v4620 = vunpack.c.h.b16 %v3493
    %v4621 = vunpack.c.l.b16 %v3494
    %v4622 = vunpack.c.l.b16 %v3495
    %v4623 = vunpack.c.h.b16 %v3495
    %v4624 = vunpack.c.l.b16 %v3496
    %v4625 = vunpack.c.h.b16 %v3496
    %v4626 = vunpack.c.l.b16 %v3497
    %v4627 = vunpack.c.h.b16 %v3497
    %v4628 = vunpack.c.l.b16 %v3498
    %v4629 = vunpack.c.l.b16 %v3499
    %v4630 = vunpack.c.h.b16 %v3499
    %v4631 = vunpack.c.l.b16 %v3500
    %v4632 = vunpack.c.h.b16 %v3500
    %v4633 = vunpack.c.l.b16 %v3501
    %v4634 = vunpack.c.h.b16 %v3501
    %v4635 = vunpack.c.l.b16 %v3502
    %v4636 = vunpack.c.l.b16 %v3503
    %v4637 = vunpack.c.h.b16 %v3503
    %v4638 = vunpack.c.l.b16 %v3504
    %v4639 = vunpack.c.h.b16 %v3504
    %v4640 = vunpack.c.l.b16 %v3505
    %v4641 = vunpack.c.h.b16 %v3505
    %v4642 = vunpack.c.l.b16 %v3506
    %v4643 = vunpack.c.l.b16 %v3507
    %v4644 = vunpack.c.h.b16 %v3507
    %v4645 = vunpack.c.l.b16 %v3508
    %v4646 = vunpack.c.h.b16 %v3508
    %v4647 = vunpack.c.l.b16 %v3509
    %v4648 = vunpack.c.h.b16 %v3509
    %v4649 = vunpack.c.l.b16 %v3510
    %v4650 = vunpack.c.l.b16 %v3511
    %v4651 = vunpack.c.h.b16 %v3511
    %v4652 = vunpack.c.l.b16 %v3512
    %v4653 = vunpack.c.h.b16 %v3512
    %v4654 = vunpack.c.l.b16 %v3513
    %v4655 = vunpack.c.h.b16 %v3513
    %v4656 = vunpack.c.l.b16 %v3514
    %v4657 = vunpack.c.l.b16 %v3515
    %v4658 = vunpack.c.h.b16 %v3515
    %v4659 = vunpack.c.l.b16 %v3516
    %v4660 = vunpack.c.h.b16 %v3516
    %v4661 = vunpack.c.l.b16 %v3517
    %v4662 = vunpack.c.h.b16 %v3517
    %v4663 = vunpack.c.l.b16 %v3518
    %v4664 = vunpack.c.l.b16 %v3519
    %v4665 = vunpack.c.h.b16 %v3519
    %v4666 = vunpack.c.l.b16 %v3520
    %v4667 = vunpack.c.h.b16 %v3520
    %v4668 = vunpack.c.l.b16 %v3521
    %v4669 = vunpack.c.h.b16 %v3521
    %v4670 = vunpack.c.l.b16 %v3522
    %v4671 = vunpack.c.l.b16 %v3523
    %v4672 = vunpack.c.h.b16 %v3523
    %v4673 = vunpack.c.l.b16 %v3524
    %v4674 = vunpack.c.h.b16 %v3524
    %v4675 = vunpack.c.l.b16 %v3525
    %v4676 = vunpack.c.h.b16 %v3525
    %v4677 = vunpack.c.l.b16 %v3526
    %v4678 = vunpack.c.l.b16 %v3527
    %v4679 = vunpack.c.h.b16 %v3527
    %v4680 = vunpack.c.l.b16 %v3528
    %v4681 = vunpack.c.h.b16 %v3528
    %v4682 = vunpack.c.l.b16 %v3529
    %v4683 = vunpack.c.h.b16 %v3529
    %v4684 = vunpack.c.l.b16 %v3530
    %v4685 = vunpack.c.l.b16 %v3531
    %v4686 = vunpack.c.h.b16 %v3531
    %v4687 = vunpack.c.l.b16 %v3532
    %v4688 = vunpack.c.h.b16 %v3532
    %v4689 = vunpack.c.l.b16 %v3533
    %v4690 = vunpack.c.h.b16 %v3533
    %v4691 = vunpack.c.l.b16 %v3534
    %v4692 = vunpack.c.l.b16 %v3535
    %v4693 = vunpack.c.h.b16 %v3535
    %v4694 = vunpack.c.l.b16 %v3536
    %v4695 = vunpack.c.h.b16 %v3536
    %v4696 = vunpack.c.l.b16 %v3537
    %v4697 = vunpack.c.h.b16 %v3537
    %v4698 = vunpack.c.l.b16 %v3538
    %v4699 = vunpack.c.l.b16 %v3539
    %v4700 = vunpack.c.h.b16 %v3539
    %v4701 = vunpack.c.l.b16 %v3540
    %v4702 = vunpack.c.h.b16 %v3540
    %v4703 = vunpack.c.l.b16 %v3541
    %v4704 = vunpack.c.h.b16 %v3541
    %v4705 = vunpack.c.l.b16 %v3542
    %v4706 = vunpack.c.l.b16 %v3543
    %v4707 = vunpack.c.h.b16 %v3543
    %v4708 = vunpack.c.l.b16 %v3544
    %v4709 = vunpack.c.h.b16 %v3544
    %v4710 = vunpack.c.l.b16 %v3545
    %v4711 = vunpack.c.h.b16 %v3545
    %v4712 = vunpack.c.l.b16 %v3546
    %v4713 = vunpack.c.l.b16 %v3547
    %v4714 = vunpack.c.h.b16 %v3547
    %v4715 = vunpack.c.l.b16 %v3548
    %v4716 = vunpack.c.h.b16 %v3548
    %v4717 = vunpack.c.l.b16 %v3549
    %v4718 = vunpack.c.h.b16 %v3549
    %v4719 = vunpack.c.l.b16 %v3550
    %v4720 = vunpack.c.l.b16 %v3551
    %v4721 = vunpack.c.h.b16 %v3551
    %v4722 = vunpack.c.l.b16 %v3552
    %v4723 = vunpack.c.h.b16 %v3552
    %v4724 = vunpack.c.l.b16 %v3553
    %v4725 = vunpack.c.h.b16 %v3553
    %v4726 = vunpack.c.l.b16 %v3554
    %v4727 = vunpack.c.l.b16 %v3555
    %v4728 = vunpack.c.h.b16 %v3555
    %v4729 = vunpack.c.l.b16 %v3556
    %v4730 = vunpack.c.h.b16 %v3556
    %v4731 = vunpack.c.l.b16 %v3557
    %v4732 = vunpack.c.h.b16 %v3557
    %v4733 = vunpack.c.l.b16 %v3558
    %v4734 = vunpack.c.l.b16 %v3559
    %v4735 = vunpack.c.h.b16 %v3559
    %v4736 = vunpack.c.l.b16 %v3560
    %v4737 = vunpack.c.h.b16 %v3560
    %v4738 = vunpack.c.l.b16 %v3561
    %v4739 = vunpack.c.h.b16 %v3561
    %v4740 = vunpack.c.l.b16 %v3562
    %v4741 = vunpack.c.l.b16 %v3563
    %v4742 = vunpack.c.h.b16 %v3563
    %v4743 = vunpack.c.l.b16 %v3564
    %v4744 = vunpack.c.h.b16 %v3564
    %v4745 = vunpack.c.l.b16 %v3565
    %v4746 = vunpack.c.h.b16 %v3565
    %v4747 = vunpack.c.l.b16 %v3566
    %v4748 = vunpack.c.l.b16 %v3567
    %v4749 = vunpack.c.h.b16 %v3567
    %v4750 = vunpack.c.l.b16 %v3568
    %v4751 = vunpack.c.h.b16 %v3568
    %v4752 = vunpack.c.l.b16 %v3569
    %v4753 = vunpack.c.h.b16 %v3569
    %v4754 = vunpack.c.l.b16 %v3570
    %v4755 = vunpack.c.l.b16 %v3571
    %v4756 = vunpack.c.h.b16 %v3571
    %v4757 = vunpack.c.l.b16 %v3572
    %v4758 = vunpack.c.h.b16 %v3572
    %v4759 = vunpack.c.l.b16 %v3573
    %v4760 = vunpack.c.h.b16 %v3573
    %v4761 = vunpack.c.l.b16 %v3574
    %v4762 = vunpack.c.l.b16 %v3575
    %v4763 = vunpack.c.h.b16 %v3575
    %v4764 = vunpack.c.l.b16 %v3576
    %v4765 = vunpack.c.h.b16 %v3576
    %v4766 = vunpack.c.l.b16 %v3577
    %v4767 = vunpack.c.h.b16 %v3577
    %v4768 = vunpack.c.l.b16 %v3578
    %v4769 = vunpack.c.l.b16 %v3579
    %v4770 = vunpack.c.h.b16 %v3579
    %v4771 = vunpack.c.l.b16 %v3580
    %v4772 = vunpack.c.h.b16 %v3580
    %v4773 = vunpack.c.l.b16 %v3581
    %v4774 = vunpack.c.h.b16 %v3581
    %v4775 = vunpack.c.l.b16 %v3582
    %v4776 = vunpack.c.l.b16 %v3583
    %v4777 = vunpack.c.h.b16 %v3583
    %v4778 = vunpack.c.l.b16 %v3584
    %v4779 = vunpack.c.h.b16 %v3584
    %v4780 = vunpack.c.l.b16 %v3585
    %v4781 = vunpack.c.h.b16 %v3585
    %v4782 = vunpack.c.l.b16 %v3586
    %v4783 = vunpack.c.l.b16 %v3587
    %v4784 = vunpack.c.h.b16 %v3587
    %v4785 = vunpack.c.l.b16 %v3588
    %v4786 = vunpack.c.h.b16 %v3588
    %v4787 = vunpack.c.l.b16 %v3589
    %v4788 = vunpack.c.h.b16 %v3589
    %v4789 = vunpack.c.l.b16 %v3590
    %v4790 = vunpack.c.l.b16 %v3591
    %v4791 = vunpack.c.h.b16 %v3591
    %v4792 = vunpack.c.l.b16 %v3592
    %v4793 = vunpack.c.h.b16 %v3592
    %v4794 = vunpack.c.l.b16 %v3593
    %v4795 = vunpack.c.h.b16 %v3593
    %v4796 = vunpack.c.l.b16 %v3594
    %v4797 = vunpack.c.l.b16 %v3595
    %v4798 = vunpack.c.h.b16 %v3595
    %v4799 = vunpack.c.l.b16 %v3596
    %v4800 = vunpack.c.h.b16 %v3596
    %v4801 = vunpack.c.l.b16 %v3597
    %v4802 = vunpack.c.h.b16 %v3597
    %v4803 = vunpack.c.l.b16 %v3598
    %v4804 = vunpack.c.l.b16 %v3599
    %v4805 = vunpack.c.h.b16 %v3599
    %v4806 = vunpack.c.l.b16 %v3600
    %v4807 = vunpack.c.h.b16 %v3600
    %v4808 = vunpack.c.l.b16 %v3601
    %v4809 = vunpack.c.h.b16 %v3601
    %v4810 = vunpack.c.l.b16 %v3602
    %v4811 = vunpack.c.l.b16 %v3603
    %v4812 = vunpack.c.h.b16 %v3603
    %v4813 = vunpack.c.l.b16 %v3604
    %v4814 = vunpack.c.h.b16 %v3604
    %v4815 = vunpack.c.l.b16 %v3605
    %v4816 = vunpack.c.h.b16 %v3605
    %v4817 = vunpack.c.l.b16 %v3606
    %v4818 = vunpack.c.l.b16 %v3607
    %v4819 = vunpack.c.h.b16 %v3607
    %v4820 = vunpack.c.l.b16 %v3608
    %v4821 = vunpack.c.h.b16 %v3608
    %v4822 = vunpack.c.l.b16 %v3609
    %v4823 = vunpack.c.h.b16 %v3609
    %v4824 = vunpack.c.l.b16 %v3610
    %v4825 = vunpack.c.l.b16 %v3611
    %v4826 = vunpack.c.h.b16 %v3611
    %v4827 = vunpack.c.l.b16 %v3612
    %v4828 = vunpack.c.h.b16 %v3612
    %v4829 = vunpack.c.l.b16 %v3613
    %v4830 = vunpack.c.h.b16 %v3613
    %v4831 = vunpack.c.l.b16 %v3614
    %v4832 = vunpack.c.l.b16 %v3615
    %v4833 = vunpack.c.h.b16 %v3615
    %v4834 = vunpack.c.l.b16 %v3616
    %v4835 = vunpack.c.h.b16 %v3616
    %v4836 = vunpack.c.l.b16 %v3617
    %v4837 = vunpack.c.h.b16 %v3617
    %v4838 = vunpack.c.l.b16 %v3618
    %v4839 = vunpack.c.l.b16 %v3619
    %v4840 = vunpack.c.h.b16 %v3619
    %v4841 = vunpack.c.l.b16 %v3620
    %v4842 = vunpack.c.h.b16 %v3620
    %v4843 = vunpack.c.l.b16 %v3621
    %v4844 = vunpack.c.h.b16 %v3621
    %v4845 = vunpack.c.l.b16 %v3622
    %v4846 = vunpack.c.l.b16 %v3623
    %v4847 = vunpack.c.h.b16 %v3623
    %v4848 = vunpack.c.l.b16 %v3624
    %v4849 = vunpack.c.h.b16 %v3624
    %v4850 = vunpack.c.l.b16 %v3625
    %v4851 = vunpack.c.h.b16 %v3625
    %v4852 = vunpack.c.l.b16 %v3626
    %v4853 = vunpack.c.l.b16 %v3627
    %v4854 = vunpack.c.h.b16 %v3627
    %v4855 = vunpack.c.l.b16 %v3628
    %v4856 = vunpack.c.h.b16 %v3628
    %v4857 = vunpack.c.l.b16 %v3629
    %v4858 = vunpack.c.h.b16 %v3629
    %v4859 = vunpack.c.l.b16 %v3630
    %v4860 = vunpack.c.l.b16 %v3631
    %v4861 = vunpack.c.h.b16 %v3631
    %v4862 = vunpack.c.l.b16 %v3632
    %v4863 = vunpack.c.h.b16 %v3632
    %v4864 = vunpack.c.l.b16 %v3633
    %v4865 = vunpack.c.h.b16 %v3633
    %v4866 = vunpack.c.l.b16 %v3634
    %v4867 = vunpack.c.l.b16 %v3635
    %v4868 = vunpack.c.h.b16 %v3635
    %v4869 = vunpack.c.l.b16 %v3636
    %v4870 = vunpack.c.h.b16 %v3636
    %v4871 = vunpack.c.l.b16 %v3637
    %v4872 = vunpack.c.h.b16 %v3637
    %v4873 = vunpack.c.l.b16 %v3638
    %v4874 = vunpack.c.l.b16 %v3639
    %v4875 = vunpack.c.h.b16 %v3639
    %v4876 = vunpack.c.l.b16 %v3640
    %v4877 = vunpack.c.h.b16 %v3640
    %v4878 = vunpack.c.l.b16 %v3641
    %v4879 = vunpack.c.h.b16 %v3641
    %v4880 = vunpack.c.l.b16 %v3642
    %v4881 = vunpack.c.l.b16 %v3643
    %v4882 = vunpack.c.h.b16 %v3643
    %v4883 = vunpack.c.l.b16 %v3644
    %v4884 = vunpack.c.h.b16 %v3644
    %v4885 = vunpack.c.l.b16 %v3645
    %v4886 = vunpack.c.h.b16 %v3645
    %v4887 = vunpack.c.l.b16 %v3646
    %v4888 = vunpack.c.l.b16 %v3647
    %v4889 = vunpack.c.h.b16 %v3647
    %v4890 = vunpack.c.l.b16 %v3648
    %v4891 = vunpack.c.h.b16 %v3648
    %v4892 = vunpack.c.l.b16 %v3649
    %v4893 = vunpack.c.h.b16 %v3649
    %v4894 = vunpack.c.l.b16 %v3650
    %v4895 = vunpack.c.l.b16 %v3651
    %v4896 = vunpack.c.h.b16 %v3651
    %v4897 = vunpack.c.l.b16 %v3652
    %v4898 = vunpack.c.h.b16 %v3652
    %v4899 = vunpack.c.l.b16 %v3653
    %v4900 = vunpack.c.h.b16 %v3653
    %v4901 = vunpack.c.l.b16 %v3654
    %v4902 = vunpack.c.l.b16 %v3655
    %v4903 = vunpack.c.h.b16 %v3655
    %v4904 = vunpack.c.l.b16 %v3656
    %v4905 = vunpack.c.h.b16 %v3656
    %v4906 = vunpack.c.l.b16 %v3657
    %v4907 = vunpack.c.h.b16 %v3657
    %v4908 = vunpack.c.l.b16 %v3658
    %v4909 = vunpack.c.l.b16 %v3659
    %v4910 = vunpack.c.h.b16 %v3659
    %v4911 = vunpack.c.l.b16 %v3660
    %v4912 = vunpack.c.h.b16 %v3660
    %v4913 = vunpack.c.l.b16 %v3661
    %v4914 = vunpack.c.h.b16 %v3661
    %v4915 = vunpack.c.l.b16 %v3662
    %v4916 = vunpack.c.l.b16 %v3663
    %v4917 = vunpack.c.h.b16 %v3663
    %v4918 = vunpack.c.l.b16 %v3664
    %v4919 = vunpack.c.h.b16 %v3664
    %v4920 = vunpack.c.l.b16 %v3665
    %v4921 = vunpack.c.h.b16 %v3665
    %v4922 = vunpack.c.l.b16 %v3666
    %v4923 = vunpack.c.l.b16 %v3667
    %v4924 = vunpack.c.h.b16 %v3667
    %v4925 = vunpack.c.l.b16 %v3668
    %v4926 = vunpack.c.h.b16 %v3668
    %v4927 = vunpack.c.l.b16 %v3669
    %v4928 = vunpack.c.h.b16 %v3669
    %v4929 = vunpack.c.l.b16 %v3670
    %v4930 = vunpack.c.l.b16 %v3671
    %v4931 = vunpack.c.h.b16 %v3671
    %v4932 = vunpack.c.l.b16 %v3672
    %v4933 = vunpack.c.h.b16 %v3672
    %v4934 = vunpack.c.l.b16 %v3673
    %v4935 = vunpack.c.h.b16 %v3673
    %v4936 = vunpack.c.l.b16 %v3674
    %v4937 = vunpack.c.l.b16 %v3675
    %v4938 = vunpack.c.h.b16 %v3675
    %v4939 = vunpack.c.l.b16 %v3676
    %v4940 = vunpack.c.h.b16 %v3676
    %v4941 = vunpack.c.l.b16 %v3677
    %v4942 = vunpack.c.h.b16 %v3677
    %v4943 = vunpack.c.l.b16 %v3678
    %v4944 = vunpack.c.l.b16 %v3679
    %v4945 = vunpack.c.h.b16 %v3679
    %v4946 = vunpack.c.l.b16 %v3680
    %v4947 = vunpack.c.h.b16 %v3680
    %v4948 = vunpack.c.l.b16 %v3681
    %v4949 = vunpack.c.h.b16 %v3681
    %v4950 = vunpack.c.l.b16 %v3682
    %v4951 = vunpack.c.l.b16 %v3683
    %v4952 = vunpack.c.h.b16 %v3683
    %v4953 = vunpack.c.l.b16 %v3684
    %v4954 = vunpack.c.h.b16 %v3684
    %v4955 = vunpack.c.l.b16 %v3685
    %v4956 = vunpack.c.h.b16 %v3685
    %v4957 = vunpack.c.l.b16 %v3686
    %v4958 = vunpack.c.l.b16 %v3687
    %v4959 = vunpack.c.h.b16 %v3687
    %v4960 = vunpack.c.l.b16 %v3688
    %v4961 = vunpack.c.h.b16 %v3688
    %v4962 = vunpack.c.l.b16 %v3689
    %v4963 = vunpack.c.h.b16 %v3689
    %v4964 = vunpack.c.l.b16 %v3690
    %v4965 = vunpack.c.l.b16 %v3691
    %v4966 = vunpack.c.h.b16 %v3691
    %v4967 = vunpack.c.l.b16 %v3692
    %v4968 = vunpack.c.h.b16 %v3692
    %v4969 = vunpack.c.l.b16 %v3693
    %v4970 = vunpack.c.h.b16 %v3693
    %v4971 = vunpack.c.l.b16 %v3694
    %v4972 = vunpack.c.l.b16 %v3695
    %v4973 = vunpack.c.h.b16 %v3695
    %v4974 = vunpack.c.l.b16 %v3696
    %v4975 = vunpack.c.h.b16 %v3696
    %v4976 = vunpack.c.l.b16 %v3697
    %v4977 = vunpack.c.h.b16 %v3697
    %v4978 = vunpack.c.l.b16 %v3698
    %v4979 = vunpack.c.l.b16 %v3699
    %v4980 = vunpack.c.h.b16 %v3699
    %v4981 = vunpack.c.l.b16 %v3700
    %v4982 = vunpack.c.h.b16 %v3700
    %v4983 = vunpack.c.l.b16 %v3701
    %v4984 = vunpack.c.h.b16 %v3701
    %v4985 = vunpack.c.l.b16 %v3702
    %v4986 = vunpack.c.l.b16 %v3703
    %v4987 = vunpack.c.h.b16 %v3703
    %v4988 = vunpack.c.l.b16 %v3704
    %v4989 = vunpack.c.h.b16 %v3704
    %v4990 = vunpack.c.l.b16 %v3705
    %v4991 = vunpack.c.h.b16 %v3705
    %v4992 = vunpack.c.l.b16 %v3706
    %v4993 = vunpack.c.l.b16 %v3707
    %v4994 = vunpack.c.h.b16 %v3707
    %v4995 = vunpack.c.l.b16 %v3708
    %v4996 = vunpack.c.h.b16 %v3708
    %v4997 = vunpack.c.l.b16 %v3709
    %v4998 = vunpack.c.h.b16 %v3709
    %v4999 = vunpack.c.l.b16 %v3710
    %v5000 = vunpack.c.l.b16 %v3711
    %v5001 = vunpack.c.h.b16 %v3711
    %v5002 = vunpack.c.l.b16 %v3712
    %v5003 = vunpack.c.h.b16 %v3712
    %v5004 = vunpack.c.l.b16 %v3713
    %v5005 = vunpack.c.h.b16 %v3713
    %v5006 = vunpack.c.l.b16 %v3714
    %v5007 = vunpack.c.l.b16 %v3715
    %v5008 = vunpack.c.h.b16 %v3715
    %v5009 = vunpack.c.l.b16 %v3716
    %v5010 = vunpack.c.h.b16 %v3716
    %v5011 = vunpack.c.l.b16 %v3717
    %v5012 = vunpack.c.h.b16 %v3717
    %v5013 = vunpack.c.l.b16 %v3718
    %v5014 = vunpack.c.l.b16 %v3719
    %v5015 = vunpack.c.h.b16 %v3719
    %v5016 = vunpack.c.l.b16 %v3720
    %v5017 = vunpack.c.h.b16 %v3720
    %v5018 = vunpack.c.l.b16 %v3721
    %v5019 = vunpack.c.h.b16 %v3721
    %v5020 = vunpack.c.l.b16 %v3722
    %v5021 = vunpack.c.l.b16 %v3723
    %v5022 = vunpack.c.h.b16 %v3723
    %v5023 = vunpack.c.l.b16 %v3724
    %v5024 = vunpack.c.h.b16 %v3724
    %v5025 = vunpack.c.l.b16 %v3725
    %v5026 = vunpack.c.h.b16 %v3725
    %v5027 = vunpack.c.l.b16 %v3726
    %v5028 = vunpack.c.l.b16 %v3727
    %v5029 = vunpack.c.h.b16 %v3727
    %v5030 = vunpack.c.l.b16 %v3728
    %v5031 = vunpack.c.h.b16 %v3728
    %v5032 = vunpack.c.l.b16 %v3729
    %v5033 = vunpack.c.h.b16 %v3729
    %v5034 = vunpack.c.l.b16 %v3730
    %v5035 = vunpack.c.l.b16 %v3731
    %v5036 = vunpack.c.h.b16 %v3731
    %v5037 = vunpack.c.l.b16 %v3732
    %v5038 = vunpack.c.h.b16 %v3732
    %v5039 = vunpack.c.l.b16 %v3733
    %v5040 = vunpack.c.h.b16 %v3733
    %v5041 = vunpack.c.l.b16 %v3734
    %v5042 = vunpack.c.l.b16 %v3735
    %v5043 = vunpack.c.h.b16 %v3735
    %v5044 = vunpack.c.l.b16 %v3736
    %v5045 = vunpack.c.h.b16 %v3736
    %v5046 = vunpack.c.l.b16 %v3737
    %v5047 = vunpack.c.h.b16 %v3737
    %v5048 = vunpack.c.l.b16 %v3738
    %v5049 = vunpack.c.l.b16 %v3739
    %v5050 = vunpack.c.h.b16 %v3739
    %v5051 = vunpack.c.l.b16 %v3740
    %v5052 = vunpack.c.h.b16 %v3740
    %v5053 = vunpack.c.l.b16 %v3741
    %v5054 = vunpack.c.h.b16 %v3741
    %v5055 = vunpack.c.l.b16 %v3742
    %v5056 = vunpack.c.l.b16 %v3743
    %v5057 = vunpack.c.h.b16 %v3743
    %v5058 = vunpack.c.l.b16 %v3744
    %v5059 = vunpack.c.h.b16 %v3744
    %v5060 = vunpack.c.l.b16 %v3745
    %v5061 = vunpack.c.h.b16 %v3745
    %v5062 = vunpack.c.l.b16 %v3746
    %v5063 = vunpack.c.l.b16 %v3747
    %v5064 = vunpack.c.h.b16 %v3747
    %v5065 = vunpack.c.l.b16 %v3748
    %v5066 = vunpack.c.h.b16 %v3748
    %v5067 = vunpack.c.l.b16 %v3749
    %v5068 = vunpack.c.h.b16 %v3749
    %v5069 = vunpack.c.l.b16 %v3750
    %v5070 = vunpack.c.l.b16 %v3751
    %v5071 = vunpack.c.h.b16 %v3751
    %v5072 = vunpack.c.l.b16 %v3752
    %v5073 = vunpack.c.h.b16 %v3752
    %v5074 = vunpack.c.l.b16 %v3753
    %v5075 = vunpack.c.h.b16 %v3753
    %v5076 = vunpack.c.l.b16 %v3754
    %v5077 = vunpack.c.l.b16 %v3755
    %v5078 = vunpack.c.h.b16 %v3755
    %v5079 = vunpack.c.l.b16 %v3756
    %v5080 = vunpack.c.h.b16 %v3756
    %v5081 = vunpack.c.l.b16 %v3757
    %v5082 = vunpack.c.h.b16 %v3757
    %v5083 = vunpack.c.l.b16 %v3758
    %v5084 = vunpack.c.l.b16 %v3759
    %v5085 = vunpack.c.h.b16 %v3759
    %v5086 = vunpack.c.l.b16 %v3760
    %v5087 = vunpack.c.h.b16 %v3760
    %v5088 = vunpack.c.l.b16 %v3761
    %v5089 = vunpack.c.h.b16 %v3761
    %v5090 = vunpack.c.l.b16 %v3762
    %v5091 = vunpack.c.l.b16 %v3763
    %v5092 = vunpack.c.h.b16 %v3763
    %v5093 = vunpack.c.l.b16 %v3764
    %v5094 = vunpack.c.h.b16 %v3764
    %v5095 = vunpack.c.l.b16 %v3765
    %v5096 = vunpack.c.h.b16 %v3765
    %v5097 = vunpack.c.l.b16 %v3766
    %v5098 = vunpack.c.l.b16 %v3767
    %v5099 = vunpack.c.h.b16 %v3767
    %v5100 = vunpack.c.l.b16 %v3768
    %v5101 = vunpack.c.h.b16 %v3768
    %v5102 = vunpack.c.l.b16 %v3769
    %v5103 = vunpack.c.h.b16 %v3769
    %v5104 = vunpack.c.l.b16 %v3770
    %v5105 = vunpack.c.l.b16 %v3771
    %v5106 = vunpack.c.h.b16 %v3771
    %v5107 = vunpack.c.l.b16 %v3772
    %v5108 = vunpack.c.h.b16 %v3772
    %v5109 = vunpack.c.l.b16 %v3773
    %v5110 = vunpack.c.h.b16 %v3773
    %v5111 = vunpack.c.l.b16 %v3774
    %v5112 = vunpack.c.l.b16 %v3775
    %v5113 = vunpack.c.h.b16 %v3775
    %v5114 = vunpack.c.l.b16 %v3776
    %v5115 = vunpack.c.h.b16 %v3776
    %v5116 = vunpack.c.l.b16 %v3777
    %v5117 = vunpack.c.h.b16 %v3777
    %v5118 = vunpack.c.l.b16 %v3778
    %v5119 = vunpack.c.l.b16 %v3779
    %v5120 = vunpack.c.h.b16 %v3779
    %v5121 = vunpack.c.l.b16 %v3780
    %v5122 = vunpack.c.h.b16 %v3780
    %v5123 = vunpack.c.l.b16 %v3781
    %v5124 = vunpack.c.h.b16 %v3781
    %v5125 = vunpack.c.l.b16 %v3782
    %v5126 = vunpack.c.l.b16 %v3783
    %v5127 = vunpack.c.h.b16 %v3783
    %v5128 = vunpack.c.l.b16 %v3784
    %v5129 = vunpack.c.h.b16 %v3784
    %v5130 = vunpack.c.l.b16 %v3785
    %v5131 = vunpack.c.h.b16 %v3785
    %v5132 = vunpack.c.l.b16 %v3786
    %v5133 = vunpack.c.l.b16 %v3787
    %v5134 = vunpack.c.h.b16 %v3787
    %v5135 = vunpack.c.l.b16 %v3788
    %v5136 = vunpack.c.h.b16 %v3788
    %v5137 = vunpack.c.l.b16 %v3789
    %v5138 = vunpack.c.h.b16 %v3789
    %v5139 = vunpack.c.l.b16 %v3790
    %v5140 = vunpack.c.l.b16 %v3791
    %v5141 = vunpack.c.h.b16 %v3791
    %v5142 = vunpack.c.l.b16 %v3792
    %v5143 = vunpack.c.h.b16 %v3792
    %v5144 = vunpack.c.l.b16 %v3793
    %v5145 = vunpack.c.h.b16 %v3793
    %v5146 = vunpack.c.l.b16 %v3794
    %v5147 = vunpack.c.l.b16 %v3795
    %v5148 = vunpack.c.h.b16 %v3795
    %v5149 = vunpack.c.l.b16 %v3796
    %v5150 = vunpack.c.h.b16 %v3796
    %v5151 = vunpack.c.l.b16 %v3797
    %v5152 = vunpack.c.h.b16 %v3797
    %v5153 = vunpack.c.l.b16 %v3798
    %v5154 = vunpack.c.l.b16 %v3799
    %v5155 = vunpack.c.h.b16 %v3799
    %v5156 = vunpack.c.l.b16 %v3800
    %v5157 = vunpack.c.h.b16 %v3800
    %v5158 = vunpack.c.l.b16 %v3801
    %v5159 = vunpack.c.h.b16 %v3801
    %v5160 = vunpack.c.l.b16 %v3802
    %v5161 = vunpack.c.l.b16 %v3803
    %v5162 = vunpack.c.h.b16 %v3803
    %v5163 = vunpack.c.l.b16 %v3804
    %v5164 = vunpack.c.h.b16 %v3804
    %v5165 = vunpack.c.l.b16 %v3805
    %v5166 = vunpack.c.h.b16 %v3805
    %v5167 = vunpack.c.l.b16 %v3806
    %v5168 = vunpack.c.l.b16 %v3807
    %v5169 = vunpack.c.h.b16 %v3807
    %v5170 = vunpack.c.l.b16 %v3808
    %v5171 = vunpack.c.h.b16 %v3808
    %v5172 = vunpack.c.l.b16 %v3809
    %v5173 = vunpack.c.h.b16 %v3809
    %v5174 = vunpack.c.l.b16 %v3810
    %v5175 = vunpack.c.l.b16 %v3811
    %v5176 = vunpack.c.h.b16 %v3811
    %v5177 = vunpack.c.l.b16 %v3812
    %v5178 = vunpack.c.h.b16 %v3812
    %v5179 = vunpack.c.l.b16 %v3813
    %v5180 = vunpack.c.h.b16 %v3813
    %v5181 = vunpack.c.l.b16 %v3814
    %v5182 = vunpack.c.l.b16 %v3815
    %v5183 = vunpack.c.h.b16 %v3815
    %v5184 = vunpack.c.l.b16 %v3816
    %v5185 = vunpack.c.h.b16 %v3816
    %v5186 = vunpack.c.l.b16 %v3817
    %v5187 = vunpack.c.h.b16 %v3817
    %v5188 = vunpack.c.l.b16 %v3818
    %v5189 = vunpack.c.l.b16 %v3819
    %v5190 = vunpack.c.h.b16 %v3819
    %v5191 = vunpack.c.l.b16 %v3820
    %v5192 = vunpack.c.h.b16 %v3820
    %v5193 = vunpack.c.l.b16 %v3821
    %v5194 = vunpack.c.h.b16 %v3821
    %v5195 = vunpack.c.l.b16 %v3822
    %v5196 = vunpack.c.l.b16 %v3823
    %v5197 = vunpack.c.h.b16 %v3823
    %v5198 = vunpack.c.l.b16 %v3824
    %v5199 = vunpack.c.h.b16 %v3824
    %v5200 = vunpack.c.l.b16 %v3825
    %v5201 = vunpack.c.h.b16 %v3825
    %v5202 = vunpack.c.l.b16 %v3826
    %v5203 = vunpack.c.l.b16 %v3827
    %v5204 = vunpack.c.h.b16 %v3827
    %v5205 = vunpack.c.l.b16 %v3828
    %v5206 = vunpack.c.h.b16 %v3828
    %v5207 = vunpack.c.l.b16 %v3829
    %v5208 = vunpack.c.h.b16 %v3829
    %v5209 = vunpack.c.l.b16 %v3830
    %v5210 = vunpack.c.l.b16 %v3831
    %v5211 = vunpack.c.h.b16 %v3831
    %v5212 = vunpack.c.l.b16 %v3832
    %v5213 = vunpack.c.h.b16 %v3832
    %v5214 = vunpack.c.l.b16 %v3833
    %v5215 = vunpack.c.h.b16 %v3833
    %v5216 = vunpack.c.l.b16 %v3834
    %v5217 = vunpack.c.l.b16 %v3835
    %v5218 = vunpack.c.h.b16 %v3835
    %v5219 = vunpack.c.l.b16 %v3836
    %v5220 = vunpack.c.h.b16 %v3836
    %v5221 = vunpack.c.l.b16 %v3837
    %v5222 = vunpack.c.h.b16 %v3837
    %v5223 = vunpack.c.l.b16 %v3838
    %v5224 = vunpack.c.l.b16 %v3839
    %v5225 = vunpack.c.h.b16 %v3839
    %v5226 = vunpack.c.l.b16 %v3840
    %v5227 = vunpack.c.h.b16 %v3840
    %v5228 = vunpack.c.l.b16 %v3841
    %v5229 = vunpack.c.h.b16 %v3841
    %v5230 = vunpack.c.l.b16 %v3842
    %v5231 = vunpack.c.l.b16 %v3843
    %v5232 = vunpack.c.h.b16 %v3843
    %v5233 = vunpack.c.l.b16 %v3844
    %v5234 = vunpack.c.h.b16 %v3844
    %v5235 = vunpack.c.l.b16 %v3845
    %v5236 = vunpack.c.h.b16 %v3845
    %v5237 = vunpack.c.l.b16 %v3846
    %v5238 = vunpack.c.l.b16 %v3847
    %v5239 = vunpack.c.h.b16 %v3847
    %v5240 = vunpack.c.l.b16 %v3848
    %v5241 = vunpack.c.h.b16 %v3848
    %v5242 = vunpack.c.l.b16 %v3849
    %v5243 = vunpack.c.h.b16 %v3849
    %v5244 = vunpack.c.l.b16 %v3850
    %v5245 = vunpack.c.l.b16 %v3851
    %v5246 = vunpack.c.h.b16 %v3851
    %v5247 = vunpack.c.l.b16 %v3852
    %v5248 = vunpack.c.h.b16 %v3852
    %v5249 = vunpack.c.l.b16 %v3853
    %v5250 = vunpack.c.h.b16 %v3853
    %v5251 = vunpack.c.l.b16 %v3854
    %v5252 = vunpack.c.l.b16 %v3855
    %v5253 = vunpack.c.h.b16 %v3855
    %v5254 = vunpack.c.l.b16 %v3856
    %v5255 = vunpack.c.h.b16 %v3856
    %v5256 = vunpack.c.l.b16 %v3857
    %v5257 = vunpack.c.h.b16 %v3857
    %v5258 = vunpack.c.l.b16 %v3858
    %v5259 = vunpack.c.l.b16 %v3859
    %v5260 = vunpack.c.h.b16 %v3859
    %v5261 = vunpack.c.l.b16 %v3860
    %v5262 = vunpack.c.h.b16 %v3860
    %v5263 = vunpack.c.l.b16 %v3861
    %v5264 = vunpack.c.h.b16 %v3861
    %v5265 = vunpack.c.l.b16 %v3862
    %v5266 = vunpack.c.l.b16 %v3863
    %v5267 = vunpack.c.h.b16 %v3863
    %v5268 = vunpack.c.l.b16 %v3864
    %v5269 = vunpack.c.h.b16 %v3864
    %v5270 = vunpack.c.l.b16 %v3865
    %v5271 = vunpack.c.h.b16 %v3865
    %v5272 = vunpack.c.l.b16 %v3866
    %v5273 = vunpack.c.l.b16 %v3867
    %v5274 = vunpack.c.h.b16 %v3867
    %v5275 = vunpack.c.l.b16 %v3868
    %v5276 = vunpack.c.h.b16 %v3868
    %v5277 = vunpack.c.l.b16 %v3869
    %v5278 = vunpack.c.h.b16 %v3869
    %v5279 = vunpack.c.l.b16 %v3870
    %v5280 = vunpack.c.l.b16 %v3871
    %v5281 = vunpack.c.h.b16 %v3871
    %v5282 = vunpack.c.l.b16 %v3872
    %v5283 = vunpack.c.h.b16 %v3872
    %v5284 = vunpack.c.l.b16 %v3873
    %v5285 = vunpack.c.h.b16 %v3873
    %v5286 = vunpack.c.l.b16 %v3874
    %v5287 = vunpack.c.l.b16 %v3875
    %v5288 = vunpack.c.h.b16 %v3875
    %v5289 = vunpack.c.l.b16 %v3876
    %v5290 = vunpack.c.h.b16 %v3876
    %v5291 = vunpack.c.l.b16 %v3877
    %v5292 = vunpack.c.h.b16 %v3877
    %v5293 = vunpack.c.l.b16 %v3878
    %v5294 = vunpack.c.l.b16 %v3879
    %v5295 = vunpack.c.h.b16 %v3879
    %v5296 = vunpack.c.l.b16 %v3880
    %v5297 = vunpack.c.h.b16 %v3880
    %v5298 = vunpack.c.l.b16 %v3881
    %v5299 = vunpack.c.h.b16 %v3881
    %v5300 = vunpack.c.l.b16 %v3882
    %v5301 = vunpack.c.l.b16 %v3883
    %v5302 = vunpack.c.h.b16 %v3883
    %v5303 = vunpack.c.l.b16 %v3884
    %v5304 = vunpack.c.h.b16 %v3884
    %v5305 = vunpack.c.l.b16 %v3885
    %v5306 = vunpack.c.h.b16 %v3885
    %v5307 = vunpack.c.l.b16 %v3886
    %v5308 = vunpack.c.l.b16 %v3887
    %v5309 = vunpack.c.h.b16 %v3887
    %v5310 = vunpack.c.l.b16 %v3888
    %v5311 = vunpack.c.h.b16 %v3888
    %v5312 = vunpack.c.l.b16 %v3889
    %v5313 = vunpack.c.h.b16 %v3889
    %v5314 = vunpack.c.l.b16 %v3890
    %v5315 = vunpack.c.l.b16 %v3891
    %v5316 = vunpack.c.h.b16 %v3891
    %v5317 = vunpack.c.l.b16 %v3892
    %v5318 = vunpack.c.h.b16 %v3892
    %v5319 = vunpack.c.l.b16 %v3893
    %v5320 = vunpack.c.h.b16 %v3893
    %v5321 = vunpack.c.l.b16 %v3894
    %v5322 = vunpack.c.l.b16 %v3895
    %v5323 = vunpack.c.h.b16 %v3895
    %v5324 = vunpack.c.l.b16 %v3896
    %v5325 = vunpack.c.h.b16 %v3896
    %v5326 = vunpack.c.l.b16 %v3897
    %v5327 = vunpack.c.h.b16 %v3897
    %v5328 = vunpack.c.l.b16 %v3898
    %v5329 = vunpack.c.l.b16 %v3899
    %v5330 = vunpack.c.h.b16 %v3899
    %v5331 = vunpack.c.l.b16 %v3900
    %v5332 = vunpack.c.h.b16 %v3900
    %v5333 = vunpack.c.l.b16 %v3901
    %v5334 = vunpack.c.h.b16 %v3901
    %v5335 = vunpack.c.l.b16 %v3902
    %v5336 = vunpack.c.l.b16 %v3903
    %v5337 = vunpack.c.h.b16 %v3903
    %v5338 = vunpack.c.l.b16 %v3904
    %v5339 = vunpack.c.h.b16 %v3904
    %v5340 = vunpack.c.l.b16 %v3905
    %v5341 = vunpack.c.h.b16 %v3905
    %v5342 = vunpack.c.l.b16 %v3906
    %v5343 = vunpack.c.l.b16 %v3907
    %v5344 = vunpack.c.h.b16 %v3907
    %v5345 = vunpack.c.l.b16 %v3908
    %v5346 = vunpack.c.h.b16 %v3908
    %v5347 = vunpack.c.l.b16 %v3909
    %v5348 = vunpack.c.h.b16 %v3909
    %v5349 = vunpack.c.l.b16 %v3910
    %v5350 = vunpack.c.l.b16 %v3911
    %v5351 = vunpack.c.h.b16 %v3911
    %v5352 = vunpack.c.l.b16 %v3912
    %v5353 = vunpack.c.h.b16 %v3912
    %v5354 = vunpack.c.l.b16 %v3913
    %v5355 = vunpack.c.h.b16 %v3913
    %v5356 = vunpack.c.l.b16 %v3914
    %v5357 = vunpack.c.l.b16 %v3915
    %v5358 = vunpack.c.h.b16 %v3915
    %v5359 = vunpack.c.l.b16 %v3916
    %v5360 = vunpack.c.h.b16 %v3916
    %v5361 = vunpack.c.l.b16 %v3917
    %v5362 = vunpack.c.h.b16 %v3917
    %v5363 = vunpack.c.l.b16 %v3918
    %v5364 = vpack.c.b16 %v4475, %v4468
    %v5365 = vpack.c.b16 %v4476, %v4469
    %v5366 = vpack.c.b16 %v4477, %v4470
    %v5367 = vpack.c.b16 %v4478, %v4471
    %v5368 = vpack.c.b16 %v4479, %v4472
    %v5369 = vpack.c.b16 %v4480, %v4473
    %v5370 = vpack.c.b16 %v4481, %v4474
    %v5371 = vpack.c.b16 %v4489, %v4482
    %v5372 = vpack.c.b16 %v4490, %v4483
    %v5373 = vpack.c.b16 %v4491, %v4484
    %v5374 = vpack.c.b16 %v4492, %v4485
    %v5375 = vpack.c.b16 %v4493, %v4486
    %v5376 = vpack.c.b16 %v4494, %v4487
    %v5377 = vpack.c.b16 %v4495, %v4488
    %v5378 = vpack.c.b16 %v4503, %v4496
    %v5379 = vpack.c.b16 %v4504, %v4497
    %v5380 = vpack.c.b16 %v4505, %v4498
    %v5381 = vpack.c.b16 %v4506, %v4499
    %v5382 = vpack.c.b16 %v4507, %v4500
    %v5383 = vpack.c.b16 %v4508, %v4501
    %v5384 = vpack.c.b16 %v4509, %v4502
    %v5385 = vpack.c.b16 %v4517, %v4510
    %v5386 = vpack.c.b16 %v4518, %v4511
    %v5387 = vpack.c.b16 %v4519, %v4512
    %v5388 = vpack.c.b16 %v4520, %v4513
    %v5389 = vpack.c.b16 %v4521, %v4514
    %v5390 = vpack.c.b16 %v4522, %v4515
    %v5391 = vpack.c.b16 %v4523, %v4516
    %v5392 = vpack.c.b16 %v4531, %v4524
    %v5393 = vpack.c.b16 %v4532, %v4525
    %v5394 = vpack.c.b16 %v4533, %v4526
    %v5395 = vpack.c.b16 %v4534, %v4527
    %v5396 = vpack.c.b16 %v4535, %v4528
    %v5397 = vpack.c.b16 %v4536, %v4529
    %v5398 = vpack.c.b16 %v4537, %v4530
    %v5399 = vpack.c.b16 %v4545, %v4538
    %v5400 = vpack.c.b16 %v4546, %v4539
    %v5401 = vpack.c.b16 %v4547, %v4540
    %v5402 = vpack.c.b16 %v4548, %v4541
    %v5403 = vpack.c.b16 %v4549, %v4542
    %v5404 = vpack.c.b16 %v4550, %v4543
    %v5405 = vpack.c.b16 %v4551, %v4544
    %v5406 = vpack.c.b16 %v4559, %v4552
    %v5407 = vpack.c.b16 %v4560, %v4553
    %v5408 = vpack.c.b16 %v4561, %v4554
    %v5409 = vpack.c.b16 %v4562, %v4555
    %v5410 = vpack.c.b16 %v4563, %v4556
    %v5411 = vpack.c.b16 %v4564, %v4557
    %v5412 = vpack.c.b16 %v4565, %v4558
    %v5413 = vpack.c.b16 %v4573, %v4566
    %v5414 = vpack.c.b16 %v4574, %v4567
    %v5415 = vpack.c.b16 %v4575, %v4568
    %v5416 = vpack.c.b16 %v4576, %v4569
    %v5417 = vpack.c.b16 %v4577, %v4570
    %v5418 = vpack.c.b16 %v4578, %v4571
    %v5419 = vpack.c.b16 %v4579, %v4572
    %v5420 = vpack.c.b16 %v4587, %v4580
    %v5421 = vpack.c.b16 %v4588, %v4581
    %v5422 = vpack.c.b16 %v4589, %v4582
    %v5423 = vpack.c.b16 %v4590, %v4583
    %v5424 = vpack.c.b16 %v4591, %v4584
    %v5425 = vpack.c.b16 %v4592, %v4585
    %v5426 = vpack.c.b16 %v4593, %v4586
    %v5427 = vpack.c.b16 %v4601, %v4594
    %v5428 = vpack.c.b16 %v4602, %v4595
    %v5429 = vpack.c.b16 %v4603, %v4596
    %v5430 = vpack.c.b16 %v4604, %v4597
    %v5431 = vpack.c.b16 %v4605, %v4598
    %v5432 = vpack.c.b16 %v4606, %v4599
    %v5433 = vpack.c.b16 %v4607, %v4600
    %v5434 = vpack.c.b16 %v4615, %v4608
    %v5435 = vpack.c.b16 %v4616, %v4609
    %v5436 = vpack.c.b16 %v4617, %v4610
    %v5437 = vpack.c.b16 %v4618, %v4611
    %v5438 = vpack.c.b16 %v4619, %v4612
    %v5439 = vpack.c.b16 %v4620, %v4613
    %v5440 = vpack.c.b16 %v4621, %v4614
    %v5441 = vpack.c.b16 %v4629, %v4622
    %v5442 = vpack.c.b16 %v4630, %v4623
    %v5443 = vpack.c.b16 %v4631, %v4624
    %v5444 = vpack.c.b16 %v4632, %v4625
    %v5445 = vpack.c.b16 %v4633, %v4626
    %v5446 = vpack.c.b16 %v4634, %v4627
    %v5447 = vpack.c.b16 %v4635, %v4628
    %v5448 = vpack.c.b16 %v4643, %v4636
    %v5449 = vpack.c.b16 %v4644, %v4637
    %v5450 = vpack.c.b16 %v4645, %v4638
    %v5451 = vpack.c.b16 %v4646, %v4639
    %v5452 = vpack.c.b16 %v4647, %v4640
    %v5453 = vpack.c.b16 %v4648, %v4641
    %v5454 = vpack.c.b16 %v4649, %v4642
    %v5455 = vpack.c.b16 %v4657, %v4650
    %v5456 = vpack.c.b16 %v4658, %v4651
    %v5457 = vpack.c.b16 %v4659, %v4652
    %v5458 = vpack.c.b16 %v4660, %v4653
    %v5459 = vpack.c.b16 %v4661, %v4654
    %v5460 = vpack.c.b16 %v4662, %v4655
    %v5461 = vpack.c.b16 %v4663, %v4656
    %v5462 = vpack.c.b16 %v4671, %v4664
    %v5463 = vpack.c.b16 %v4672, %v4665
    %v5464 = vpack.c.b16 %v4673, %v4666
    %v5465 = vpack.c.b16 %v4674, %v4667
    %v5466 = vpack.c.b16 %v4675, %v4668
    %v5467 = vpack.c.b16 %v4676, %v4669
    %v5468 = vpack.c.b16 %v4677, %v4670
    %v5469 = vpack.c.b16 %v4685, %v4678
    %v5470 = vpack.c.b16 %v4686, %v4679
    %v5471 = vpack.c.b16 %v4687, %v4680
    %v5472 = vpack.c.b16 %v4688, %v4681
    %v5473 = vpack.c.b16 %v4689, %v4682
    %v5474 = vpack.c.b16 %v4690, %v4683
    %v5475 = vpack.c.b16 %v4691, %v4684
    %v5476 = vpack.c.b16 %v4699, %v4692
    %v5477 = vpack.c.b16 %v4700, %v4693
    %v5478 = vpack.c.b16 %v4701, %v4694
    %v5479 = vpack.c.b16 %v4702, %v4695
    %v5480 = vpack.c.b16 %v4703, %v4696
    %v5481 = vpack.c.b16 %v4704, %v4697
    %v5482 = vpack.c.b16 %v4705, %v4698
    %v5483 = vpack.c.b16 %v4713, %v4706
    %v5484 = vpack.c.b16 %v4714, %v4707
    %v5485 = vpack.c.b16 %v4715, %v4708
    %v5486 = vpack.c.b16 %v4716, %v4709
    %v5487 = vpack.c.b16 %v4717, %v4710
    %v5488 = vpack.c.b16 %v4718, %v4711
    %v5489 = vpack.c.b16 %v4719, %v4712
    %v5490 = vpack.c.b16 %v4727, %v4720
    %v5491 = vpack.c.b16 %v4728, %v4721
    %v5492 = vpack.c.b16 %v4729, %v4722
    %v5493 = vpack.c.b16 %v4730, %v4723
    %v5494 = vpack.c.b16 %v4731, %v4724
    %v5495 = vpack.c.b16 %v4732, %v4725
    %v5496 = vpack.c.b16 %v4733, %v4726
    %v5497 = vpack.c.b16 %v4741, %v4734
    %v5498 = vpack.c.b16 %v4742, %v4735
    %v5499 = vpack.c.b16 %v4743, %v4736
    %v5500 = vpack.c.b16 %v4744, %v4737
    %v5501 = vpack.c.b16 %v4745, %v4738
    %v5502 = vpack.c.b16 %v4746, %v4739
    %v5503 = vpack.c.b16 %v4747, %v4740
    %v5504 = vpack.c.b16 %v4755, %v4748
    %v5505 = vpack.c.b16 %v4756, %v4749
    %v5506 = vpack.c.b16 %v4757, %v4750
    %v5507 = vpack.c.b16 %v4758, %v4751
    %v5508 = vpack.c.b16 %v4759, %v4752
    %v5509 = vpack.c.b16 %v4760, %v4753
    %v5510 = vpack.c.b16 %v4761, %v4754
    %v5511 = vpack.c.b16 %v4769, %v4762
    %v5512 = vpack.c.b16 %v4770, %v4763
    %v5513 = vpack.c.b16 %v4771, %v4764
    %v5514 = vpack.c.b16 %v4772, %v4765
    %v5515 = vpack.c.b16 %v4773, %v4766
    %v5516 = vpack.c.b16 %v4774, %v4767
    %v5517 = vpack.c.b16 %v4775, %v4768
    %v5518 = vpack.c.b16 %v4783, %v4776
    %v5519 = vpack.c.b16 %v4784, %v4777
    %v5520 = vpack.c.b16 %v4785, %v4778
    %v5521 = vpack.c.b16 %v4786, %v4779
    %v5522 = vpack.c.b16 %v4787, %v4780
    %v5523 = vpack.c.b16 %v4788, %v4781
    %v5524 = vpack.c.b16 %v4789, %v4782
    %v5525 = vpack.c.b16 %v4797, %v4790
    %v5526 = vpack.c.b16 %v4798, %v4791
    %v5527 = vpack.c.b16 %v4799, %v4792
    %v5528 = vpack.c.b16 %v4800, %v4793
    %v5529 = vpack.c.b16 %v4801, %v4794
    %v5530 = vpack.c.b16 %v4802, %v4795
    %v5531 = vpack.c.b16 %v4803, %v4796
    %v5532 = vpack.c.b16 %v4811, %v4804
    %v5533 = vpack.c.b16 %v4812, %v4805
    %v5534 = vpack.c.b16 %v4813, %v4806
    %v5535 = vpack.c.b16 %v4814, %v4807
    %v5536 = vpack.c.b16 %v4815, %v4808
    %v5537 = vpack.c.b16 %v4816, %v4809
    %v5538 = vpack.c.b16 %v4817, %v4810
    %v5539 = vpack.c.b16 %v4825, %v4818
    %v5540 = vpack.c.b16 %v4826, %v4819
    %v5541 = vpack.c.b16 %v4827, %v4820
    %v5542 = vpack.c.b16 %v4828, %v4821
    %v5543 = vpack.c.b16 %v4829, %v4822
    %v5544 = vpack.c.b16 %v4830, %v4823
    %v5545 = vpack.c.b16 %v4831, %v4824
    %v5546 = vpack.c.b16 %v4839, %v4832
    %v5547 = vpack.c.b16 %v4840, %v4833
    %v5548 = vpack.c.b16 %v4841, %v4834
    %v5549 = vpack.c.b16 %v4842, %v4835
    %v5550 = vpack.c.b16 %v4843, %v4836
    %v5551 = vpack.c.b16 %v4844, %v4837
    %v5552 = vpack.c.b16 %v4845, %v4838
    %v5553 = vpack.c.b16 %v4853, %v4846
    %v5554 = vpack.c.b16 %v4854, %v4847
    %v5555 = vpack.c.b16 %v4855, %v4848
    %v5556 = vpack.c.b16 %v4856, %v4849
    %v5557 = vpack.c.b16 %v4857, %v4850
    %v5558 = vpack.c.b16 %v4858, %v4851
    %v5559 = vpack.c.b16 %v4859, %v4852
    %v5560 = vpack.c.b16 %v4867, %v4860
    %v5561 = vpack.c.b16 %v4868, %v4861
    %v5562 = vpack.c.b16 %v4869, %v4862
    %v5563 = vpack.c.b16 %v4870, %v4863
    %v5564 = vpack.c.b16 %v4871, %v4864
    %v5565 = vpack.c.b16 %v4872, %v4865
    %v5566 = vpack.c.b16 %v4873, %v4866
    %v5567 = vpack.c.b16 %v4881, %v4874
    %v5568 = vpack.c.b16 %v4882, %v4875
    %v5569 = vpack.c.b16 %v4883, %v4876
    %v5570 = vpack.c.b16 %v4884, %v4877
    %v5571 = vpack.c.b16 %v4885, %v4878
    %v5572 = vpack.c.b16 %v4886, %v4879
    %v5573 = vpack.c.b16 %v4887, %v4880
    %v5574 = vpack.c.b16 %v4895, %v4888
    %v5575 = vpack.c.b16 %v4896, %v4889
    %v5576 = vpack.c.b16 %v4897, %v4890
    %v5577 = vpack.c.b16 %v4898, %v4891
    %v5578 = vpack.c.b16 %v4899, %v4892
    %v5579 = vpack.c.b16 %v4900, %v4893
    %v5580 = vpack.c.b16 %v4901, %v4894
    %v5581 = vpack.c.b16 %v4909, %v4902
    %v5582 = vpack.c.b16 %v4910, %v4903
    %v5583 = vpack.c.b16 %v4911, %v4904
    %v5584 = vpack.c.b16 %v4912, %v4905
    %v5585 = vpack.c.b16 %v4913, %v4906
    %v5586 = vpack.c.b16 %v4914, %v4907
    %v5587 = vpack.c.b16 %v4915, %v4908
    %v5588 = vpack.c.b16 %v4923, %v4916
    %v5589 = vpack.c.b16 %v4924, %v4917
    %v5590 = vpack.c.b16 %v4925, %v4918
    %v5591 = vpack.c.b16 %v4926, %v4919
    %v5592 = vpack.c.b16 %v4927, %v4920
    %v5593 = vpack.c.b16 %v4928, %v4921
    %v5594 = vpack.c.b16 %v4929, %v4922
    %v5595 = vpack.c.b16 %v4937, %v4930
    %v5596 = vpack.c.b16 %v4938, %v4931
    %v5597 = vpack.c.b16 %v4939, %v4932
    %v5598 = vpack.c.b16 %v4940, %v4933
    %v5599 = vpack.c.b16 %v4941, %v4934
    %v5600 = vpack.c.b16 %v4942, %v4935
    %v5601 = vpack.c.b16 %v4943, %v4936
    %v5602 = vpack.c.b16 %v4951, %v4944
    %v5603 = vpack.c.b16 %v4952, %v4945
    %v5604 = vpack.c.b16 %v4953, %v4946
    %v5605 = vpack.c.b16 %v4954, %v4947
    %v5606 = vpack.c.b16 %v4955, %v4948
    %v5607 = vpack.c.b16 %v4956, %v4949
    %v5608 = vpack.c.b16 %v4957, %v4950
    %v5609 = vpack.c.b16 %v4965, %v4958
    %v5610 = vpack.c.b16 %v4966, %v4959
    %v5611 = vpack.c.b16 %v4967, %v4960
    %v5612 = vpack.c.b16 %v4968, %v4961
    %v5613 = vpack.c.b16 %v4969, %v4962
    %v5614 = vpack.c.b16 %v4970, %v4963
    %v5615 = vpack.c.b16 %v4971, %v4964
    %v5616 = vpack.c.b16 %v4979, %v4972
    %v5617 = vpack.c.b16 %v4980, %v4973
    %v5618 = vpack.c.b16 %v4981, %v4974
    %v5619 = vpack.c.b16 %v4982, %v4975
    %v5620 = vpack.c.b16 %v4983, %v4976
    %v5621 = vpack.c.b16 %v4984, %v4977
    %v5622 = vpack.c.b16 %v4985, %v4978
    %v5623 = vpack.c.b16 %v4993, %v4986
    %v5624 = vpack.c.b16 %v4994, %v4987
    %v5625 = vpack.c.b16 %v4995, %v4988
    %v5626 = vpack.c.b16 %v4996, %v4989
    %v5627 = vpack.c.b16 %v4997, %v4990
    %v5628 = vpack.c.b16 %v4998, %v4991
    %v5629 = vpack.c.b16 %v4999, %v4992
    %v5630 = vpack.c.b16 %v5007, %v5000
    %v5631 = vpack.c.b16 %v5008, %v5001
    %v5632 = vpack.c.b16 %v5009, %v5002
    %v5633 = vpack.c.b16 %v5010, %v5003
    %v5634 = vpack.c.b16 %v5011, %v5004
    %v5635 = vpack.c.b16 %v5012, %v5005
    %v5636 = vpack.c.b16 %v5013, %v5006
    %v5637 = vpack.c.b16 %v5021, %v5014
    %v5638 = vpack.c.b16 %v5022, %v5015
    %v5639 = vpack.c.b16 %v5023, %v5016
    %v5640 = vpack.c.b16 %v5024, %v5017
    %v5641 = vpack.c.b16 %v5025, %v5018
    %v5642 = vpack.c.b16 %v5026, %v5019
    %v5643 = vpack.c.b16 %v5027, %v5020
    %v5644 = vpack.c.b16 %v5035, %v5028
    %v5645 = vpack.c.b16 %v5036, %v5029
    %v5646 = vpack.c.b16 %v5037, %v5030
    %v5647 = vpack.c.b16 %v5038, %v5031
    %v5648 = vpack.c.b16 %v5039, %v5032
    %v5649 = vpack.c.b16 %v5040, %v5033
    %v5650 = vpack.c.b16 %v5041, %v5034
    %v5651 = vpack.c.b16 %v5049, %v5042
    %v5652 = vpack.c.b16 %v5050, %v5043
    %v5653 = vpack.c.b16 %v5051, %v5044
    %v5654 = vpack.c.b16 %v5052, %v5045
    %v5655 = vpack.c.b16 %v5053, %v5046
    %v5656 = vpack.c.b16 %v5054, %v5047
    %v5657 = vpack.c.b16 %v5055, %v5048
    %v5658 = vpack.c.b16 %v5063, %v5056
    %v5659 = vpack.c.b16 %v5064, %v5057
    %v5660 = vpack.c.b16 %v5065, %v5058
    %v5661 = vpack.c.b16 %v5066, %v5059
    %v5662 = vpack.c.b16 %v5067, %v5060
    %v5663 = vpack.c.b16 %v5068, %v5061
    %v5664 = vpack.c.b16 %v5069, %v5062
    %v5665 = vpack.c.b16 %v5077, %v5070
    %v5666 = vpack.c.b16 %v5078, %v5071
    %v5667 = vpack.c.b16 %v5079, %v5072
    %v5668 = vpack.c.b16 %v5080, %v5073
    %v5669 = vpack.c.b16 %v5081, %v5074
    %v5670 = vpack.c.b16 %v5082, %v5075
    %v5671 = vpack.c.b16 %v5083, %v5076
    %v5672 = vpack.c.b16 %v5091, %v5084
    %v5673 = vpack.c.b16 %v5092, %v5085
    %v5674 = vpack.c.b16 %v5093, %v5086
    %v5675 = vpack.c.b16 %v5094, %v5087
    %v5676 = vpack.c.b16 %v5095, %v5088
    %v5677 = vpack.c.b16 %v5096, %v5089
    %v5678 = vpack.c.b16 %v5097, %v5090
    %v5679 = vpack.c.b16 %v5105, %v5098
    %v5680 = vpack.c.b16 %v5106, %v5099
    %v5681 = vpack.c.b16 %v5107, %v5100
    %v5682 = vpack.c.b16 %v5108, %v5101
    %v5683 = vpack.c.b16 %v5109, %v5102
    %v5684 = vpack.c.b16 %v5110, %v5103
    %v5685 = vpack.c.b16 %v5111, %v5104
    %v5686 = vpack.c.b16 %v5119, %v5112
    %v5687 = vpack.c.b16 %v5120, %v5113
    %v5688 = vpack.c.b16 %v5121, %v5114
    %v5689 = vpack.c.b16 %v5122, %v5115
    %v5690 = vpack.c.b16 %v5123, %v5116
    %v5691 = vpack.c.b16 %v5124, %v5117
    %v5692 = vpack.c.b16 %v5125, %v5118
    %v5693 = vpack.c.b16 %v5133, %v5126
    %v5694 = vpack.c.b16 %v5134, %v5127
    %v5695 = vpack.c.b16 %v5135, %v5128
    %v5696 = vpack.c.b16 %v5136, %v5129
    %v5697 = vpack.c.b16 %v5137, %v5130
    %v5698 = vpack.c.b16 %v5138, %v5131
    %v5699 = vpack.c.b16 %v5139, %v5132
    %v5700 = vpack.c.b16 %v5147, %v5140
    %v5701 = vpack.c.b16 %v5148, %v5141
    %v5702 = vpack.c.b16 %v5149, %v5142
    %v5703 = vpack.c.b16 %v5150, %v5143
    %v5704 = vpack.c.b16 %v5151, %v5144
    %v5705 = vpack.c.b16 %v5152, %v5145
    %v5706 = vpack.c.b16 %v5153, %v5146
    %v5707 = vpack.c.b16 %v5161, %v5154
    %v5708 = vpack.c.b16 %v5162, %v5155
    %v5709 = vpack.c.b16 %v5163, %v5156
    %v5710 = vpack.c.b16 %v5164, %v5157
    %v5711 = vpack.c.b16 %v5165, %v5158
    %v5712 = vpack.c.b16 %v5166, %v5159
    %v5713 = vpack.c.b16 %v5167, %v5160
    %v5714 = vpack.c.b16 %v5175, %v5168
    %v5715 = vpack.c.b16 %v5176, %v5169
    %v5716 = vpack.c.b16 %v5177, %v5170
    %v5717 = vpack.c.b16 %v5178, %v5171
    %v5718 = vpack.c.b16 %v5179, %v5172
    %v5719 = vpack.c.b16 %v5180, %v5173
    %v5720 = vpack.c.b16 %v5181, %v5174
    %v5721 = vpack.c.b16 %v5189, %v5182
    %v5722 = vpack.c.b16 %v5190, %v5183
    %v5723 = vpack.c.b16 %v5191, %v5184
    %v5724 = vpack.c.b16 %v5192, %v5185
    %v5725 = vpack.c.b16 %v5193, %v5186
    %v5726 = vpack.c.b16 %v5194, %v5187
    %v5727 = vpack.c.b16 %v5195, %v5188
    %v5728 = vpack.c.b16 %v5203, %v5196
    %v5729 = vpack.c.b16 %v5204, %v5197
    %v5730 = vpack.c.b16 %v5205, %v5198
    %v5731 = vpack.c.b16 %v5206, %v5199
    %v5732 = vpack.c.b16 %v5207, %v5200
    %v5733 = vpack.c.b16 %v5208, %v5201
    %v5734 = vpack.c.b16 %v5209, %v5202
    %v5735 = vpack.c.b16 %v5217, %v5210
    %v5736 = vpack.c.b16 %v5218, %v5211
    %v5737 = vpack.c.b16 %v5219, %v5212
    %v5738 = vpack.c.b16 %v5220, %v5213
    %v5739 = vpack.c.b16 %v5221, %v5214
    %v5740 = vpack.c.b16 %v5222, %v5215
    %v5741 = vpack.c.b16 %v5223, %v5216
    %v5742 = vpack.c.b16 %v5231, %v5224
    %v5743 = vpack.c.b16 %v5232, %v5225
    %v5744 = vpack.c.b16 %v5233, %v5226
    %v5745 = vpack.c.b16 %v5234, %v5227
    %v5746 = vpack.c.b16 %v5235, %v5228
    %v5747 = vpack.c.b16 %v5236, %v5229
    %v5748 = vpack.c.b16 %v5237, %v5230
    %v5749 = vpack.c.b16 %v5245, %v5238
    %v5750 = vpack.c.b16 %v5246, %v5239
    %v5751 = vpack.c.b16 %v5247, %v5240
    %v5752 = vpack.c.b16 %v5248, %v5241
    %v5753 = vpack.c.b16 %v5249, %v5242
    %v5754 = vpack.c.b16 %v5250, %v5243
    %v5755 = vpack.c.b16 %v5251, %v5244
    %v5756 = vpack.c.b16 %v5259, %v5252
    %v5757 = vpack.c.b16 %v5260, %v5253
    %v5758 = vpack.c.b16 %v5261, %v5254
    %v5759 = vpack.c.b16 %v5262, %v5255
    %v5760 = vpack.c.b16 %v5263, %v5256
    %v5761 = vpack.c.b16 %v5264, %v5257
    %v5762 = vpack.c.b16 %v5265, %v5258
    %v5763 = vpack.c.b16 %v5273, %v5266
    %v5764 = vpack.c.b16 %v5274, %v5267
    %v5765 = vpack.c.b16 %v5275, %v5268
    %v5766 = vpack.c.b16 %v5276, %v5269
    %v5767 = vpack.c.b16 %v5277, %v5270
    %v5768 = vpack.c.b16 %v5278, %v5271
    %v5769 = vpack.c.b16 %v5279, %v5272
    %v5770 = vpack.c.b16 %v5287, %v5280
    %v5771 = vpack.c.b16 %v5288, %v5281
    %v5772 = vpack.c.b16 %v5289, %v5282
    %v5773 = vpack.c.b16 %v5290, %v5283
    %v5774 = vpack.c.b16 %v5291, %v5284
    %v5775 = vpack.c.b16 %v5292, %v5285
    %v5776 = vpack.c.b16 %v5293, %v5286
    %v5777 = vpack.c.b16 %v5301, %v5294
    %v5778 = vpack.c.b16 %v5302, %v5295
    %v5779 = vpack.c.b16 %v5303, %v5296
    %v5780 = vpack.c.b16 %v5304, %v5297
    %v5781 = vpack.c.b16 %v5305, %v5298
    %v5782 = vpack.c.b16 %v5306, %v5299
    %v5783 = vpack.c.b16 %v5307, %v5300
    %v5784 = vpack.c.b16 %v5315, %v5308
    %v5785 = vpack.c.b16 %v5316, %v5309
    %v5786 = vpack.c.b16 %v5317, %v5310
    %v5787 = vpack.c.b16 %v5318, %v5311
    %v5788 = vpack.c.b16 %v5319, %v5312
    %v5789 = vpack.c.b16 %v5320, %v5313
    %v5790 = vpack.c.b16 %v5321, %v5314
    %v5791 = vpack.c.b16 %v5329, %v5322
    %v5792 = vpack.c.b16 %v5330, %v5323
    %v5793 = vpack.c.b16 %v5331, %v5324
    %v5794 = vpack.c.b16 %v5332, %v5325
    %v5795 = vpack.c.b16 %v5333, %v5326
    %v5796 = vpack.c.b16 %v5334, %v5327
    %v5797 = vpack.c.b16 %v5335, %v5328
    %v5798 = vpack.c.b16 %v5343, %v5336
    %v5799 = vpack.c.b16 %v5344, %v5337
    %v5800 = vpack.c.b16 %v5345, %v5338
    %v5801 = vpack.c.b16 %v5346, %v5339
    %v5802 = vpack.c.b16 %v5347, %v5340
    %v5803 = vpack.c.b16 %v5348, %v5341
    %v5804 = vpack.c.b16 %v5349, %v5342
    %v5805 = vpack.c.b16 %v5357, %v5350
    %v5806 = vpack.c.b16 %v5358, %v5351
    %v5807 = vpack.c.b16 %v5359, %v5352
    %v5808 = vpack.c.b16 %v5360, %v5353
    %v5809 = vpack.c.b16 %v5361, %v5354
    %v5810 = vpack.c.b16 %v5362, %v5355
    %v5811 = vpack.c.b16 %v5363, %v5356
    %6260 = vmatprep.subr.bf16.mxu0 %v5365
    %6261 = vmatpush1.bf16.msra.mxu0 %v5364
    %6262 = vmatprep.subr.bf16.mxu0 %v5372
    %6263 = vmatpush1.bf16.msra.mxu0 %v5371
    %6264 = vmatprep.subr.bf16.mxu0 %v5379
    %6265 = vmatpush1.bf16.msra.mxu0 %v5378
    %6266 = vmatprep.subr.bf16.mxu0 %v5386
    %6267 = vmatpush1.bf16.msra.mxu0 %v5385
    %6268 = vmatprep.subr.bf16.mxu0 %v5393
    %6269 = vmatpush1.bf16.msra.mxu0 %v5392
    %6270 = vmatprep.subr.bf16.mxu0 %v5400
    %6271 = vmatpush1.bf16.msra.mxu0 %v5399
    %6272 = vmatprep.subr.bf16.mxu0 %v5407
    %6273 = vmatpush1.bf16.msra.mxu0 %v5406
    %6274 = vmatprep.subr.bf16.mxu0 %v5414
    %6275 = vmatpush1.bf16.msra.mxu0 %v5413
    %6276 = vmatprep.subr.bf16.mxu0 %v5421
    %6277 = vmatpush1.bf16.msra.mxu0 %v5420
    %6278 = vmatprep.subr.bf16.mxu0 %v5428
    %6279 = vmatpush1.bf16.msra.mxu0 %v5427
    %6280 = vmatprep.subr.bf16.mxu0 %v5435
    %6281 = vmatpush1.bf16.msra.mxu0 %v5434
    %6282 = vmatprep.subr.bf16.mxu0 %v5442
    %6283 = vmatpush1.bf16.msra.mxu0 %v5441
    %6284 = vmatprep.subr.bf16.mxu0 %v5449
    %6285 = vmatpush1.bf16.msra.mxu0 %v5448
    %6286 = vmatprep.subr.bf16.mxu0 %v5456
    %6287 = vmatpush1.bf16.msra.mxu0 %v5455
    %6288 = vmatprep.subr.bf16.mxu0 %v5463
    %6289 = vmatpush1.bf16.msra.mxu0 %v5462
    %6290 = vmatprep.subr.bf16.mxu0 %v5470
    %6291 = vmatpush1.bf16.msra.mxu0 %v5469
    %6292 = vmatprep.mubr.bf16.mxu0 %v3400
    %6293 = vmatmul.mubr.bf16.gmra.mrb[0].mxu0 %v3399
    %v6294 = vpop.f32.mrb[0].mxu0
    %v6295 = vadd.f32 %v3924, %v6294
    %v6296 = vpop.f32.mrb[0].mxu0
    %v6297 = vadd.f32 %v3928, %v6296
    %v6298 = vpop.f32.mrb[0].mxu0
    %v6299 = vpop.f32.mrb[0].mxu0
    %6300 = vdwg.mxu0
    %6301 = vmatprep.subr.bf16.mxu0 %v5477
    %6302 = vmatpush1.bf16.msra.mxu0 %v5476
    %6303 = vmatprep.subr.bf16.mxu0 %v5484
    %6304 = vmatpush1.bf16.msra.mxu0 %v5483
    %6305 = vmatprep.subr.bf16.mxu0 %v5491
    %6306 = vmatpush1.bf16.msra.mxu0 %v5490
    %6307 = vmatprep.subr.bf16.mxu0 %v5498
    %6308 = vmatpush1.bf16.msra.mxu0 %v5497
    %6309 = vmatprep.subr.bf16.mxu0 %v5505
    %6310 = vmatpush1.bf16.msra.mxu0 %v5504
    %6311 = vmatprep.subr.bf16.mxu0 %v5512
    %6312 = vmatpush1.bf16.msra.mxu0 %v5511
    %6313 = vmatprep.subr.bf16.mxu0 %v5519
    %6314 = vmatpush1.bf16.msra.mxu0 %v5518
    %6315 = vmatprep.subr.bf16.mxu0 %v5526
    %6316 = vmatpush1.bf16.msra.mxu0 %v5525
    %6317 = vmatprep.subr.bf16.mxu0 %v5533
    %6318 = vmatpush1.bf16.msra.mxu0 %v5532
    %6319 = vmatprep.subr.bf16.mxu0 %v5540
    %6320 = vmatpush1.bf16.msra.mxu0 %v5539
    %6321 = vmatprep.subr.bf16.mxu0 %v5547
    %6322 = vmatpush1.bf16.msra.mxu0 %v5546
    %6323 = vmatprep.subr.bf16.mxu0 %v5554
    %6324 = vmatpush1.bf16.msra.mxu0 %v5553
    %6325 = vmatprep.subr.bf16.mxu0 %v5561
    %6326 = vmatpush1.bf16.msra.mxu0 %v5560
    %6327 = vmatprep.subr.bf16.mxu0 %v5568
    %6328 = vmatpush1.bf16.msra.mxu0 %v5567
    %6329 = vmatprep.subr.bf16.mxu0 %v5575
    %6330 = vmatpush1.bf16.msra.mxu0 %v5574
    %6331 = vmatprep.subr.bf16.mxu0 %v5582
    %6332 = vmatpush1.bf16.msra.mxu0 %v5581
    %6333 = vmatprep.mubr.bf16.mxu0 %v3402
    %6334 = vmatmul.mubr.bf16.gmra.mrb[0].mxu0 %v3401
    %v6335 = vpop.f32.mrb[0].mxu0
    %v6336 = vadd.f32 %v6295, %v6335
    %v6337 = vpop.f32.mrb[0].mxu0
    %v6338 = vadd.f32 %v6297, %v6337
    %v6339 = vpop.f32.mrb[0].mxu0
    %v6340 = vpop.f32.mrb[0].mxu0
    %6341 = vdwg.mxu0
    %6342 = vmatprep.subr.bf16.mxu0 %v5589
    %6343 = vmatpush1.bf16.msra.mxu0 %v5588
    %6344 = vmatprep.subr.bf16.mxu0 %v5596
    %6345 = vmatpush1.bf16.msra.mxu0 %v5595
    %6346 = vmatprep.subr.bf16.mxu0 %v5603
    %6347 = vmatpush1.bf16.msra.mxu0 %v5602
    %6348 = vmatprep.subr.bf16.mxu0 %v5610
    %6349 = vmatpush1.bf16.msra.mxu0 %v5609
    %6350 = vmatprep.subr.bf16.mxu0 %v5617
    %6351 = vmatpush1.bf16.msra.mxu0 %v5616
    %6352 = vmatprep.subr.bf16.mxu0 %v5624
    %6353 = vmatpush1.bf16.msra.mxu0 %v5623
    %6354 = vmatprep.subr.bf16.mxu0 %v5631
    %6355 = vmatpush1.bf16.msra.mxu0 %v5630
    %6356 = vmatprep.subr.bf16.mxu0 %v5638
    %6357 = vmatpush1.bf16.msra.mxu0 %v5637
    %6358 = vmatprep.subr.bf16.mxu0 %v5645
    %6359 = vmatpush1.bf16.msra.mxu0 %v5644
    %6360 = vmatprep.subr.bf16.mxu0 %v5652
    %6361 = vmatpush1.bf16.msra.mxu0 %v5651
    %6362 = vmatprep.subr.bf16.mxu0 %v5659
    %6363 = vmatpush1.bf16.msra.mxu0 %v5658
    %6364 = vmatprep.subr.bf16.mxu0 %v5666
    %6365 = vmatpush1.bf16.msra.mxu0 %v5665
    %6366 = vmatprep.subr.bf16.mxu0 %v5673
    %6367 = vmatpush1.bf16.msra.mxu0 %v5672
    %6368 = vmatprep.subr.bf16.mxu0 %v5680
    %6369 = vmatpush1.bf16.msra.mxu0 %v5679
    %6370 = vmatprep.subr.bf16.mxu0 %v5687
    %6371 = vmatpush1.bf16.msra.mxu0 %v5686
    %6372 = vmatprep.subr.bf16.mxu0 %v5694
    %6373 = vmatpush1.bf16.msra.mxu0 %v5693
    %6374 = vmatprep.mubr.bf16.mxu0 %v3404
    %6375 = vmatmul.mubr.bf16.gmra.mrb[0].mxu0 %v3403
    %v6376 = vpop.f32.mrb[0].mxu0
    %v6377 = vadd.f32 %v6336, %v6376
    %v6378 = vpop.f32.mrb[0].mxu0
    %v6379 = vadd.f32 %v6338, %v6378
    %v6380 = vpop.f32.mrb[0].mxu0
    %v6381 = vpop.f32.mrb[0].mxu0
    %6382 = vdwg.mxu0
    %6383 = vmatprep.subr.bf16.mxu0 %v5701
    %6384 = vmatpush1.bf16.msra.mxu0 %v5700
    %6385 = vmatprep.subr.bf16.mxu0 %v5708
    %6386 = vmatpush1.bf16.msra.mxu0 %v5707
    %6387 = vmatprep.subr.bf16.mxu0 %v5715
    %6388 = vmatpush1.bf16.msra.mxu0 %v5714
    %6389 = vmatprep.subr.bf16.mxu0 %v5722
    %6390 = vmatpush1.bf16.msra.mxu0 %v5721
    %6391 = vmatprep.subr.bf16.mxu0 %v5729
    %6392 = vmatpush1.bf16.msra.mxu0 %v5728
    %6393 = vmatprep.subr.bf16.mxu0 %v5736
    %6394 = vmatpush1.bf16.msra.mxu0 %v5735
    %6395 = vmatprep.subr.bf16.mxu0 %v5743
    %6396 = vmatpush1.bf16.msra.mxu0 %v5742
    %6397 = vmatprep.subr.bf16.mxu0 %v5750
    %6398 = vmatpush1.bf16.msra.mxu0 %v5749
    %6399 = vmatprep.subr.bf16.mxu0 %v5757
    %6400 = vmatpush1.bf16.msra.mxu0 %v5756
    %6401 = vmatprep.subr.bf16.mxu0 %v5764
    %6402 = vmatpush1.bf16.msra.mxu0 %v5763
    %6403 = vmatprep.subr.bf16.mxu0 %v5771
    %6404 = vmatpush1.bf16.msra.mxu0 %v5770
    %6405 = vmatprep.subr.bf16.mxu0 %v5778
    %6406 = vmatpush1.bf16.msra.mxu0 %v5777
    %6407 = vmatprep.subr.bf16.mxu0 %v5785
    %6408 = vmatpush1.bf16.msra.mxu0 %v5784
    %6409 = vmatprep.subr.bf16.mxu0 %v5792
    %6410 = vmatpush1.bf16.msra.mxu0 %v5791
    %6411 = vmatprep.subr.bf16.mxu0 %v5799
    %6412 = vmatpush1.bf16.msra.mxu0 %v5798
    %6413 = vmatprep.subr.bf16.mxu0 %v5806
    %6414 = vmatpush1.bf16.msra.mxu0 %v5805
    %6415 = vmatprep.mubr.bf16.mxu0 %v3406
    %6416 = vmatmul.mubr.bf16.gmra.mrb[0].mxu0 %v3405
    %v6417 = vpop.f32.mrb[0].mxu0
    %v6418 = vadd.f32 %v6377, %v6417
    %v6419 = vpop.f32.mrb[0].mxu0
    %v6420 = vadd.f32 %v6379, %v6419
    %v6421 = vpop.f32.mrb[0].mxu0
    %v6422 = vpop.f32.mrb[0].mxu0
    %6423 = vdwg.mxu0
    %6424 = vmatprep.subr.bf16.mxu0 %v5367
    %6425 = vmatpush1.bf16.msra.mxu0 %v5366
    %6426 = vmatprep.subr.bf16.mxu0 %v5374
    %6427 = vmatpush1.bf16.msra.mxu0 %v5373
    %6428 = vmatprep.subr.bf16.mxu0 %v5381
    %6429 = vmatpush1.bf16.msra.mxu0 %v5380
    %6430 = vmatprep.subr.bf16.mxu0 %v5388
    %6431 = vmatpush1.bf16.msra.mxu0 %v5387
    %6432 = vmatprep.subr.bf16.mxu0 %v5395
    %6433 = vmatpush1.bf16.msra.mxu0 %v5394
    %6434 = vmatprep.subr.bf16.mxu0 %v5402
    %6435 = vmatpush1.bf16.msra.mxu0 %v5401
    %6436 = vmatprep.subr.bf16.mxu0 %v5409
    %6437 = vmatpush1.bf16.msra.mxu0 %v5408
    %6438 = vmatprep.subr.bf16.mxu0 %v5416
    %6439 = vmatpush1.bf16.msra.mxu0 %v5415
    %6440 = vmatprep.subr.bf16.mxu0 %v5423
    %6441 = vmatpush1.bf16.msra.mxu0 %v5422
    %6442 = vmatprep.subr.bf16.mxu0 %v5430
    %6443 = vmatpush1.bf16.msra.mxu0 %v5429
    %6444 = vmatprep.subr.bf16.mxu0 %v5437
    %6445 = vmatpush1.bf16.msra.mxu0 %v5436
    %6446 = vmatprep.subr.bf16.mxu0 %v5444
    %6447 = vmatpush1.bf16.msra.mxu0 %v5443
    %6448 = vmatprep.subr.bf16.mxu0 %v5451
    %6449 = vmatpush1.bf16.msra.mxu0 %v5450
    %6450 = vmatprep.subr.bf16.mxu0 %v5458
    %6451 = vmatpush1.bf16.msra.mxu0 %v5457
    %6452 = vmatprep.subr.bf16.mxu0 %v5465
    %6453 = vmatpush1.bf16.msra.mxu0 %v5464
    %6454 = vmatprep.subr.bf16.mxu0 %v5472
    %6455 = vmatpush1.bf16.msra.mxu0 %v5471
    %6456 = vmatprep.mubr.bf16.mxu0 %v3400
    %6457 = vmatmul.mubr.bf16.gmra.mrb[0].mxu0 %v3399
    %v6458 = vpop.f32.mrb[0].mxu0
    %v6459 = vadd.f32 %v3932, %v6458
    %v6460 = vpop.f32.mrb[0].mxu0
    %v6461 = vadd.f32 %v3936, %v6460
    %v6462 = vpop.f32.mrb[0].mxu0
    %v6463 = vpop.f32.mrb[0].mxu0
    %6464 = vdwg.mxu0
    %6465 = vmatprep.subr.bf16.mxu0 %v5479
    %6466 = vmatpush1.bf16.msra.mxu0 %v5478
    %6467 = vmatprep.subr.bf16.mxu0 %v5486
    %6468 = vmatpush1.bf16.msra.mxu0 %v5485
    %6469 = vmatprep.subr.bf16.mxu0 %v5493
    %6470 = vmatpush1.bf16.msra.mxu0 %v5492
    %6471 = vmatprep.subr.bf16.mxu0 %v5500
    %6472 = vmatpush1.bf16.msra.mxu0 %v5499
    %6473 = vmatprep.subr.bf16.mxu0 %v5507
    %6474 = vmatpush1.bf16.msra.mxu0 %v5506
    %6475 = vmatprep.subr.bf16.mxu0 %v5514
    %6476 = vmatpush1.bf16.msra.mxu0 %v5513
    %6477 = vmatprep.subr.bf16.mxu0 %v5521
    %6478 = vmatpush1.bf16.msra.mxu0 %v5520
    %6479 = vmatprep.subr.bf16.mxu0 %v5528
    %6480 = vmatpush1.bf16.msra.mxu0 %v5527
    %6481 = vmatprep.subr.bf16.mxu0 %v5535
    %6482 = vmatpush1.bf16.msra.mxu0 %v5534
    %6483 = vmatprep.subr.bf16.mxu0 %v5542
    %6484 = vmatpush1.bf16.msra.mxu0 %v5541
    %6485 = vmatprep.subr.bf16.mxu0 %v5549
    %6486 = vmatpush1.bf16.msra.mxu0 %v5548
    %6487 = vmatprep.subr.bf16.mxu0 %v5556
    %6488 = vmatpush1.bf16.msra.mxu0 %v5555
    %6489 = vmatprep.subr.bf16.mxu0 %v5563
    %6490 = vmatpush1.bf16.msra.mxu0 %v5562
    %6491 = vmatprep.subr.bf16.mxu0 %v5570
    %6492 = vmatpush1.bf16.msra.mxu0 %v5569
    %6493 = vmatprep.subr.bf16.mxu0 %v5577
    %6494 = vmatpush1.bf16.msra.mxu0 %v5576
    %6495 = vmatprep.subr.bf16.mxu0 %v5584
    %6496 = vmatpush1.bf16.msra.mxu0 %v5583
    %6497 = vmatprep.mubr.bf16.mxu0 %v3402
    %6498 = vmatmul.mubr.bf16.gmra.mrb[0].mxu0 %v3401
    %v6499 = vpop.f32.mrb[0].mxu0
    %v6500 = vadd.f32 %v6459, %v6499
    %v6501 = vpop.f32.mrb[0].mxu0
    %v6502 = vadd.f32 %v6461, %v6501
    %v6503 = vpop.f32.mrb[0].mxu0
    %v6504 = vpop.f32.mrb[0].mxu0
    %6505 = vdwg.mxu0
    %6506 = vmatprep.subr.bf16.mxu0 %v5591
    %6507 = vmatpush1.bf16.msra.mxu0 %v5590
    %6508 = vmatprep.subr.bf16.mxu0 %v5598
    %6509 = vmatpush1.bf16.msra.mxu0 %v5597
    %6510 = vmatprep.subr.bf16.mxu0 %v5605
    %6511 = vmatpush1.bf16.msra.mxu0 %v5604
    %6512 = vmatprep.subr.bf16.mxu0 %v5612
    %6513 = vmatpush1.bf16.msra.mxu0 %v5611
    %6514 = vmatprep.subr.bf16.mxu0 %v5619
    %6515 = vmatpush1.bf16.msra.mxu0 %v5618
    %6516 = vmatprep.subr.bf16.mxu0 %v5626
    %6517 = vmatpush1.bf16.msra.mxu0 %v5625
    %6518 = vmatprep.subr.bf16.mxu0 %v5633
    %6519 = vmatpush1.bf16.msra.mxu0 %v5632
    %6520 = vmatprep.subr.bf16.mxu0 %v5640
    %6521 = vmatpush1.bf16.msra.mxu0 %v5639
    %6522 = vmatprep.subr.bf16.mxu0 %v5647
    %6523 = vmatpush1.bf16.msra.mxu0 %v5646
    %6524 = vmatprep.subr.bf16.mxu0 %v5654
    %6525 = vmatpush1.bf16.msra.mxu0 %v5653
    %6526 = vmatprep.subr.bf16.mxu0 %v5661
    %6527 = vmatpush1.bf16.msra.mxu0 %v5660
    %6528 = vmatprep.subr.bf16.mxu0 %v5668
    %6529 = vmatpush1.bf16.msra.mxu0 %v5667
    %6530 = vmatprep.subr.bf16.mxu0 %v5675
    %6531 = vmatpush1.bf16.msra.mxu0 %v5674
    %6532 = vmatprep.subr.bf16.mxu0 %v5682
    %6533 = vmatpush1.bf16.msra.mxu0 %v5681
    %6534 = vmatprep.subr.bf16.mxu0 %v5689
    %6535 = vmatpush1.bf16.msra.mxu0 %v5688
    %6536 = vmatprep.subr.bf16.mxu0 %v5696
    %6537 = vmatpush1.bf16.msra.mxu0 %v5695
    %6538 = vmatprep.mubr.bf16.mxu0 %v3404
    %6539 = vmatmul.mubr.bf16.gmra.mrb[0].mxu0 %v3403
    %v6540 = vpop.f32.mrb[0].mxu0
    %v6541 = vadd.f32 %v6500, %v6540
    %v6542 = vpop.f32.mrb[0].mxu0
    %v6543 = vadd.f32 %v6502, %v6542
    %v6544 = vpop.f32.mrb[0].mxu0
    %v6545 = vpop.f32.mrb[0].mxu0
    %6546 = vdwg.mxu0
    %6547 = vmatprep.subr.bf16.mxu0 %v5703
    %6548 = vmatpush1.bf16.msra.mxu0 %v5702
    %6549 = vmatprep.subr.bf16.mxu0 %v5710
    %6550 = vmatpush1.bf16.msra.mxu0 %v5709
    %6551 = vmatprep.subr.bf16.mxu0 %v5717
    %6552 = vmatpush1.bf16.msra.mxu0 %v5716
    %6553 = vmatprep.subr.bf16.mxu0 %v5724
    %6554 = vmatpush1.bf16.msra.mxu0 %v5723
    %6555 = vmatprep.subr.bf16.mxu0 %v5731
    %6556 = vmatpush1.bf16.msra.mxu0 %v5730
    %6557 = vmatprep.subr.bf16.mxu0 %v5738
    %6558 = vmatpush1.bf16.msra.mxu0 %v5737
    %6559 = vmatprep.subr.bf16.mxu0 %v5745
    %6560 = vmatpush1.bf16.msra.mxu0 %v5744
    %6561 = vmatprep.subr.bf16.mxu0 %v5752
    %6562 = vmatpush1.bf16.msra.mxu0 %v5751
    %6563 = vmatprep.subr.bf16.mxu0 %v5759
    %6564 = vmatpush1.bf16.msra.mxu0 %v5758
    %6565 = vmatprep.subr.bf16.mxu0 %v5766
    %6566 = vmatpush1.bf16.msra.mxu0 %v5765
    %6567 = vmatprep.subr.bf16.mxu0 %v5773
    %6568 = vmatpush1.bf16.msra.mxu0 %v5772
    %6569 = vmatprep.subr.bf16.mxu0 %v5780
    %6570 = vmatpush1.bf16.msra.mxu0 %v5779
    %6571 = vmatprep.subr.bf16.mxu0 %v5787
    %6572 = vmatpush1.bf16.msra.mxu0 %v5786
    %6573 = vmatprep.subr.bf16.mxu0 %v5794
    %6574 = vmatpush1.bf16.msra.mxu0 %v5793
    %6575 = vmatprep.subr.bf16.mxu0 %v5801
    %6576 = vmatpush1.bf16.msra.mxu0 %v5800
    %6577 = vmatprep.subr.bf16.mxu0 %v5808
    %6578 = vmatpush1.bf16.msra.mxu0 %v5807
    %6579 = vmatprep.mubr.bf16.mxu0 %v3406
    %6580 = vmatmul.mubr.bf16.gmra.mrb[0].mxu0 %v3405
    %v6581 = vpop.f32.mrb[0].mxu0
    %v6582 = vadd.f32 %v6541, %v6581
    %v6583 = vpop.f32.mrb[0].mxu0
    %v6584 = vadd.f32 %v6543, %v6583
    %v6585 = vpop.f32.mrb[0].mxu0
    %v6586 = vpop.f32.mrb[0].mxu0
    %6587 = vdwg.mxu0
    %6588 = vmatprep.subr.bf16.mxu0 %v5369
    %6589 = vmatpush1.bf16.msra.mxu0 %v5368
    %6590 = vmatprep.subr.bf16.mxu0 %v5376
    %6591 = vmatpush1.bf16.msra.mxu0 %v5375
    %6592 = vmatprep.subr.bf16.mxu0 %v5383
    %6593 = vmatpush1.bf16.msra.mxu0 %v5382
    %6594 = vmatprep.subr.bf16.mxu0 %v5390
    %6595 = vmatpush1.bf16.msra.mxu0 %v5389
    %6596 = vmatprep.subr.bf16.mxu0 %v5397
    %6597 = vmatpush1.bf16.msra.mxu0 %v5396
    %6598 = vmatprep.subr.bf16.mxu0 %v5404
    %6599 = vmatpush1.bf16.msra.mxu0 %v5403
    %6600 = vmatprep.subr.bf16.mxu0 %v5411
    %6601 = vmatpush1.bf16.msra.mxu0 %v5410
    %6602 = vmatprep.subr.bf16.mxu0 %v5418
    %6603 = vmatpush1.bf16.msra.mxu0 %v5417
    %6604 = vmatprep.subr.bf16.mxu0 %v5425
    %6605 = vmatpush1.bf16.msra.mxu0 %v5424
    %6606 = vmatprep.subr.bf16.mxu0 %v5432
    %6607 = vmatpush1.bf16.msra.mxu0 %v5431
    %6608 = vmatprep.subr.bf16.mxu0 %v5439
    %6609 = vmatpush1.bf16.msra.mxu0 %v5438
    %6610 = vmatprep.subr.bf16.mxu0 %v5446
    %6611 = vmatpush1.bf16.msra.mxu0 %v5445
    %6612 = vmatprep.subr.bf16.mxu0 %v5453
    %6613 = vmatpush1.bf16.msra.mxu0 %v5452
    %6614 = vmatprep.subr.bf16.mxu0 %v5460
    %6615 = vmatpush1.bf16.msra.mxu0 %v5459
    %6616 = vmatprep.subr.bf16.mxu0 %v5467
    %6617 = vmatpush1.bf16.msra.mxu0 %v5466
    %6618 = vmatprep.subr.bf16.mxu0 %v5474
    %6619 = vmatpush1.bf16.msra.mxu0 %v5473
    %6620 = vmatprep.mubr.bf16.mxu0 %v3400
    %6621 = vmatmul.mubr.bf16.gmra.mrb[0].mxu0 %v3399
    %v6622 = vpop.f32.mrb[0].mxu0
    %v6623 = vadd.f32 %v3940, %v6622
    %v6624 = vpop.f32.mrb[0].mxu0
    %v6625 = vadd.f32 %v3944, %v6624
    %v6626 = vpop.f32.mrb[0].mxu0
    %v6627 = vpop.f32.mrb[0].mxu0
    %6628 = vdwg.mxu0
    %6629 = vmatprep.subr.bf16.mxu0 %v5481
    %6630 = vmatpush1.bf16.msra.mxu0 %v5480
    %6631 = vmatprep.subr.bf16.mxu0 %v5488
    %6632 = vmatpush1.bf16.msra.mxu0 %v5487
    %6633 = vmatprep.subr.bf16.mxu0 %v5495
    %6634 = vmatpush1.bf16.msra.mxu0 %v5494
    %6635 = vmatprep.subr.bf16.mxu0 %v5502
    %6636 = vmatpush1.bf16.msra.mxu0 %v5501
    %6637 = vmatprep.subr.bf16.mxu0 %v5509
    %6638 = vmatpush1.bf16.msra.mxu0 %v5508
    %6639 = vmatprep.subr.bf16.mxu0 %v5516
    %6640 = vmatpush1.bf16.msra.mxu0 %v5515
    %6641 = vmatprep.subr.bf16.mxu0 %v5523
    %6642 = vmatpush1.bf16.msra.mxu0 %v5522
    %6643 = vmatprep.subr.bf16.mxu0 %v5530
    %6644 = vmatpush1.bf16.msra.mxu0 %v5529
    %6645 = vmatprep.subr.bf16.mxu0 %v5537
    %6646 = vmatpush1.bf16.msra.mxu0 %v5536
    %6647 = vmatprep.subr.bf16.mxu0 %v5544
    %6648 = vmatpush1.bf16.msra.mxu0 %v5543
    %6649 = vmatprep.subr.bf16.mxu0 %v5551
    %6650 = vmatpush1.bf16.msra.mxu0 %v5550
    %6651 = vmatprep.subr.bf16.mxu0 %v5558
    %6652 = vmatpush1.bf16.msra.mxu0 %v5557
    %6653 = vmatprep.subr.bf16.mxu0 %v5565
    %6654 = vmatpush1.bf16.msra.mxu0 %v5564
    %6655 = vmatprep.subr.bf16.mxu0 %v5572
    %6656 = vmatpush1.bf16.msra.mxu0 %v5571
    %6657 = vmatprep.subr.bf16.mxu0 %v5579
    %6658 = vmatpush1.bf16.msra.mxu0 %v5578
    %6659 = vmatprep.subr.bf16.mxu0 %v5586
    %6660 = vmatpush1.bf16.msra.mxu0 %v5585
    %6661 = vmatprep.mubr.bf16.mxu0 %v3402
    %6662 = vmatmul.mubr.bf16.gmra.mrb[0].mxu0 %v3401
    %v6663 = vpop.f32.mrb[0].mxu0
    %v6664 = vadd.f32 %v6623, %v6663
    %v6665 = vpop.f32.mrb[0].mxu0
    %v6666 = vadd.f32 %v6625, %v6665
    %v6667 = vpop.f32.mrb[0].mxu0
    %v6668 = vpop.f32.mrb[0].mxu0
    %6669 = vdwg.mxu0
    %6670 = vmatprep.subr.bf16.mxu0 %v5593
    %6671 = vmatpush1.bf16.msra.mxu0 %v5592
    %6672 = vmatprep.subr.bf16.mxu0 %v5600
    %6673 = vmatpush1.bf16.msra.mxu0 %v5599
    %6674 = vmatprep.subr.bf16.mxu0 %v5607
    %6675 = vmatpush1.bf16.msra.mxu0 %v5606
    %6676 = vmatprep.subr.bf16.mxu0 %v5614
    %6677 = vmatpush1.bf16.msra.mxu0 %v5613
    %6678 = vmatprep.subr.bf16.mxu0 %v5621
    %6679 = vmatpush1.bf16.msra.mxu0 %v5620
    %6680 = vmatprep.subr.bf16.mxu0 %v5628
    %6681 = vmatpush1.bf16.msra.mxu0 %v5627
    %6682 = vmatprep.subr.bf16.mxu0 %v5635
    %6683 = vmatpush1.bf16.msra.mxu0 %v5634
    %6684 = vmatprep.subr.bf16.mxu0 %v5642
    %6685 = vmatpush1.bf16.msra.mxu0 %v5641
    %6686 = vmatprep.subr.bf16.mxu0 %v5649
    %6687 = vmatpush1.bf16.msra.mxu0 %v5648
    %6688 = vmatprep.subr.bf16.mxu0 %v5656
    %6689 = vmatpush1.bf16.msra.mxu0 %v5655
    %6690 = vmatprep.subr.bf16.mxu0 %v5663
    %6691 = vmatpush1.bf16.msra.mxu0 %v5662
    %6692 = vmatprep.subr.bf16.mxu0 %v5670
    %6693 = vmatpush1.bf16.msra.mxu0 %v5669
    %6694 = vmatprep.subr.bf16.mxu0 %v5677
    %6695 = vmatpush1.bf16.msra.mxu0 %v5676
    %6696 = vmatprep.subr.bf16.mxu0 %v5684
    %6697 = vmatpush1.bf16.msra.mxu0 %v5683
    %6698 = vmatprep.subr.bf16.mxu0 %v5691
    %6699 = vmatpush1.bf16.msra.mxu0 %v5690
    %6700 = vmatprep.subr.bf16.mxu0 %v5698
    %6701 = vmatpush1.bf16.msra.mxu0 %v5697
    %6702 = vmatprep.mubr.bf16.mxu0 %v3404
    %6703 = vmatmul.mubr.bf16.gmra.mrb[0].mxu0 %v3403
    %v6704 = vpop.f32.mrb[0].mxu0
    %v6705 = vadd.f32 %v6664, %v6704
    %v6706 = vpop.f32.mrb[0].mxu0
    %v6707 = vadd.f32 %v6666, %v6706
    %v6708 = vpop.f32.mrb[0].mxu0
    %v6709 = vpop.f32.mrb[0].mxu0
    %6710 = vdwg.mxu0
    %6711 = vmatprep.subr.bf16.mxu0 %v5705
    %6712 = vmatpush1.bf16.msra.mxu0 %v5704
    %6713 = vmatprep.subr.bf16.mxu0 %v5712
    %6714 = vmatpush1.bf16.msra.mxu0 %v5711
    %6715 = vmatprep.subr.bf16.mxu0 %v5719
    %6716 = vmatpush1.bf16.msra.mxu0 %v5718
    %6717 = vmatprep.subr.bf16.mxu0 %v5726
    %6718 = vmatpush1.bf16.msra.mxu0 %v5725
    %6719 = vmatprep.subr.bf16.mxu0 %v5733
    %6720 = vmatpush1.bf16.msra.mxu0 %v5732
    %6721 = vmatprep.subr.bf16.mxu0 %v5740
    %6722 = vmatpush1.bf16.msra.mxu0 %v5739
    %6723 = vmatprep.subr.bf16.mxu0 %v5747
    %6724 = vmatpush1.bf16.msra.mxu0 %v5746
    %6725 = vmatprep.subr.bf16.mxu0 %v5754
    %6726 = vmatpush1.bf16.msra.mxu0 %v5753
    %6727 = vmatprep.subr.bf16.mxu0 %v5761
    %6728 = vmatpush1.bf16.msra.mxu0 %v5760
    %6729 = vmatprep.subr.bf16.mxu0 %v5768
    %6730 = vmatpush1.bf16.msra.mxu0 %v5767
    %6731 = vmatprep.subr.bf16.mxu0 %v5775
    %6732 = vmatpush1.bf16.msra.mxu0 %v5774
    %6733 = vmatprep.subr.bf16.mxu0 %v5782
    %6734 = vmatpush1.bf16.msra.mxu0 %v5781
    %6735 = vmatprep.subr.bf16.mxu0 %v5789
    %6736 = vmatpush1.bf16.msra.mxu0 %v5788
    %6737 = vmatprep.subr.bf16.mxu0 %v5796
    %6738 = vmatpush1.bf16.msra.mxu0 %v5795
    %6739 = vmatprep.subr.bf16.mxu0 %v5803
    %6740 = vmatpush1.bf16.msra.mxu0 %v5802
    %6741 = vmatprep.subr.bf16.mxu0 %v5810
    %6742 = vmatpush1.bf16.msra.mxu0 %v5809
    %6743 = vmatprep.mubr.bf16.mxu0 %v3406
    %6744 = vmatmul.mubr.bf16.gmra.mrb[0].mxu0 %v3405
    %v6745 = vpop.f32.mrb[0].mxu0
    %v6746 = vadd.f32 %v6705, %v6745
    %v6747 = vpop.f32.mrb[0].mxu0
    %v6748 = vadd.f32 %v6707, %v6747
    %v6749 = vpop.f32.mrb[0].mxu0
    %v6750 = vpop.f32.mrb[0].mxu0
    %6751 = vdwg.mxu0
    %6752 = vmatprep.subr.bf16.mxu0 0
    %6753 = vmatpush1.bf16.msra.mxu0 %v5370
    %6754 = vmatprep.subr.bf16.mxu0 0
    %6755 = vmatpush1.bf16.msra.mxu0 %v5377
    %6756 = vmatprep.subr.bf16.mxu0 0
    %6757 = vmatpush1.bf16.msra.mxu0 %v5384
    %6758 = vmatprep.subr.bf16.mxu0 0
    %6759 = vmatpush1.bf16.msra.mxu0 %v5391
    %6760 = vmatprep.subr.bf16.mxu0 0
    %6761 = vmatpush1.bf16.msra.mxu0 %v5398
    %6762 = vmatprep.subr.bf16.mxu0 0
    %6763 = vmatpush1.bf16.msra.mxu0 %v5405
    %6764 = vmatprep.subr.bf16.mxu0 0
    %6765 = vmatpush1.bf16.msra.mxu0 %v5412
    %6766 = vmatprep.subr.bf16.mxu0 0
    %6767 = vmatpush1.bf16.msra.mxu0 %v5419
    %6768 = vmatprep.subr.bf16.mxu0 0
    %6769 = vmatpush1.bf16.msra.mxu0 %v5426
    %6770 = vmatprep.subr.bf16.mxu0 0
    %6771 = vmatpush1.bf16.msra.mxu0 %v5433
    %6772 = vmatprep.subr.bf16.mxu0 0
    %6773 = vmatpush1.bf16.msra.mxu0 %v5440
    %6774 = vmatprep.subr.bf16.mxu0 0
    %6775 = vmatpush1.bf16.msra.mxu0 %v5447
    %6776 = vmatprep.subr.bf16.mxu0 0
    %6777 = vmatpush1.bf16.msra.mxu0 %v5454
    %6778 = vmatprep.subr.bf16.mxu0 0
    %6779 = vmatpush1.bf16.msra.mxu0 %v5461
    %6780 = vmatprep.subr.bf16.mxu0 0
    %6781 = vmatpush1.bf16.msra.mxu0 %v5468
    %6782 = vmatprep.subr.bf16.mxu0 0
    %6783 = vmatpush1.bf16.msra.mxu0 %v5475
    %6784 = vmatprep.mubr.bf16.mxu0 %v3400
    %6785 = vmatmul.mubr.bf16.gmra.mrb[0].mxu0 %v3399
    %v6786 = vpop.f32.mrb[0].mxu0
    %v6787 = vadd.f32 %v3948, %v6786
    %v6788 = vpop.f32.mrb[0].mxu0
    %v6789 = vpop.f32.mrb[0].mxu0
    %v6790 = vpop.f32.mrb[0].mxu0
    %6791 = vdwg.mxu0
    %6792 = vmatprep.subr.bf16.mxu0 0
    %6793 = vmatpush1.bf16.msra.mxu0 %v5482
    %6794 = vmatprep.subr.bf16.mxu0 0
    %6795 = vmatpush1.bf16.msra.mxu0 %v5489
    %6796 = vmatprep.subr.bf16.mxu0 0
    %6797 = vmatpush1.bf16.msra.mxu0 %v5496
    %6798 = vmatprep.subr.bf16.mxu0 0
    %6799 = vmatpush1.bf16.msra.mxu0 %v5503
    %6800 = vmatprep.subr.bf16.mxu0 0
    %6801 = vmatpush1.bf16.msra.mxu0 %v5510
    %6802 = vmatprep.subr.bf16.mxu0 0
    %6803 = vmatpush1.bf16.msra.mxu0 %v5517
    %6804 = vmatprep.subr.bf16.mxu0 0
    %6805 = vmatpush1.bf16.msra.mxu0 %v5524
    %6806 = vmatprep.subr.bf16.mxu0 0
    %6807 = vmatpush1.bf16.msra.mxu0 %v5531
    %6808 = vmatprep.subr.bf16.mxu0 0
    %6809 = vmatpush1.bf16.msra.mxu0 %v5538
    %6810 = vmatprep.subr.bf16.mxu0 0
    %6811 = vmatpush1.bf16.msra.mxu0 %v5545
    %6812 = vmatprep.subr.bf16.mxu0 0
    %6813 = vmatpush1.bf16.msra.mxu0 %v5552
    %6814 = vmatprep.subr.bf16.mxu0 0
    %6815 = vmatpush1.bf16.msra.mxu0 %v5559
    %6816 = vmatprep.subr.bf16.mxu0 0
    %6817 = vmatpush1.bf16.msra.mxu0 %v5566
    %6818 = vmatprep.subr.bf16.mxu0 0
    %6819 = vmatpush1.bf16.msra.mxu0 %v5573
    %6820 = vmatprep.subr.bf16.mxu0 0
    %6821 = vmatpush1.bf16.msra.mxu0 %v5580
    %6822 = vmatprep.subr.bf16.mxu0 0
    %6823 = vmatpush1.bf16.msra.mxu0 %v5587
    %6824 = vmatprep.mubr.bf16.mxu0 %v3402
    %6825 = vmatmul.mubr.bf16.gmra.mrb[0].mxu0 %v3401
    %v6826 = vpop.f32.mrb[0].mxu0
    %v6827 = vadd.f32 %v6787, %v6826
    %v6828 = vpop.f32.mrb[0].mxu0
    %v6829 = vpop.f32.mrb[0].mxu0
    %v6830 = vpop.f32.mrb[0].mxu0
    %6831 = vdwg.mxu0
    %6832 = vmatprep.subr.bf16.mxu0 0
    %6833 = vmatpush1.bf16.msra.mxu0 %v5594
    %6834 = vmatprep.subr.bf16.mxu0 0
    %6835 = vmatpush1.bf16.msra.mxu0 %v5601
    %6836 = vmatprep.subr.bf16.mxu0 0
    %6837 = vmatpush1.bf16.msra.mxu0 %v5608
    %6838 = vmatprep.subr.bf16.mxu0 0
    %6839 = vmatpush1.bf16.msra.mxu0 %v5615
    %6840 = vmatprep.subr.bf16.mxu0 0
    %6841 = vmatpush1.bf16.msra.mxu0 %v5622
    %6842 = vmatprep.subr.bf16.mxu0 0
    %6843 = vmatpush1.bf16.msra.mxu0 %v5629
    %6844 = vmatprep.subr.bf16.mxu0 0
    %6845 = vmatpush1.bf16.msra.mxu0 %v5636
    %6846 = vmatprep.subr.bf16.mxu0 0
    %6847 = vmatpush1.bf16.msra.mxu0 %v5643
    %6848 = vmatprep.subr.bf16.mxu0 0
    %6849 = vmatpush1.bf16.msra.mxu0 %v5650
    %6850 = vmatprep.subr.bf16.mxu0 0
    %6851 = vmatpush1.bf16.msra.mxu0 %v5657
    %6852 = vmatprep.subr.bf16.mxu0 0
    %6853 = vmatpush1.bf16.msra.mxu0 %v5664
    %6854 = vmatprep.subr.bf16.mxu0 0
    %6855 = vmatpush1.bf16.msra.mxu0 %v5671
    %6856 = vmatprep.subr.bf16.mxu0 0
    %6857 = vmatpush1.bf16.msra.mxu0 %v5678
    %6858 = vmatprep.subr.bf16.mxu0 0
    %6859 = vmatpush1.bf16.msra.mxu0 %v5685
    %6860 = vmatprep.subr.bf16.mxu0 0
    %6861 = vmatpush1.bf16.msra.mxu0 %v5692
    %6862 = vmatprep.subr.bf16.mxu0 0
    %6863 = vmatpush1.bf16.msra.mxu0 %v5699
    %6864 = vmatprep.mubr.bf16.mxu0 %v3404
    %6865 = vmatmul.mubr.bf16.gmra.mrb[0].mxu0 %v3403
    %v6866 = vpop.f32.mrb[0].mxu0
    %v6867 = vadd.f32 %v6827, %v6866
    %v6868 = vpop.f32.mrb[0].mxu0
    %v6869 = vpop.f32.mrb[0].mxu0
    %v6870 = vpop.f32.mrb[0].mxu0
    %6871 = vdwg.mxu0
    %6872 = vmatprep.subr.bf16.mxu0 0
    %6873 = vmatpush1.bf16.msra.mxu0 %v5706
    %6874 = vmatprep.subr.bf16.mxu0 0
    %6875 = vmatpush1.bf16.msra.mxu0 %v5713
    %6876 = vmatprep.subr.bf16.mxu0 0
    %6877 = vmatpush1.bf16.msra.mxu0 %v5720
    %6878 = vmatprep.subr.bf16.mxu0 0
    %6879 = vmatpush1.bf16.msra.mxu0 %v5727
    %6880 = vmatprep.subr.bf16.mxu0 0
    %6881 = vmatpush1.bf16.msra.mxu0 %v5734
    %6882 = vmatprep.subr.bf16.mxu0 0
    %6883 = vmatpush1.bf16.msra.mxu0 %v5741
    %6884 = vmatprep.subr.bf16.mxu0 0
    %6885 = vmatpush1.bf16.msra.mxu0 %v5748
    %6886 = vmatprep.subr.bf16.mxu0 0
    %6887 = vmatpush1.bf16.msra.mxu0 %v5755
    %6888 = vmatprep.subr.bf16.mxu0 0
    %6889 = vmatpush1.bf16.msra.mxu0 %v5762
    %6890 = vmatprep.subr.bf16.mxu0 0
    %6891 = vmatpush1.bf16.msra.mxu0 %v5769
    %6892 = vmatprep.subr.bf16.mxu0 0
    %6893 = vmatpush1.bf16.msra.mxu0 %v5776
    %6894 = vmatprep.subr.bf16.mxu0 0
    %6895 = vmatpush1.bf16.msra.mxu0 %v5783
    %6896 = vmatprep.subr.bf16.mxu0 0
    %6897 = vmatpush1.bf16.msra.mxu0 %v5790
    %6898 = vmatprep.subr.bf16.mxu0 0
    %6899 = vmatpush1.bf16.msra.mxu0 %v5797
    %6900 = vmatprep.subr.bf16.mxu0 0
    %6901 = vmatpush1.bf16.msra.mxu0 %v5804
    %6902 = vmatprep.subr.bf16.mxu0 0
    %6903 = vmatpush1.bf16.msra.mxu0 %v5811
    %6904 = vmatprep.mubr.bf16.mxu0 %v3406
    %6905 = vmatmul.mubr.bf16.gmra.mrb[0].mxu0 %v3405
    %v6906 = vpop.f32.mrb[0].mxu0
    %v6907 = vadd.f32 %v6867, %v6906
    %v6908 = vpop.f32.mrb[0].mxu0
    %v6909 = vpop.f32.mrb[0].mxu0
    %v6910 = vpop.f32.mrb[0].mxu0
    %6911 = vdwg.mxu0
    %v6912 = vtanh.pop %v6418
    %v6913 = vtanh.pop %v6420
    %v6914 = vtanh.pop %v6582
    %v6915 = vtanh.pop %v6584
    %v6916 = vtanh.pop %v6746
    %v6917 = vtanh.pop %v6748
    %v6918 = vtanh.pop %v6907
    %6919 = vst [vmem:[#allocation14] sm:$0xff] %v6912
    %6920 = vst [vmem:[#allocation14 + $0x8] sm:$0xff] %v6913
    %6921 = vst [vmem:[#allocation14 + $0x10] sm:$0xff] %v6914
    %6922 = vst [vmem:[#allocation14 + $0x18] sm:$0xff] %v6915
    %6923 = vst [vmem:[#allocation14 + $0x20] sm:$0xff] %v6916
    %6924 = vst [vmem:[#allocation14 + $0x28] sm:$0xff] %v6917
    %6925 = vst [vmem:[#allocation14 + $0x30] sm:$0xff] %v6918
    // Predicated region
    $region58: #{tpu_custom_call.1} parent=1 // pred_check
      _
    $region59: #{tpu_custom_call.1} parent=1 // pred_check_branch
      %6927 = sbr.rel (0) target = $region61
    $region60: #{tpu_custom_call.1} parent=1 // pred_region
      %s6929 = ssub.s32 896, 896
      %6930 = vsyncadd [#allocation4], %s6929
      %s6932 = sshll.u32 [#allocation14], 4
      %s6933 = int_to_ptr.vmem [resolvable:$true] %s6932
      %6935 = dma.vmem_to_hbm [thread:$0]  %s6933, 896, %s7, [#allocation4]
    $region61: #{tpu_custom_call.1} parent=1 // pred_fallthru
      _
    // Predicated region
    $region62: #{tpu_custom_call.1} parent=1 // pred_check
      _
    $region63: #{tpu_custom_call.1} parent=1 // pred_check_branch
      %6937 = sbr.rel (0) target = $region65
    $region64: #{tpu_custom_call.1} parent=1 // pred_region
      %6938 = dma.done [#allocation4], 896
    $region65: #{tpu_custom_call.1} parent=1 // pred_fallthru
      _
    %6939 = vsyncpa [#allocation3], 1
    %6940 = vsyncpa [#allocation6], 1
    %6941 = vsyncpa [#allocation9], 1
    %6942 = vsyncpa [#allocation12], 1
    %6943 = vsyncpa [#allocation4], 1

</llo_original>
